<compile_context>
chip_gen: v6e
topology: v6e:2x2x1
jax: 0.10.0
libtpu: 0.0.40
codegen_flags: <defaults>
</compile_context>

<pallas_src>
import jax
import jax.numpy as jnp
from jax.experimental import pallas as pl
from jax.experimental.pallas import tpu as pltpu


def _mul_conv1x1_kernel(scale_ref, x_ref, w_ref, o_ref):
    # scale_ref: (C_in, 1) f32    x_ref: (C_in, HW) f32
    # w_ref:     (tile_co, C_in) bf16
    # o_ref:     (tile_co, HW) f32
    xm = (x_ref[...] * scale_ref[...]).astype(w_ref.dtype)  # fuse the broadcast mul
    o_ref[...] = jnp.dot(
        w_ref[...], xm, preferred_element_type=jnp.float32
    ).astype(o_ref.dtype)


def default_num_tiles():
    """1 grid step on single-TensorCore chips (v5e/v6e); 2 on 2-TC chips."""
    try:
        kind = jax.devices()[0].device_kind.lower()
    except Exception:
        return 1
    if any(tag in kind for tag in ("v7", "v4", "v5p", "v5 p")):
        return 2
    return 1


def prepare_conv_weight(weight, num_tiles, weight_dtype=jnp.bfloat16):
    """One-time weight prep: (C_out, C_in, 1, 1) -> (C_out_pad, C_in) bf16.

    C_out is padded (with zero rows) so each of `num_tiles` output tiles is a
    multiple of 16 rows (bf16 sublane pack).  Do this once and reuse the result
    across calls so the 2.5 MB f32->bf16 convert is not on the per-call path.
    For the module shapes and num_tiles=1, 784 % 16 == 0 so no padding happens.
    """
    c_out, c_in = weight.shape[0], weight.shape[1]
    align = 16 * num_tiles
    c_out_pad = ((c_out + align - 1) // align) * align
    w2 = weight.reshape(c_out, c_in).astype(weight_dtype)
    if c_out_pad != c_out:
        w2 = jnp.pad(w2, ((0, c_out_pad - c_out), (0, 0)))
    return w2


def mul_conv1x1(x, scale, w2, c_out, *, num_tiles=1):
    """x: (1, C_in, H, W), scale: (1, C_in, 1, 1), w2: (C_out_pad, C_in) bf16.
    Returns (1, C_out, H, W) f32.  Semantics: conv2d(x * scale, weight), no bias.
    """
    n, c_in, h, w = x.shape
    assert n == 1
    hw = h * w
    c_out_pad = w2.shape[0]
    assert c_out_pad % num_tiles == 0
    tile_co = c_out_pad // num_tiles
    assert tile_co % 8 == 0

    x2 = x.reshape(c_in, hw).astype(jnp.float32)        # contiguous: no-copy reshape
    s2 = scale.reshape(c_in, 1).astype(jnp.float32)

    cost = pl.CostEstimate(
        flops=2 * c_out_pad * c_in * hw,
        transcendentals=0,
        bytes_accessed=(w2.size * jnp.dtype(w2.dtype).itemsize
                        + x2.size * 4 + s2.size * 4 + c_out_pad * hw * 4),
    )

    out = pl.pallas_call(
        _mul_conv1x1_kernel,
        out_shape=jax.ShapeDtypeStruct((c_out_pad, hw), jnp.float32),
        grid=(num_tiles,),
        in_specs=[
            # scale and x stay resident (same block every step -> no re-DMA)
            pl.BlockSpec((c_in, 1), lambda i: (0, 0)),
            pl.BlockSpec((c_in, hw), lambda i: (0, 0)),
            # weight tiled along output channels (16-row aligned tiles)
            pl.BlockSpec((tile_co, c_in), lambda i: (i, 0)),
        ],
        out_specs=pl.BlockSpec((tile_co, hw), lambda i: (i, 0)),
        compiler_params=pltpu.CompilerParams(
            dimension_semantics=("parallel",)),
        cost_estimate=cost,
    )(s2, x2, w2)

    if c_out_pad != c_out:
        out = out[:c_out]        # only taken on the 2-TC (padded) path
    return out.reshape(1, c_out, h, w)


if __name__ == "__main__":
    # Shapes implied by the module: x225 -> (1, 784, 7, 7), x230 -> (1, 784, 1, 1),
    # conv weight -> (784, 784, 1, 1), bias=False.
    C, H, W = 784, 7, 7
    key = jax.random.PRNGKey(0)
    k1, k2, k3 = jax.random.split(key, 3)
    x225 = jax.random.normal(k1, (1, C, H, W), dtype=jnp.float32)
    x230 = jax.random.normal(k2, (1, C, 1, 1), dtype=jnp.float32)
    conv_w = jax.random.normal(k3, (C, C, 1, 1), dtype=jnp.float32) * 0.02

    num_tiles = default_num_tiles()
    # One-time weight prep (cached bf16 weight in HBM); not on the per-call path.
    w2 = jax.block_until_ready(prepare_conv_weight(conv_w, num_tiles))

    out = mul_conv1x1(x225, x230, w2, C, num_tiles=num_tiles)
    out = jax.block_until_ready(out)
    assert out.shape == (1, C, H, W)

    # Reference in plain JAX using the same bf16 operand cast (f32 accumulate),
    # so the check validates the kernel rather than the quantization choice.
    # TODO(synk): confirm bf16 weight/activation quantization is acceptable vs.
    # the original f32 PyTorch conv; otherwise pass weight_dtype=jnp.float32.
    xm_ref = (x225 * x230).reshape(C, H * W).astype(jnp.bfloat16)
    w_ref = conv_w.reshape(C, C).astype(jnp.bfloat16)
    ref = jnp.dot(w_ref, xm_ref, preferred_element_type=jnp.float32)
    ref = ref.reshape(1, C, H, W)
    assert jnp.allclose(out, ref, atol=2e-2, rtol=2e-2)

    print("KERNEL_OK")
</pallas_src>

<mosaic_0001>
module attributes {stable_mosaic.version = 11 : i64} {
  func.func @_mul_conv1x1_kernel(%arg0: i32, %arg1: memref<784x1xf32, #tpu.memory_space<vmem>>, %arg2: memref<784x49xf32, #tpu.memory_space<vmem>>, %arg3: memref<784x784xbf16, #tpu.memory_space<vmem>>, %arg4: memref<784x49xf32, #tpu.memory_space<vmem>>) attributes {dimension_semantics = [#tpu.dimension_semantics<parallel>], iteration_bounds = array<i64: 1>, scalar_prefetch = 0 : i64, scratch_operands = 0 : i64, tpu.core_type = #tpu.core_type<tc>, window_params = [{pipeline_mode = #tpu.pipeline_mode<synchronous>, transform_indices = @transform_0, window_bounds = array<i64: 784, 1>}, {pipeline_mode = #tpu.pipeline_mode<synchronous>, transform_indices = @transform_1, window_bounds = array<i64: 784, 49>}, {transform_indices = @transform_2, window_bounds = array<i64: 784, 784>}, {transform_indices = @transform_3, window_bounds = array<i64: 784, 49>}]} {
    %c0 = arith.constant 0 : index
    %c0_0 = arith.constant 0 : index
    %0 = vector.load %arg2[%c0, %c0_0] : memref<784x49xf32, #tpu.memory_space<vmem>>, vector<784x49xf32>
    %c0_1 = arith.constant 0 : index
    %c0_2 = arith.constant 0 : index
    %1 = vector.load %arg1[%c0_1, %c0_2] : memref<784x1xf32, #tpu.memory_space<vmem>>, vector<784x1xf32>
    %2 = vector.broadcast %1 : vector<784x1xf32> to vector<784x49xf32>
    %3 = arith.mulf %0, %2 : vector<784x49xf32>
    %4 = arith.truncf %3 : vector<784x49xf32> to vector<784x49xbf16>
    %c0_3 = arith.constant 0 : index
    %c0_4 = arith.constant 0 : index
    %5 = vector.load %arg3[%c0_3, %c0_4] : memref<784x784xbf16, #tpu.memory_space<vmem>>, vector<784x784xbf16>
    %cst = arith.constant dense<0.000000e+00> : vector<784x49xf32>
    %6 = tpu.matmul %5, %4, %cst {dimension_numbers = #tpu.dot_dimension_numbers<[1], [0], [0], [1], [0, 0, 1, 1], [], []>} : vector<784x784xbf16>, vector<784x49xbf16>, vector<784x49xf32> -> vector<784x49xf32>
    %c0_5 = arith.constant 0 : index
    %c0_6 = arith.constant 0 : index
    %7 = vector.load %arg4[%c0_5, %c0_6] : memref<784x49xf32, #tpu.memory_space<vmem>>, vector<784x49xf32>
    tpu.vector_store %arg4[%c0_5, %c0_6], %6 {strides = array<i32>} : memref<784x49xf32, #tpu.memory_space<vmem>>, vector<784x49xf32>,
    return
  }
  func.func @transform_0(%arg0: i32) -> (i32, i32) {
    %c0_i32 = arith.constant 0 : i32
    %c0_i32_0 = arith.constant 0 : i32
    %c0_i32_1 = arith.constant 0 : i32
    return %c0_i32, %c0_i32_0 : i32, i32
  }
  func.func @transform_1(%arg0: i32) -> (i32, i32) {
    %c0_i32 = arith.constant 0 : i32
    %c0_i32_0 = arith.constant 0 : i32
    %c0_i32_1 = arith.constant 0 : i32
    return %c0_i32, %c0_i32_0 : i32, i32
  }
  func.func @transform_2(%arg0: i32) -> (i32, i32) {
    %c0_i32 = arith.constant 0 : i32
    %c0_i32_0 = arith.constant 0 : i32
    return %arg0, %c0_i32 : i32, i32
  }
  func.func @transform_3(%arg0: i32) -> (i32, i32) {
    %c0_i32 = arith.constant 0 : i32
    %c0_i32_0 = arith.constant 0 : i32
    return %arg0, %c0_i32 : i32, i32
  }
}

</mosaic_0001>

<llo_original>
// kernel: tpu_custom_call.1
$region0: #{tpu_custom_call.1}
  #allocation0 [shape = 'u32[]', space=smem, size = 0x4, offset = 0x4, fixed_abs, tag = 'smem constant byte address 0x4 - core index']
  #allocation1 [shape = 'u32[144,128]{1,0:T(1,128)}', space=vmem, size = 0x12000, scoped, tag = 'internal scratch']
  %s0 = inlined_call_operand.vmem [shape: f32[784,1], index: 0, kind: input, shape index: {}]
  %s1 = inlined_call_operand.vmem [shape: f32[784,49], index: 1, kind: input, shape index: {}]
  %s2 = inlined_call_operand.hbm [shape: bf16[784,784], index: 2, kind: input, shape index: {}]
  %s3 = inlined_call_operand.vmem [shape: f32[784,49], index: 3, kind: output, shape index: {}]
  %s4 = sld [smem:[#allocation0]]
  $region26: #{tpu_custom_call.1} parent=0
    _
  %s6 = ssub.s32 1, %s4
  %s7 = scalar_select 0, %s6, %s4
  $region1: #{tpu_custom_call.1} parent=0
    #allocation2 [shape = 'u8[1404928]{0}', space=vmem, size = 0x157000, scoped, tag = 'input window, operand 2, single buffered']
    #allocation3 [shape = 's32[1]{0}', space=sflag, size = 0x4, scoped, tag = 'scoped memory for tpu_custom_call.1']
    %8 = vsyncpa [#allocation3], 0
    // Predicated region
    $region2: #{tpu_custom_call.1} parent=1 // pred_check
      _
    $region3: #{tpu_custom_call.1} parent=1 // pred_check_branch
      %10 = sbr.rel (0) target = $region5
    $region4: #{tpu_custom_call.1} parent=1 // pred_region
      _
    $region5: #{tpu_custom_call.1} parent=1 // pred_fallthru
      _
    // Predicated region
    $region6: #{tpu_custom_call.1} parent=1 // pred_check
      _
    $region7: #{tpu_custom_call.1} parent=1 // pred_check_branch
      %12 = sbr.rel (0) target = $region9
    $region8: #{tpu_custom_call.1} parent=1 // pred_region
      _
    $region9: #{tpu_custom_call.1} parent=1 // pred_fallthru
      _
    // Predicated region
    $region10: #{tpu_custom_call.1} parent=1 // pred_check
      _
    $region11: #{tpu_custom_call.1} parent=1 // pred_check_branch
      %14 = sbr.rel (0) target = $region13
    $region12: #{tpu_custom_call.1} parent=1 // pred_region
      %s16 = ssub.s32 43904, 43904
      %17 = vsyncadd [#allocation3], %s16
      %s18 = sshll.u32 [#allocation2], 4
      %s19 = int_to_ptr.vmem [resolvable:$true] %s18
      %24 = dma.hbm_to_vmem [thread:$0]  %s2, 43904, %s19, [#allocation3], 448, 448, 28
    $region13: #{tpu_custom_call.1} parent=1 // pred_fallthru
      _
    // Predicated region
    $region14: #{tpu_custom_call.1} parent=1 // pred_check
      _
    $region15: #{tpu_custom_call.1} parent=1 // pred_check_branch
      %26 = sbr.rel (0) target = $region17
    $region16: #{tpu_custom_call.1} parent=1 // pred_region
      %27 = dma.done [#allocation3], 43904
    $region17: #{tpu_custom_call.1} parent=1 // pred_fallthru
      _
    %v29 = vld [vmem:[%s1] sm:$0xff]
    %v30 = vld [vmem:[%s1 + $0x8] sm:$0xff]
    %v31 = vld [vmem:[%s1 + $0x10] sm:$0xff]
    %v32 = vld [vmem:[%s1 + $0x18] sm:$0xff]
    %v33 = vld [vmem:[%s1 + $0x20] sm:$0xff]
    %v34 = vld [vmem:[%s1 + $0x28] sm:$0xff]
    %v35 = vld [vmem:[%s1 + $0x30] sm:$0xff]
    %v36 = vld [vmem:[%s1 + $0x38] sm:$0xff]
    %v37 = vld [vmem:[%s1 + $0x40] sm:$0xff]
    %v38 = vld [vmem:[%s1 + $0x48] sm:$0xff]
    %v39 = vld [vmem:[%s1 + $0x50] sm:$0xff]
    %v40 = vld [vmem:[%s1 + $0x58] sm:$0xff]
    %v41 = vld [vmem:[%s1 + $0x60] sm:$0xff]
    %v42 = vld [vmem:[%s1 + $0x68] sm:$0xff]
    %v43 = vld [vmem:[%s1 + $0x70] sm:$0xff]
    %v44 = vld [vmem:[%s1 + $0x78] sm:$0xff]
    %v45 = vld [vmem:[%s1 + $0x80] sm:$0xff]
    %v46 = vld [vmem:[%s1 + $0x88] sm:$0xff]
    %v47 = vld [vmem:[%s1 + $0x90] sm:$0xff]
    %v48 = vld [vmem:[%s1 + $0x98] sm:$0xff]
    %v49 = vld [vmem:[%s1 + $0xa0] sm:$0xff]
    %v50 = vld [vmem:[%s1 + $0xa8] sm:$0xff]
    %v51 = vld [vmem:[%s1 + $0xb0] sm:$0xff]
    %v52 = vld [vmem:[%s1 + $0xb8] sm:$0xff]
    %v53 = vld [vmem:[%s1 + $0xc0] sm:$0xff]
    %v54 = vld [vmem:[%s1 + $0xc8] sm:$0xff]
    %v55 = vld [vmem:[%s1 + $0xd0] sm:$0xff]
    %v56 = vld [vmem:[%s1 + $0xd8] sm:$0xff]
    %v57 = vld [vmem:[%s1 + $0xe0] sm:$0xff]
    %v58 = vld [vmem:[%s1 + $0xe8] sm:$0xff]
    %v59 = vld [vmem:[%s1 + $0xf0] sm:$0xff]
    %v60 = vld [vmem:[%s1 + $0xf8] sm:$0xff]
    %v61 = vld [vmem:[%s1 + $0x100] sm:$0xff]
    %v62 = vld [vmem:[%s1 + $0x108] sm:$0xff]
    %v63 = vld [vmem:[%s1 + $0x110] sm:$0xff]
    %v64 = vld [vmem:[%s1 + $0x118] sm:$0xff]
    %v65 = vld [vmem:[%s1 + $0x120] sm:$0xff]
    %v66 = vld [vmem:[%s1 + $0x128] sm:$0xff]
    %v67 = vld [vmem:[%s1 + $0x130] sm:$0xff]
    %v68 = vld [vmem:[%s1 + $0x138] sm:$0xff]
    %v69 = vld [vmem:[%s1 + $0x140] sm:$0xff]
    %v70 = vld [vmem:[%s1 + $0x148] sm:$0xff]
    %v71 = vld [vmem:[%s1 + $0x150] sm:$0xff]
    %v72 = vld [vmem:[%s1 + $0x158] sm:$0xff]
    %v73 = vld [vmem:[%s1 + $0x160] sm:$0xff]
    %v74 = vld [vmem:[%s1 + $0x168] sm:$0xff]
    %v75 = vld [vmem:[%s1 + $0x170] sm:$0xff]
    %v76 = vld [vmem:[%s1 + $0x178] sm:$0xff]
    %v77 = vld [vmem:[%s1 + $0x180] sm:$0xff]
    %v78 = vld [vmem:[%s1 + $0x188] sm:$0xff]
    %v79 = vld [vmem:[%s1 + $0x190] sm:$0xff]
    %v80 = vld [vmem:[%s1 + $0x198] sm:$0xff]
    %v81 = vld [vmem:[%s1 + $0x1a0] sm:$0xff]
    %v82 = vld [vmem:[%s1 + $0x1a8] sm:$0xff]
    %v83 = vld [vmem:[%s1 + $0x1b0] sm:$0xff]
    %v84 = vld [vmem:[%s1 + $0x1b8] sm:$0xff]
    %v85 = vld [vmem:[%s1 + $0x1c0] sm:$0xff]
    %v86 = vld [vmem:[%s1 + $0x1c8] sm:$0xff]
    %v87 = vld [vmem:[%s1 + $0x1d0] sm:$0xff]
    %v88 = vld [vmem:[%s1 + $0x1d8] sm:$0xff]
    %v89 = vld [vmem:[%s1 + $0x1e0] sm:$0xff]
    %v90 = vld [vmem:[%s1 + $0x1e8] sm:$0xff]
    %v91 = vld [vmem:[%s1 + $0x1f0] sm:$0xff]
    %v92 = vld [vmem:[%s1 + $0x1f8] sm:$0xff]
    %v93 = vld [vmem:[%s1 + $0x200] sm:$0xff]
    %v94 = vld [vmem:[%s1 + $0x208] sm:$0xff]
    %v95 = vld [vmem:[%s1 + $0x210] sm:$0xff]
    %v96 = vld [vmem:[%s1 + $0x218] sm:$0xff]
    %v97 = vld [vmem:[%s1 + $0x220] sm:$0xff]
    %v98 = vld [vmem:[%s1 + $0x228] sm:$0xff]
    %v99 = vld [vmem:[%s1 + $0x230] sm:$0xff]
    %v100 = vld [vmem:[%s1 + $0x238] sm:$0xff]
    %v101 = vld [vmem:[%s1 + $0x240] sm:$0xff]
    %v102 = vld [vmem:[%s1 + $0x248] sm:$0xff]
    %v103 = vld [vmem:[%s1 + $0x250] sm:$0xff]
    %v104 = vld [vmem:[%s1 + $0x258] sm:$0xff]
    %v105 = vld [vmem:[%s1 + $0x260] sm:$0xff]
    %v106 = vld [vmem:[%s1 + $0x268] sm:$0xff]
    %v107 = vld [vmem:[%s1 + $0x270] sm:$0xff]
    %v108 = vld [vmem:[%s1 + $0x278] sm:$0xff]
    %v109 = vld [vmem:[%s1 + $0x280] sm:$0xff]
    %v110 = vld [vmem:[%s1 + $0x288] sm:$0xff]
    %v111 = vld [vmem:[%s1 + $0x290] sm:$0xff]
    %v112 = vld [vmem:[%s1 + $0x298] sm:$0xff]
    %v113 = vld [vmem:[%s1 + $0x2a0] sm:$0xff]
    %v114 = vld [vmem:[%s1 + $0x2a8] sm:$0xff]
    %v115 = vld [vmem:[%s1 + $0x2b0] sm:$0xff]
    %v116 = vld [vmem:[%s1 + $0x2b8] sm:$0xff]
    %v117 = vld [vmem:[%s1 + $0x2c0] sm:$0xff]
    %v118 = vld [vmem:[%s1 + $0x2c8] sm:$0xff]
    %v119 = vld [vmem:[%s1 + $0x2d0] sm:$0xff]
    %v120 = vld [vmem:[%s1 + $0x2d8] sm:$0xff]
    %v121 = vld [vmem:[%s1 + $0x2e0] sm:$0xff]
    %v122 = vld [vmem:[%s1 + $0x2e8] sm:$0xff]
    %v123 = vld [vmem:[%s1 + $0x2f0] sm:$0xff]
    %v124 = vld [vmem:[%s1 + $0x2f8] sm:$0xff]
    %v125 = vld [vmem:[%s1 + $0x300] sm:$0xff]
    %v126 = vld [vmem:[%s1 + $0x308] sm:$0xff]
    %v127 = vld [vmem:[%s0] sm:$0xff]
    %v128 = vld [vmem:[%s0 + $0x8] sm:$0xff]
    %v129 = vld [vmem:[%s0 + $0x10] sm:$0xff]
    %v130 = vld [vmem:[%s0 + $0x18] sm:$0xff]
    %v131 = vld [vmem:[%s0 + $0x20] sm:$0xff]
    %v132 = vld [vmem:[%s0 + $0x28] sm:$0xff]
    %v133 = vld [vmem:[%s0 + $0x30] sm:$0xff]
    %v134 = vld [vmem:[%s0 + $0x38] sm:$0xff]
    %v135 = vld [vmem:[%s0 + $0x40] sm:$0xff]
    %v136 = vld [vmem:[%s0 + $0x48] sm:$0xff]
    %v137 = vld [vmem:[%s0 + $0x50] sm:$0xff]
    %v138 = vld [vmem:[%s0 + $0x58] sm:$0xff]
    %v139 = vld [vmem:[%s0 + $0x60] sm:$0xff]
    %v140 = vld [vmem:[%s0 + $0x68] sm:$0xff]
    %v141 = vld [vmem:[%s0 + $0x70] sm:$0xff]
    %v142 = vld [vmem:[%s0 + $0x78] sm:$0xff]
    %v143 = vld [vmem:[%s0 + $0x80] sm:$0xff]
    %v144 = vld [vmem:[%s0 + $0x88] sm:$0xff]
    %v145 = vld [vmem:[%s0 + $0x90] sm:$0xff]
    %v146 = vld [vmem:[%s0 + $0x98] sm:$0xff]
    %v147 = vld [vmem:[%s0 + $0xa0] sm:$0xff]
    %v148 = vld [vmem:[%s0 + $0xa8] sm:$0xff]
    %v149 = vld [vmem:[%s0 + $0xb0] sm:$0xff]
    %v150 = vld [vmem:[%s0 + $0xb8] sm:$0xff]
    %v151 = vld [vmem:[%s0 + $0xc0] sm:$0xff]
    %v152 = vld [vmem:[%s0 + $0xc8] sm:$0xff]
    %v153 = vld [vmem:[%s0 + $0xd0] sm:$0xff]
    %v154 = vld [vmem:[%s0 + $0xd8] sm:$0xff]
    %v155 = vld [vmem:[%s0 + $0xe0] sm:$0xff]
    %v156 = vld [vmem:[%s0 + $0xe8] sm:$0xff]
    %v157 = vld [vmem:[%s0 + $0xf0] sm:$0xff]
    %v158 = vld [vmem:[%s0 + $0xf8] sm:$0xff]
    %v159 = vld [vmem:[%s0 + $0x100] sm:$0xff]
    %v160 = vld [vmem:[%s0 + $0x108] sm:$0xff]
    %v161 = vld [vmem:[%s0 + $0x110] sm:$0xff]
    %v162 = vld [vmem:[%s0 + $0x118] sm:$0xff]
    %v163 = vld [vmem:[%s0 + $0x120] sm:$0xff]
    %v164 = vld [vmem:[%s0 + $0x128] sm:$0xff]
    %v165 = vld [vmem:[%s0 + $0x130] sm:$0xff]
    %v166 = vld [vmem:[%s0 + $0x138] sm:$0xff]
    %v167 = vld [vmem:[%s0 + $0x140] sm:$0xff]
    %v168 = vld [vmem:[%s0 + $0x148] sm:$0xff]
    %v169 = vld [vmem:[%s0 + $0x150] sm:$0xff]
    %v170 = vld [vmem:[%s0 + $0x158] sm:$0xff]
    %v171 = vld [vmem:[%s0 + $0x160] sm:$0xff]
    %v172 = vld [vmem:[%s0 + $0x168] sm:$0xff]
    %v173 = vld [vmem:[%s0 + $0x170] sm:$0xff]
    %v174 = vld [vmem:[%s0 + $0x178] sm:$0xff]
    %v175 = vld [vmem:[%s0 + $0x180] sm:$0xff]
    %v176 = vld [vmem:[%s0 + $0x188] sm:$0xff]
    %v177 = vld [vmem:[%s0 + $0x190] sm:$0xff]
    %v178 = vld [vmem:[%s0 + $0x198] sm:$0xff]
    %v179 = vld [vmem:[%s0 + $0x1a0] sm:$0xff]
    %v180 = vld [vmem:[%s0 + $0x1a8] sm:$0xff]
    %v181 = vld [vmem:[%s0 + $0x1b0] sm:$0xff]
    %v182 = vld [vmem:[%s0 + $0x1b8] sm:$0xff]
    %v183 = vld [vmem:[%s0 + $0x1c0] sm:$0xff]
    %v184 = vld [vmem:[%s0 + $0x1c8] sm:$0xff]
    %v185 = vld [vmem:[%s0 + $0x1d0] sm:$0xff]
    %v186 = vld [vmem:[%s0 + $0x1d8] sm:$0xff]
    %v187 = vld [vmem:[%s0 + $0x1e0] sm:$0xff]
    %v188 = vld [vmem:[%s0 + $0x1e8] sm:$0xff]
    %v189 = vld [vmem:[%s0 + $0x1f0] sm:$0xff]
    %v190 = vld [vmem:[%s0 + $0x1f8] sm:$0xff]
    %v191 = vld [vmem:[%s0 + $0x200] sm:$0xff]
    %v192 = vld [vmem:[%s0 + $0x208] sm:$0xff]
    %v193 = vld [vmem:[%s0 + $0x210] sm:$0xff]
    %v194 = vld [vmem:[%s0 + $0x218] sm:$0xff]
    %v195 = vld [vmem:[%s0 + $0x220] sm:$0xff]
    %v196 = vld [vmem:[%s0 + $0x228] sm:$0xff]
    %v197 = vld [vmem:[%s0 + $0x230] sm:$0xff]
    %v198 = vld [vmem:[%s0 + $0x238] sm:$0xff]
    %v199 = vld [vmem:[%s0 + $0x240] sm:$0xff]
    %v200 = vld [vmem:[%s0 + $0x248] sm:$0xff]
    %v201 = vld [vmem:[%s0 + $0x250] sm:$0xff]
    %v202 = vld [vmem:[%s0 + $0x258] sm:$0xff]
    %v203 = vld [vmem:[%s0 + $0x260] sm:$0xff]
    %v204 = vld [vmem:[%s0 + $0x268] sm:$0xff]
    %v205 = vld [vmem:[%s0 + $0x270] sm:$0xff]
    %v206 = vld [vmem:[%s0 + $0x278] sm:$0xff]
    %v207 = vld [vmem:[%s0 + $0x280] sm:$0xff]
    %v208 = vld [vmem:[%s0 + $0x288] sm:$0xff]
    %v209 = vld [vmem:[%s0 + $0x290] sm:$0xff]
    %v210 = vld [vmem:[%s0 + $0x298] sm:$0xff]
    %v211 = vld [vmem:[%s0 + $0x2a0] sm:$0xff]
    %v212 = vld [vmem:[%s0 + $0x2a8] sm:$0xff]
    %v213 = vld [vmem:[%s0 + $0x2b0] sm:$0xff]
    %v214 = vld [vmem:[%s0 + $0x2b8] sm:$0xff]
    %v215 = vld [vmem:[%s0 + $0x2c0] sm:$0xff]
    %v216 = vld [vmem:[%s0 + $0x2c8] sm:$0xff]
    %v217 = vld [vmem:[%s0 + $0x2d0] sm:$0xff]
    %v218 = vld [vmem:[%s0 + $0x2d8] sm:$0xff]
    %v219 = vld [vmem:[%s0 + $0x2e0] sm:$0xff]
    %v220 = vld [vmem:[%s0 + $0x2e8] sm:$0xff]
    %v221 = vld [vmem:[%s0 + $0x2f0] sm:$0xff]
    %v222 = vld [vmem:[%s0 + $0x2f8] sm:$0xff]
    %v223 = vld [vmem:[%s0 + $0x300] sm:$0xff]
    %v224 = vld [vmem:[%s0 + $0x308] sm:$0xff]
    %226 = vset.pattern.permute.xlu0 0
    %227 = vperm.xlu0 %226, %v127
    %v228 = vpop.permute.xlu0 %227
    %231 = vset.pattern.permute.xlu0 0
    %232 = vperm.xlu0 %231, %v128
    %v233 = vpop.permute.xlu0 %232
    %236 = vset.pattern.permute.xlu0 0
    %237 = vperm.xlu0 %236, %v129
    %v238 = vpop.permute.xlu0 %237
    %241 = vset.pattern.permute.xlu0 0
    %242 = vperm.xlu0 %241, %v130
    %v243 = vpop.permute.xlu0 %242
    %246 = vset.pattern.permute.xlu0 0
    %247 = vperm.xlu0 %246, %v131
    %v248 = vpop.permute.xlu0 %247
    %251 = vset.pattern.permute.xlu0 0
    %252 = vperm.xlu0 %251, %v132
    %v253 = vpop.permute.xlu0 %252
    %256 = vset.pattern.permute.xlu0 0
    %257 = vperm.xlu0 %256, %v133
    %v258 = vpop.permute.xlu0 %257
    %261 = vset.pattern.permute.xlu0 0
    %262 = vperm.xlu0 %261, %v134
    %v263 = vpop.permute.xlu0 %262
    %266 = vset.pattern.permute.xlu0 0
    %267 = vperm.xlu0 %266, %v135
    %v268 = vpop.permute.xlu0 %267
    %271 = vset.pattern.permute.xlu0 0
    %272 = vperm.xlu0 %271, %v136
    %v273 = vpop.permute.xlu0 %272
    %276 = vset.pattern.permute.xlu0 0
    %277 = vperm.xlu0 %276, %v137
    %v278 = vpop.permute.xlu0 %277
    %281 = vset.pattern.permute.xlu0 0
    %282 = vperm.xlu0 %281, %v138
    %v283 = vpop.permute.xlu0 %282
    %286 = vset.pattern.permute.xlu0 0
    %287 = vperm.xlu0 %286, %v139
    %v288 = vpop.permute.xlu0 %287
    %291 = vset.pattern.permute.xlu0 0
    %292 = vperm.xlu0 %291, %v140
    %v293 = vpop.permute.xlu0 %292
    %296 = vset.pattern.permute.xlu0 0
    %297 = vperm.xlu0 %296, %v141
    %v298 = vpop.permute.xlu0 %297
    %301 = vset.pattern.permute.xlu0 0
    %302 = vperm.xlu0 %301, %v142
    %v303 = vpop.permute.xlu0 %302
    %306 = vset.pattern.permute.xlu0 0
    %307 = vperm.xlu0 %306, %v143
    %v308 = vpop.permute.xlu0 %307
    %311 = vset.pattern.permute.xlu0 0
    %312 = vperm.xlu0 %311, %v144
    %v313 = vpop.permute.xlu0 %312
    %316 = vset.pattern.permute.xlu0 0
    %317 = vperm.xlu0 %316, %v145
    %v318 = vpop.permute.xlu0 %317
    %321 = vset.pattern.permute.xlu0 0
    %322 = vperm.xlu0 %321, %v146
    %v323 = vpop.permute.xlu0 %322
    %326 = vset.pattern.permute.xlu0 0
    %327 = vperm.xlu0 %326, %v147
    %v328 = vpop.permute.xlu0 %327
    %331 = vset.pattern.permute.xlu0 0
    %332 = vperm.xlu0 %331, %v148
    %v333 = vpop.permute.xlu0 %332
    %336 = vset.pattern.permute.xlu0 0
    %337 = vperm.xlu0 %336, %v149
    %v338 = vpop.permute.xlu0 %337
    %341 = vset.pattern.permute.xlu0 0
    %342 = vperm.xlu0 %341, %v150
    %v343 = vpop.permute.xlu0 %342
    %346 = vset.pattern.permute.xlu0 0
    %347 = vperm.xlu0 %346, %v151
    %v348 = vpop.permute.xlu0 %347
    %351 = vset.pattern.permute.xlu0 0
    %352 = vperm.xlu0 %351, %v152
    %v353 = vpop.permute.xlu0 %352
    %356 = vset.pattern.permute.xlu0 0
    %357 = vperm.xlu0 %356, %v153
    %v358 = vpop.permute.xlu0 %357
    %361 = vset.pattern.permute.xlu0 0
    %362 = vperm.xlu0 %361, %v154
    %v363 = vpop.permute.xlu0 %362
    %366 = vset.pattern.permute.xlu0 0
    %367 = vperm.xlu0 %366, %v155
    %v368 = vpop.permute.xlu0 %367
    %371 = vset.pattern.permute.xlu0 0
    %372 = vperm.xlu0 %371, %v156
    %v373 = vpop.permute.xlu0 %372
    %376 = vset.pattern.permute.xlu0 0
    %377 = vperm.xlu0 %376, %v157
    %v378 = vpop.permute.xlu0 %377
    %381 = vset.pattern.permute.xlu0 0
    %382 = vperm.xlu0 %381, %v158
    %v383 = vpop.permute.xlu0 %382
    %386 = vset.pattern.permute.xlu0 0
    %387 = vperm.xlu0 %386, %v159
    %v388 = vpop.permute.xlu0 %387
    %391 = vset.pattern.permute.xlu0 0
    %392 = vperm.xlu0 %391, %v160
    %v393 = vpop.permute.xlu0 %392
    %396 = vset.pattern.permute.xlu0 0
    %397 = vperm.xlu0 %396, %v161
    %v398 = vpop.permute.xlu0 %397
    %401 = vset.pattern.permute.xlu0 0
    %402 = vperm.xlu0 %401, %v162
    %v403 = vpop.permute.xlu0 %402
    %406 = vset.pattern.permute.xlu0 0
    %407 = vperm.xlu0 %406, %v163
    %v408 = vpop.permute.xlu0 %407
    %411 = vset.pattern.permute.xlu0 0
    %412 = vperm.xlu0 %411, %v164
    %v413 = vpop.permute.xlu0 %412
    %416 = vset.pattern.permute.xlu0 0
    %417 = vperm.xlu0 %416, %v165
    %v418 = vpop.permute.xlu0 %417
    %421 = vset.pattern.permute.xlu0 0
    %422 = vperm.xlu0 %421, %v166
    %v423 = vpop.permute.xlu0 %422
    %426 = vset.pattern.permute.xlu0 0
    %427 = vperm.xlu0 %426, %v167
    %v428 = vpop.permute.xlu0 %427
    %431 = vset.pattern.permute.xlu0 0
    %432 = vperm.xlu0 %431, %v168
    %v433 = vpop.permute.xlu0 %432
    %436 = vset.pattern.permute.xlu0 0
    %437 = vperm.xlu0 %436, %v169
    %v438 = vpop.permute.xlu0 %437
    %441 = vset.pattern.permute.xlu0 0
    %442 = vperm.xlu0 %441, %v170
    %v443 = vpop.permute.xlu0 %442
    %446 = vset.pattern.permute.xlu0 0
    %447 = vperm.xlu0 %446, %v171
    %v448 = vpop.permute.xlu0 %447
    %451 = vset.pattern.permute.xlu0 0
    %452 = vperm.xlu0 %451, %v172
    %v453 = vpop.permute.xlu0 %452
    %456 = vset.pattern.permute.xlu0 0
    %457 = vperm.xlu0 %456, %v173
    %v458 = vpop.permute.xlu0 %457
    %461 = vset.pattern.permute.xlu0 0
    %462 = vperm.xlu0 %461, %v174
    %v463 = vpop.permute.xlu0 %462
    %466 = vset.pattern.permute.xlu0 0
    %467 = vperm.xlu0 %466, %v175
    %v468 = vpop.permute.xlu0 %467
    %471 = vset.pattern.permute.xlu0 0
    %472 = vperm.xlu0 %471, %v176
    %v473 = vpop.permute.xlu0 %472
    %476 = vset.pattern.permute.xlu0 0
    %477 = vperm.xlu0 %476, %v177
    %v478 = vpop.permute.xlu0 %477
    %481 = vset.pattern.permute.xlu0 0
    %482 = vperm.xlu0 %481, %v178
    %v483 = vpop.permute.xlu0 %482
    %486 = vset.pattern.permute.xlu0 0
    %487 = vperm.xlu0 %486, %v179
    %v488 = vpop.permute.xlu0 %487
    %491 = vset.pattern.permute.xlu0 0
    %492 = vperm.xlu0 %491, %v180
    %v493 = vpop.permute.xlu0 %492
    %496 = vset.pattern.permute.xlu0 0
    %497 = vperm.xlu0 %496, %v181
    %v498 = vpop.permute.xlu0 %497
    %501 = vset.pattern.permute.xlu0 0
    %502 = vperm.xlu0 %501, %v182
    %v503 = vpop.permute.xlu0 %502
    %506 = vset.pattern.permute.xlu0 0
    %507 = vperm.xlu0 %506, %v183
    %v508 = vpop.permute.xlu0 %507
    %511 = vset.pattern.permute.xlu0 0
    %512 = vperm.xlu0 %511, %v184
    %v513 = vpop.permute.xlu0 %512
    %516 = vset.pattern.permute.xlu0 0
    %517 = vperm.xlu0 %516, %v185
    %v518 = vpop.permute.xlu0 %517
    %521 = vset.pattern.permute.xlu0 0
    %522 = vperm.xlu0 %521, %v186
    %v523 = vpop.permute.xlu0 %522
    %526 = vset.pattern.permute.xlu0 0
    %527 = vperm.xlu0 %526, %v187
    %v528 = vpop.permute.xlu0 %527
    %531 = vset.pattern.permute.xlu0 0
    %532 = vperm.xlu0 %531, %v188
    %v533 = vpop.permute.xlu0 %532
    %536 = vset.pattern.permute.xlu0 0
    %537 = vperm.xlu0 %536, %v189
    %v538 = vpop.permute.xlu0 %537
    %541 = vset.pattern.permute.xlu0 0
    %542 = vperm.xlu0 %541, %v190
    %v543 = vpop.permute.xlu0 %542
    %546 = vset.pattern.permute.xlu0 0
    %547 = vperm.xlu0 %546, %v191
    %v548 = vpop.permute.xlu0 %547
    %551 = vset.pattern.permute.xlu0 0
    %552 = vperm.xlu0 %551, %v192
    %v553 = vpop.permute.xlu0 %552
    %556 = vset.pattern.permute.xlu0 0
    %557 = vperm.xlu0 %556, %v193
    %v558 = vpop.permute.xlu0 %557
    %561 = vset.pattern.permute.xlu0 0
    %562 = vperm.xlu0 %561, %v194
    %v563 = vpop.permute.xlu0 %562
    %566 = vset.pattern.permute.xlu0 0
    %567 = vperm.xlu0 %566, %v195
    %v568 = vpop.permute.xlu0 %567
    %571 = vset.pattern.permute.xlu0 0
    %572 = vperm.xlu0 %571, %v196
    %v573 = vpop.permute.xlu0 %572
    %576 = vset.pattern.permute.xlu0 0
    %577 = vperm.xlu0 %576, %v197
    %v578 = vpop.permute.xlu0 %577
    %581 = vset.pattern.permute.xlu0 0
    %582 = vperm.xlu0 %581, %v198
    %v583 = vpop.permute.xlu0 %582
    %586 = vset.pattern.permute.xlu0 0
    %587 = vperm.xlu0 %586, %v199
    %v588 = vpop.permute.xlu0 %587
    %591 = vset.pattern.permute.xlu0 0
    %592 = vperm.xlu0 %591, %v200
    %v593 = vpop.permute.xlu0 %592
    %596 = vset.pattern.permute.xlu0 0
    %597 = vperm.xlu0 %596, %v201
    %v598 = vpop.permute.xlu0 %597
    %601 = vset.pattern.permute.xlu0 0
    %602 = vperm.xlu0 %601, %v202
    %v603 = vpop.permute.xlu0 %602
    %606 = vset.pattern.permute.xlu0 0
    %607 = vperm.xlu0 %606, %v203
    %v608 = vpop.permute.xlu0 %607
    %611 = vset.pattern.permute.xlu0 0
    %612 = vperm.xlu0 %611, %v204
    %v613 = vpop.permute.xlu0 %612
    %616 = vset.pattern.permute.xlu0 0
    %617 = vperm.xlu0 %616, %v205
    %v618 = vpop.permute.xlu0 %617
    %621 = vset.pattern.permute.xlu0 0
    %622 = vperm.xlu0 %621, %v206
    %v623 = vpop.permute.xlu0 %622
    %626 = vset.pattern.permute.xlu0 0
    %627 = vperm.xlu0 %626, %v207
    %v628 = vpop.permute.xlu0 %627
    %631 = vset.pattern.permute.xlu0 0
    %632 = vperm.xlu0 %631, %v208
    %v633 = vpop.permute.xlu0 %632
    %636 = vset.pattern.permute.xlu0 0
    %637 = vperm.xlu0 %636, %v209
    %v638 = vpop.permute.xlu0 %637
    %641 = vset.pattern.permute.xlu0 0
    %642 = vperm.xlu0 %641, %v210
    %v643 = vpop.permute.xlu0 %642
    %646 = vset.pattern.permute.xlu0 0
    %647 = vperm.xlu0 %646, %v211
    %v648 = vpop.permute.xlu0 %647
    %651 = vset.pattern.permute.xlu0 0
    %652 = vperm.xlu0 %651, %v212
    %v653 = vpop.permute.xlu0 %652
    %656 = vset.pattern.permute.xlu0 0
    %657 = vperm.xlu0 %656, %v213
    %v658 = vpop.permute.xlu0 %657
    %661 = vset.pattern.permute.xlu0 0
    %662 = vperm.xlu0 %661, %v214
    %v663 = vpop.permute.xlu0 %662
    %666 = vset.pattern.permute.xlu0 0
    %667 = vperm.xlu0 %666, %v215
    %v668 = vpop.permute.xlu0 %667
    %671 = vset.pattern.permute.xlu0 0
    %672 = vperm.xlu0 %671, %v216
    %v673 = vpop.permute.xlu0 %672
    %676 = vset.pattern.permute.xlu0 0
    %677 = vperm.xlu0 %676, %v217
    %v678 = vpop.permute.xlu0 %677
    %681 = vset.pattern.permute.xlu0 0
    %682 = vperm.xlu0 %681, %v218
    %v683 = vpop.permute.xlu0 %682
    %686 = vset.pattern.permute.xlu0 0
    %687 = vperm.xlu0 %686, %v219
    %v688 = vpop.permute.xlu0 %687
    %691 = vset.pattern.permute.xlu0 0
    %692 = vperm.xlu0 %691, %v220
    %v693 = vpop.permute.xlu0 %692
    %696 = vset.pattern.permute.xlu0 0
    %697 = vperm.xlu0 %696, %v221
    %v698 = vpop.permute.xlu0 %697
    %701 = vset.pattern.permute.xlu0 0
    %702 = vperm.xlu0 %701, %v222
    %v703 = vpop.permute.xlu0 %702
    %706 = vset.pattern.permute.xlu0 0
    %707 = vperm.xlu0 %706, %v223
    %v708 = vpop.permute.xlu0 %707
    %711 = vset.pattern.permute.xlu0 0
    %712 = vperm.xlu0 %711, %v224
    %v713 = vpop.permute.xlu0 %712
    %v715 = vmul.f32 %v29, %v228
    %v716 = vmul.f32 %v30, %v233
    %v717 = vmul.f32 %v31, %v238
    %v718 = vmul.f32 %v32, %v243
    %v719 = vmul.f32 %v33, %v248
    %v720 = vmul.f32 %v34, %v253
    %v721 = vmul.f32 %v35, %v258
    %v722 = vmul.f32 %v36, %v263
    %v723 = vmul.f32 %v37, %v268
    %v724 = vmul.f32 %v38, %v273
    %v725 = vmul.f32 %v39, %v278
    %v726 = vmul.f32 %v40, %v283
    %v727 = vmul.f32 %v41, %v288
    %v728 = vmul.f32 %v42, %v293
    %v729 = vmul.f32 %v43, %v298
    %v730 = vmul.f32 %v44, %v303
    %v731 = vmul.f32 %v45, %v308
    %v732 = vmul.f32 %v46, %v313
    %v733 = vmul.f32 %v47, %v318
    %v734 = vmul.f32 %v48, %v323
    %v735 = vmul.f32 %v49, %v328
    %v736 = vmul.f32 %v50, %v333
    %v737 = vmul.f32 %v51, %v338
    %v738 = vmul.f32 %v52, %v343
    %v739 = vmul.f32 %v53, %v348
    %v740 = vmul.f32 %v54, %v353
    %v741 = vmul.f32 %v55, %v358
    %v742 = vmul.f32 %v56, %v363
    %v743 = vmul.f32 %v57, %v368
    %v744 = vmul.f32 %v58, %v373
    %v745 = vmul.f32 %v59, %v378
    %v746 = vmul.f32 %v60, %v383
    %v747 = vmul.f32 %v61, %v388
    %v748 = vmul.f32 %v62, %v393
    %v749 = vmul.f32 %v63, %v398
    %v750 = vmul.f32 %v64, %v403
    %v751 = vmul.f32 %v65, %v408
    %v752 = vmul.f32 %v66, %v413
    %v753 = vmul.f32 %v67, %v418
    %v754 = vmul.f32 %v68, %v423
    %v755 = vmul.f32 %v69, %v428
    %v756 = vmul.f32 %v70, %v433
    %v757 = vmul.f32 %v71, %v438
    %v758 = vmul.f32 %v72, %v443
    %v759 = vmul.f32 %v73, %v448
    %v760 = vmul.f32 %v74, %v453
    %v761 = vmul.f32 %v75, %v458
    %v762 = vmul.f32 %v76, %v463
    %v763 = vmul.f32 %v77, %v468
    %v764 = vmul.f32 %v78, %v473
    %v765 = vmul.f32 %v79, %v478
    %v766 = vmul.f32 %v80, %v483
    %v767 = vmul.f32 %v81, %v488
    %v768 = vmul.f32 %v82, %v493
    %v769 = vmul.f32 %v83, %v498
    %v770 = vmul.f32 %v84, %v503
    %v771 = vmul.f32 %v85, %v508
    %v772 = vmul.f32 %v86, %v513
    %v773 = vmul.f32 %v87, %v518
    %v774 = vmul.f32 %v88, %v523
    %v775 = vmul.f32 %v89, %v528
    %v776 = vmul.f32 %v90, %v533
    %v777 = vmul.f32 %v91, %v538
    %v778 = vmul.f32 %v92, %v543
    %v779 = vmul.f32 %v93, %v548
    %v780 = vmul.f32 %v94, %v553
    %v781 = vmul.f32 %v95, %v558
    %v782 = vmul.f32 %v96, %v563
    %v783 = vmul.f32 %v97, %v568
    %v784 = vmul.f32 %v98, %v573
    %v785 = vmul.f32 %v99, %v578
    %v786 = vmul.f32 %v100, %v583
    %v787 = vmul.f32 %v101, %v588
    %v788 = vmul.f32 %v102, %v593
    %v789 = vmul.f32 %v103, %v598
    %v790 = vmul.f32 %v104, %v603
    %v791 = vmul.f32 %v105, %v608
    %v792 = vmul.f32 %v106, %v613
    %v793 = vmul.f32 %v107, %v618
    %v794 = vmul.f32 %v108, %v623
    %v795 = vmul.f32 %v109, %v628
    %v796 = vmul.f32 %v110, %v633
    %v797 = vmul.f32 %v111, %v638
    %v798 = vmul.f32 %v112, %v643
    %v799 = vmul.f32 %v113, %v648
    %v800 = vmul.f32 %v114, %v653
    %v801 = vmul.f32 %v115, %v658
    %v802 = vmul.f32 %v116, %v663
    %v803 = vmul.f32 %v117, %v668
    %v804 = vmul.f32 %v118, %v673
    %v805 = vmul.f32 %v119, %v678
    %v806 = vmul.f32 %v120, %v683
    %v807 = vmul.f32 %v121, %v688
    %v808 = vmul.f32 %v122, %v693
    %v809 = vmul.f32 %v123, %v698
    %v810 = vmul.f32 %v124, %v703
    %v811 = vmul.f32 %v125, %v708
    %v812 = vmul.f32 %v126, %v713
    %v813 = vpack.c.bf16 %v716, %v715
    %v814 = vpack.c.bf16 %v718, %v717
    %v815 = vpack.c.bf16 %v720, %v719
    %v816 = vpack.c.bf16 %v722, %v721
    %v817 = vpack.c.bf16 %v724, %v723
    %v818 = vpack.c.bf16 %v726, %v725
    %v819 = vpack.c.bf16 %v728, %v727
    %v820 = vpack.c.bf16 %v730, %v729
    %v821 = vpack.c.bf16 %v732, %v731
    %v822 = vpack.c.bf16 %v734, %v733
    %v823 = vpack.c.bf16 %v736, %v735
    %v824 = vpack.c.bf16 %v738, %v737
    %v825 = vpack.c.bf16 %v740, %v739
    %v826 = vpack.c.bf16 %v742, %v741
    %v827 = vpack.c.bf16 %v744, %v743
    %v828 = vpack.c.bf16 %v746, %v745
    %v829 = vpack.c.bf16 %v748, %v747
    %v830 = vpack.c.bf16 %v750, %v749
    %v831 = vpack.c.bf16 %v752, %v751
    %v832 = vpack.c.bf16 %v754, %v753
    %v833 = vpack.c.bf16 %v756, %v755
    %v834 = vpack.c.bf16 %v758, %v757
    %v835 = vpack.c.bf16 %v760, %v759
    %v836 = vpack.c.bf16 %v762, %v761
    %v837 = vpack.c.bf16 %v764, %v763
    %v838 = vpack.c.bf16 %v766, %v765
    %v839 = vpack.c.bf16 %v768, %v767
    %v840 = vpack.c.bf16 %v770, %v769
    %v841 = vpack.c.bf16 %v772, %v771
    %v842 = vpack.c.bf16 %v774, %v773
    %v843 = vpack.c.bf16 %v776, %v775
    %v844 = vpack.c.bf16 %v778, %v777
    %v845 = vpack.c.bf16 %v780, %v779
    %v846 = vpack.c.bf16 %v782, %v781
    %v847 = vpack.c.bf16 %v784, %v783
    %v848 = vpack.c.bf16 %v786, %v785
    %v849 = vpack.c.bf16 %v788, %v787
    %v850 = vpack.c.bf16 %v790, %v789
    %v851 = vpack.c.bf16 %v792, %v791
    %v852 = vpack.c.bf16 %v794, %v793
    %v853 = vpack.c.bf16 %v796, %v795
    %v854 = vpack.c.bf16 %v798, %v797
    %v855 = vpack.c.bf16 %v800, %v799
    %v856 = vpack.c.bf16 %v802, %v801
    %v857 = vpack.c.bf16 %v804, %v803
    %v858 = vpack.c.bf16 %v806, %v805
    %v859 = vpack.c.bf16 %v808, %v807
    %v860 = vpack.c.bf16 %v810, %v809
    %v861 = vpack.c.bf16 %v812, %v811
    %v862 = vld [vmem:[#allocation2] sm:$0xff]
    %v863 = vld [vmem:[#allocation2 + $0x8] sm:$0xff]
    %v864 = vld [vmem:[#allocation2 + $0x10] sm:$0xff]
    %v865 = vld [vmem:[#allocation2 + $0x18] sm:$0xf]
    %v866 = vld [vmem:[#allocation2 + $0x1c] sm:$0xff]
    %v867 = vld [vmem:[#allocation2 + $0x24] sm:$0xff]
    %v868 = vld [vmem:[#allocation2 + $0x2c] sm:$0xff]
    %v869 = vld [vmem:[#allocation2 + $0x34] sm:$0xf]
    %v870 = vld [vmem:[#allocation2 + $0x38] sm:$0xff]
    %v871 = vld [vmem:[#allocation2 + $0x40] sm:$0xff]
    %v872 = vld [vmem:[#allocation2 + $0x48] sm:$0xff]
    %v873 = vld [vmem:[#allocation2 + $0x50] sm:$0xf]
    %v874 = vld [vmem:[#allocation2 + $0x54] sm:$0xff]
    %v875 = vld [vmem:[#allocation2 + $0x5c] sm:$0xff]
    %v876 = vld [vmem:[#allocation2 + $0x64] sm:$0xff]
    %v877 = vld [vmem:[#allocation2 + $0x6c] sm:$0xf]
    %v878 = vld [vmem:[#allocation2 + $0x70] sm:$0xff]
    %v879 = vld [vmem:[#allocation2 + $0x78] sm:$0xff]
    %v880 = vld [vmem:[#allocation2 + $0x80] sm:$0xff]
    %v881 = vld [vmem:[#allocation2 + $0x88] sm:$0xf]
    %v882 = vld [vmem:[#allocation2 + $0x8c] sm:$0xff]
    %v883 = vld [vmem:[#allocation2 + $0x94] sm:$0xff]
    %v884 = vld [vmem:[#allocation2 + $0x9c] sm:$0xff]
    %v885 = vld [vmem:[#allocation2 + $0xa4] sm:$0xf]
    %v886 = vld [vmem:[#allocation2 + $0xa8] sm:$0xff]
    %v887 = vld [vmem:[#allocation2 + $0xb0] sm:$0xff]
    %v888 = vld [vmem:[#allocation2 + $0xb8] sm:$0xff]
    %v889 = vld [vmem:[#allocation2 + $0xc0] sm:$0xf]
    %v890 = vld [vmem:[#allocation2 + $0xc4] sm:$0xff]
    %v891 = vld [vmem:[#allocation2 + $0xcc] sm:$0xff]
    %v892 = vld [vmem:[#allocation2 + $0xd4] sm:$0xff]
    %v893 = vld [vmem:[#allocation2 + $0xdc] sm:$0xf]
    %v894 = vld [vmem:[#allocation2 + $0xe0] sm:$0xff]
    %v895 = vld [vmem:[#allocation2 + $0xe8] sm:$0xff]
    %v896 = vld [vmem:[#allocation2 + $0xf0] sm:$0xff]
    %v897 = vld [vmem:[#allocation2 + $0xf8] sm:$0xf]
    %v898 = vld [vmem:[#allocation2 + $0xfc] sm:$0xff]
    %v899 = vld [vmem:[#allocation2 + $0x104] sm:$0xff]
    %v900 = vld [vmem:[#allocation2 + $0x10c] sm:$0xff]
    %v901 = vld [vmem:[#allocation2 + $0x114] sm:$0xf]
    %v902 = vld [vmem:[#allocation2 + $0x118] sm:$0xff]
    %v903 = vld [vmem:[#allocation2 + $0x120] sm:$0xff]
    %v904 = vld [vmem:[#allocation2 + $0x128] sm:$0xff]
    %v905 = vld [vmem:[#allocation2 + $0x130] sm:$0xf]
    %v906 = vld [vmem:[#allocation2 + $0x134] sm:$0xff]
    %v907 = vld [vmem:[#allocation2 + $0x13c] sm:$0xff]
    %v908 = vld [vmem:[#allocation2 + $0x144] sm:$0xff]
    %v909 = vld [vmem:[#allocation2 + $0x14c] sm:$0xf]
    %v910 = vld [vmem:[#allocation2 + $0x150] sm:$0xff]
    %v911 = vld [vmem:[#allocation2 + $0x158] sm:$0xff]
    %v912 = vld [vmem:[#allocation2 + $0x160] sm:$0xff]
    %v913 = vld [vmem:[#allocation2 + $0x168] sm:$0xf]
    %v914 = vld [vmem:[#allocation2 + $0x16c] sm:$0xff]
    %v915 = vld [vmem:[#allocation2 + $0x174] sm:$0xff]
    %v916 = vld [vmem:[#allocation2 + $0x17c] sm:$0xff]
    %v917 = vld [vmem:[#allocation2 + $0x184] sm:$0xf]
    %v918 = vld [vmem:[#allocation2 + $0x188] sm:$0xff]
    %v919 = vld [vmem:[#allocation2 + $0x190] sm:$0xff]
    %v920 = vld [vmem:[#allocation2 + $0x198] sm:$0xff]
    %v921 = vld [vmem:[#allocation2 + $0x1a0] sm:$0xf]
    %v922 = vld [vmem:[#allocation2 + $0x1a4] sm:$0xff]
    %v923 = vld [vmem:[#allocation2 + $0x1ac] sm:$0xff]
    %v924 = vld [vmem:[#allocation2 + $0x1b4] sm:$0xff]
    %v925 = vld [vmem:[#allocation2 + $0x1bc] sm:$0xf]
    %v926 = vld [vmem:[#allocation2 + $0x1c0] sm:$0xff]
    %v927 = vld [vmem:[#allocation2 + $0x1c8] sm:$0xff]
    %v928 = vld [vmem:[#allocation2 + $0x1d0] sm:$0xff]
    %v929 = vld [vmem:[#allocation2 + $0x1d8] sm:$0xf]
    %v930 = vld [vmem:[#allocation2 + $0x1dc] sm:$0xff]
    %v931 = vld [vmem:[#allocation2 + $0x1e4] sm:$0xff]
    %v932 = vld [vmem:[#allocation2 + $0x1ec] sm:$0xff]
    %v933 = vld [vmem:[#allocation2 + $0x1f4] sm:$0xf]
    %v934 = vld [vmem:[#allocation2 + $0x1f8] sm:$0xff]
    %v935 = vld [vmem:[#allocation2 + $0x200] sm:$0xff]
    %v936 = vld [vmem:[#allocation2 + $0x208] sm:$0xff]
    %v937 = vld [vmem:[#allocation2 + $0x210] sm:$0xf]
    %v938 = vld [vmem:[#allocation2 + $0x214] sm:$0xff]
    %v939 = vld [vmem:[#allocation2 + $0x21c] sm:$0xff]
    %v940 = vld [vmem:[#allocation2 + $0x224] sm:$0xff]
    %v941 = vld [vmem:[#allocation2 + $0x22c] sm:$0xf]
    %v942 = vld [vmem:[#allocation2 + $0x230] sm:$0xff]
    %v943 = vld [vmem:[#allocation2 + $0x238] sm:$0xff]
    %v944 = vld [vmem:[#allocation2 + $0x240] sm:$0xff]
    %v945 = vld [vmem:[#allocation2 + $0x248] sm:$0xf]
    %v946 = vld [vmem:[#allocation2 + $0x24c] sm:$0xff]
    %v947 = vld [vmem:[#allocation2 + $0x254] sm:$0xff]
    %v948 = vld [vmem:[#allocation2 + $0x25c] sm:$0xff]
    %v949 = vld [vmem:[#allocation2 + $0x264] sm:$0xf]
    %v950 = vld [vmem:[#allocation2 + $0x268] sm:$0xff]
    %v951 = vld [vmem:[#allocation2 + $0x270] sm:$0xff]
    %v952 = vld [vmem:[#allocation2 + $0x278] sm:$0xff]
    %v953 = vld [vmem:[#allocation2 + $0x280] sm:$0xf]
    %v954 = vld [vmem:[#allocation2 + $0x284] sm:$0xff]
    %v955 = vld [vmem:[#allocation2 + $0x28c] sm:$0xff]
    %v956 = vld [vmem:[#allocation2 + $0x294] sm:$0xff]
    %v957 = vld [vmem:[#allocation2 + $0x29c] sm:$0xf]
    %v958 = vld [vmem:[#allocation2 + $0x2a0] sm:$0xff]
    %v959 = vld [vmem:[#allocation2 + $0x2a8] sm:$0xff]
    %v960 = vld [vmem:[#allocation2 + $0x2b0] sm:$0xff]
    %v961 = vld [vmem:[#allocation2 + $0x2b8] sm:$0xf]
    %v962 = vld [vmem:[#allocation2 + $0x2bc] sm:$0xff]
    %v963 = vld [vmem:[#allocation2 + $0x2c4] sm:$0xff]
    %v964 = vld [vmem:[#allocation2 + $0x2cc] sm:$0xff]
    %v965 = vld [vmem:[#allocation2 + $0x2d4] sm:$0xf]
    %v966 = vld [vmem:[#allocation2 + $0x2d8] sm:$0xff]
    %v967 = vld [vmem:[#allocation2 + $0x2e0] sm:$0xff]
    %v968 = vld [vmem:[#allocation2 + $0x2e8] sm:$0xff]
    %v969 = vld [vmem:[#allocation2 + $0x2f0] sm:$0xf]
    %v970 = vld [vmem:[#allocation2 + $0x2f4] sm:$0xff]
    %v971 = vld [vmem:[#allocation2 + $0x2fc] sm:$0xff]
    %v972 = vld [vmem:[#allocation2 + $0x304] sm:$0xff]
    %v973 = vld [vmem:[#allocation2 + $0x30c] sm:$0xf]
    %v974 = vld [vmem:[#allocation2 + $0x310] sm:$0xff]
    %v975 = vld [vmem:[#allocation2 + $0x318] sm:$0xff]
    %v976 = vld [vmem:[#allocation2 + $0x320] sm:$0xff]
    %v977 = vld [vmem:[#allocation2 + $0x328] sm:$0xf]
    %v978 = vld [vmem:[#allocation2 + $0x32c] sm:$0xff]
    %v979 = vld [vmem:[#allocation2 + $0x334] sm:$0xff]
    %v980 = vld [vmem:[#allocation2 + $0x33c] sm:$0xff]
    %v981 = vld [vmem:[#allocation2 + $0x344] sm:$0xf]
    %v982 = vld [vmem:[#allocation2 + $0x348] sm:$0xff]
    %v983 = vld [vmem:[#allocation2 + $0x350] sm:$0xff]
    %v984 = vld [vmem:[#allocation2 + $0x358] sm:$0xff]
    %v985 = vld [vmem:[#allocation2 + $0x360] sm:$0xf]
    %v986 = vld [vmem:[#allocation2 + $0x364] sm:$0xff]
    %v987 = vld [vmem:[#allocation2 + $0x36c] sm:$0xff]
    %v988 = vld [vmem:[#allocation2 + $0x374] sm:$0xff]
    %v989 = vld [vmem:[#allocation2 + $0x37c] sm:$0xf]
    %v990 = vld [vmem:[#allocation2 + $0x380] sm:$0xff]
    %v991 = vld [vmem:[#allocation2 + $0x388] sm:$0xff]
    %v992 = vld [vmem:[#allocation2 + $0x390] sm:$0xff]
    %v993 = vld [vmem:[#allocation2 + $0x398] sm:$0xf]
    %v994 = vld [vmem:[#allocation2 + $0x39c] sm:$0xff]
    %v995 = vld [vmem:[#allocation2 + $0x3a4] sm:$0xff]
    %v996 = vld [vmem:[#allocation2 + $0x3ac] sm:$0xff]
    %v997 = vld [vmem:[#allocation2 + $0x3b4] sm:$0xf]
    %v998 = vld [vmem:[#allocation2 + $0x3b8] sm:$0xff]
    %v999 = vld [vmem:[#allocation2 + $0x3c0] sm:$0xff]
    %v1000 = vld [vmem:[#allocation2 + $0x3c8] sm:$0xff]
    %v1001 = vld [vmem:[#allocation2 + $0x3d0] sm:$0xf]
    %v1002 = vld [vmem:[#allocation2 + $0x3d4] sm:$0xff]
    %v1003 = vld [vmem:[#allocation2 + $0x3dc] sm:$0xff]
    %v1004 = vld [vmem:[#allocation2 + $0x3e4] sm:$0xff]
    %v1005 = vld [vmem:[#allocation2 + $0x3ec] sm:$0xf]
    %v1006 = vld [vmem:[#allocation2 + $0x3f0] sm:$0xff]
    %v1007 = vld [vmem:[#allocation2 + $0x3f8] sm:$0xff]
    %v1008 = vld [vmem:[#allocation2 + $0x400] sm:$0xff]
    %v1009 = vld [vmem:[#allocation2 + $0x408] sm:$0xf]
    %v1010 = vld [vmem:[#allocation2 + $0x40c] sm:$0xff]
    %v1011 = vld [vmem:[#allocation2 + $0x414] sm:$0xff]
    %v1012 = vld [vmem:[#allocation2 + $0x41c] sm:$0xff]
    %v1013 = vld [vmem:[#allocation2 + $0x424] sm:$0xf]
    %v1014 = vld [vmem:[#allocation2 + $0x428] sm:$0xff]
    %v1015 = vld [vmem:[#allocation2 + $0x430] sm:$0xff]
    %v1016 = vld [vmem:[#allocation2 + $0x438] sm:$0xff]
    %v1017 = vld [vmem:[#allocation2 + $0x440] sm:$0xf]
    %v1018 = vld [vmem:[#allocation2 + $0x444] sm:$0xff]
    %v1019 = vld [vmem:[#allocation2 + $0x44c] sm:$0xff]
    %v1020 = vld [vmem:[#allocation2 + $0x454] sm:$0xff]
    %v1021 = vld [vmem:[#allocation2 + $0x45c] sm:$0xf]
    %v1022 = vld [vmem:[#allocation2 + $0x460] sm:$0xff]
    %v1023 = vld [vmem:[#allocation2 + $0x468] sm:$0xff]
    %v1024 = vld [vmem:[#allocation2 + $0x470] sm:$0xff]
    %v1025 = vld [vmem:[#allocation2 + $0x478] sm:$0xf]
    %v1026 = vld [vmem:[#allocation2 + $0x47c] sm:$0xff]
    %v1027 = vld [vmem:[#allocation2 + $0x484] sm:$0xff]
    %v1028 = vld [vmem:[#allocation2 + $0x48c] sm:$0xff]
    %v1029 = vld [vmem:[#allocation2 + $0x494] sm:$0xf]
    %v1030 = vld [vmem:[#allocation2 + $0x498] sm:$0xff]
    %v1031 = vld [vmem:[#allocation2 + $0x4a0] sm:$0xff]
    %v1032 = vld [vmem:[#allocation2 + $0x4a8] sm:$0xff]
    %v1033 = vld [vmem:[#allocation2 + $0x4b0] sm:$0xf]
    %v1034 = vld [vmem:[#allocation2 + $0x4b4] sm:$0xff]
    %v1035 = vld [vmem:[#allocation2 + $0x4bc] sm:$0xff]
    %v1036 = vld [vmem:[#allocation2 + $0x4c4] sm:$0xff]
    %v1037 = vld [vmem:[#allocation2 + $0x4cc] sm:$0xf]
    %v1038 = vld [vmem:[#allocation2 + $0x4d0] sm:$0xff]
    %v1039 = vld [vmem:[#allocation2 + $0x4d8] sm:$0xff]
    %v1040 = vld [vmem:[#allocation2 + $0x4e0] sm:$0xff]
    %v1041 = vld [vmem:[#allocation2 + $0x4e8] sm:$0xf]
    %v1042 = vld [vmem:[#allocation2 + $0x4ec] sm:$0xff]
    %v1043 = vld [vmem:[#allocation2 + $0x4f4] sm:$0xff]
    %v1044 = vld [vmem:[#allocation2 + $0x4fc] sm:$0xff]
    %v1045 = vld [vmem:[#allocation2 + $0x504] sm:$0xf]
    %v1046 = vld [vmem:[#allocation2 + $0x508] sm:$0xff]
    %v1047 = vld [vmem:[#allocation2 + $0x510] sm:$0xff]
    %v1048 = vld [vmem:[#allocation2 + $0x518] sm:$0xff]
    %v1049 = vld [vmem:[#allocation2 + $0x520] sm:$0xf]
    %v1050 = vld [vmem:[#allocation2 + $0x524] sm:$0xff]
    %v1051 = vld [vmem:[#allocation2 + $0x52c] sm:$0xff]
    %v1052 = vld [vmem:[#allocation2 + $0x534] sm:$0xff]
    %v1053 = vld [vmem:[#allocation2 + $0x53c] sm:$0xf]
    %v1054 = vld [vmem:[#allocation2 + $0x540] sm:$0xff]
    %v1055 = vld [vmem:[#allocation2 + $0x548] sm:$0xff]
    %v1056 = vld [vmem:[#allocation2 + $0x550] sm:$0xff]
    %v1057 = vld [vmem:[#allocation2 + $0x558] sm:$0xf]
    %v1058 = vld [vmem:[#allocation2 + $0x55c] sm:$0xff]
    %v1059 = vld [vmem:[#allocation2 + $0x564] sm:$0xff]
    %v1060 = vld [vmem:[#allocation2 + $0x56c] sm:$0xff]
    %v1061 = vld [vmem:[#allocation2 + $0x574] sm:$0xf]
    %v1062 = vld [vmem:[#allocation2 + $0x578] sm:$0xff]
    %v1063 = vld [vmem:[#allocation2 + $0x580] sm:$0xff]
    %v1064 = vld [vmem:[#allocation2 + $0x588] sm:$0xff]
    %v1065 = vld [vmem:[#allocation2 + $0x590] sm:$0xf]
    %v1066 = vld [vmem:[#allocation2 + $0x594] sm:$0xff]
    %v1067 = vld [vmem:[#allocation2 + $0x59c] sm:$0xff]
    %v1068 = vld [vmem:[#allocation2 + $0x5a4] sm:$0xff]
    %v1069 = vld [vmem:[#allocation2 + $0x5ac] sm:$0xf]
    %v1070 = vld [vmem:[#allocation2 + $0x5b0] sm:$0xff]
    %v1071 = vld [vmem:[#allocation2 + $0x5b8] sm:$0xff]
    %v1072 = vld [vmem:[#allocation2 + $0x5c0] sm:$0xff]
    %v1073 = vld [vmem:[#allocation2 + $0x5c8] sm:$0xf]
    %v1074 = vld [vmem:[#allocation2 + $0x5cc] sm:$0xff]
    %v1075 = vld [vmem:[#allocation2 + $0x5d4] sm:$0xff]
    %v1076 = vld [vmem:[#allocation2 + $0x5dc] sm:$0xff]
    %v1077 = vld [vmem:[#allocation2 + $0x5e4] sm:$0xf]
    %v1078 = vld [vmem:[#allocation2 + $0x5e8] sm:$0xff]
    %v1079 = vld [vmem:[#allocation2 + $0x5f0] sm:$0xff]
    %v1080 = vld [vmem:[#allocation2 + $0x5f8] sm:$0xff]
    %v1081 = vld [vmem:[#allocation2 + $0x600] sm:$0xf]
    %v1082 = vld [vmem:[#allocation2 + $0x604] sm:$0xff]
    %v1083 = vld [vmem:[#allocation2 + $0x60c] sm:$0xff]
    %v1084 = vld [vmem:[#allocation2 + $0x614] sm:$0xff]
    %v1085 = vld [vmem:[#allocation2 + $0x61c] sm:$0xf]
    %v1086 = vld [vmem:[#allocation2 + $0x620] sm:$0xff]
    %v1087 = vld [vmem:[#allocation2 + $0x628] sm:$0xff]
    %v1088 = vld [vmem:[#allocation2 + $0x630] sm:$0xff]
    %v1089 = vld [vmem:[#allocation2 + $0x638] sm:$0xf]
    %v1090 = vld [vmem:[#allocation2 + $0x63c] sm:$0xff]
    %v1091 = vld [vmem:[#allocation2 + $0x644] sm:$0xff]
    %v1092 = vld [vmem:[#allocation2 + $0x64c] sm:$0xff]
    %v1093 = vld [vmem:[#allocation2 + $0x654] sm:$0xf]
    %v1094 = vld [vmem:[#allocation2 + $0x658] sm:$0xff]
    %v1095 = vld [vmem:[#allocation2 + $0x660] sm:$0xff]
    %v1096 = vld [vmem:[#allocation2 + $0x668] sm:$0xff]
    %v1097 = vld [vmem:[#allocation2 + $0x670] sm:$0xf]
    %v1098 = vld [vmem:[#allocation2 + $0x674] sm:$0xff]
    %v1099 = vld [vmem:[#allocation2 + $0x67c] sm:$0xff]
    %v1100 = vld [vmem:[#allocation2 + $0x684] sm:$0xff]
    %v1101 = vld [vmem:[#allocation2 + $0x68c] sm:$0xf]
    %v1102 = vld [vmem:[#allocation2 + $0x690] sm:$0xff]
    %v1103 = vld [vmem:[#allocation2 + $0x698] sm:$0xff]
    %v1104 = vld [vmem:[#allocation2 + $0x6a0] sm:$0xff]
    %v1105 = vld [vmem:[#allocation2 + $0x6a8] sm:$0xf]
    %v1106 = vld [vmem:[#allocation2 + $0x6ac] sm:$0xff]
    %v1107 = vld [vmem:[#allocation2 + $0x6b4] sm:$0xff]
    %v1108 = vld [vmem:[#allocation2 + $0x6bc] sm:$0xff]
    %v1109 = vld [vmem:[#allocation2 + $0x6c4] sm:$0xf]
    %v1110 = vld [vmem:[#allocation2 + $0x6c8] sm:$0xff]
    %v1111 = vld [vmem:[#allocation2 + $0x6d0] sm:$0xff]
    %v1112 = vld [vmem:[#allocation2 + $0x6d8] sm:$0xff]
    %v1113 = vld [vmem:[#allocation2 + $0x6e0] sm:$0xf]
    %v1114 = vld [vmem:[#allocation2 + $0x6e4] sm:$0xff]
    %v1115 = vld [vmem:[#allocation2 + $0x6ec] sm:$0xff]
    %v1116 = vld [vmem:[#allocation2 + $0x6f4] sm:$0xff]
    %v1117 = vld [vmem:[#allocation2 + $0x6fc] sm:$0xf]
    %v1118 = vld [vmem:[#allocation2 + $0x700] sm:$0xff]
    %v1119 = vld [vmem:[#allocation2 + $0x708] sm:$0xff]
    %v1120 = vld [vmem:[#allocation2 + $0x710] sm:$0xff]
    %v1121 = vld [vmem:[#allocation2 + $0x718] sm:$0xf]
    %v1122 = vld [vmem:[#allocation2 + $0x71c] sm:$0xff]
    %v1123 = vld [vmem:[#allocation2 + $0x724] sm:$0xff]
    %v1124 = vld [vmem:[#allocation2 + $0x72c] sm:$0xff]
    %v1125 = vld [vmem:[#allocation2 + $0x734] sm:$0xf]
    %v1126 = vld [vmem:[#allocation2 + $0x738] sm:$0xff]
    %v1127 = vld [vmem:[#allocation2 + $0x740] sm:$0xff]
    %v1128 = vld [vmem:[#allocation2 + $0x748] sm:$0xff]
    %v1129 = vld [vmem:[#allocation2 + $0x750] sm:$0xf]
    %v1130 = vld [vmem:[#allocation2 + $0x754] sm:$0xff]
    %v1131 = vld [vmem:[#allocation2 + $0x75c] sm:$0xff]
    %v1132 = vld [vmem:[#allocation2 + $0x764] sm:$0xff]
    %v1133 = vld [vmem:[#allocation2 + $0x76c] sm:$0xf]
    %v1134 = vld [vmem:[#allocation2 + $0x770] sm:$0xff]
    %v1135 = vld [vmem:[#allocation2 + $0x778] sm:$0xff]
    %v1136 = vld [vmem:[#allocation2 + $0x780] sm:$0xff]
    %v1137 = vld [vmem:[#allocation2 + $0x788] sm:$0xf]
    %v1138 = vld [vmem:[#allocation2 + $0x78c] sm:$0xff]
    %v1139 = vld [vmem:[#allocation2 + $0x794] sm:$0xff]
    %v1140 = vld [vmem:[#allocation2 + $0x79c] sm:$0xff]
    %v1141 = vld [vmem:[#allocation2 + $0x7a4] sm:$0xf]
    %v1142 = vld [vmem:[#allocation2 + $0x7a8] sm:$0xff]
    %v1143 = vld [vmem:[#allocation2 + $0x7b0] sm:$0xff]
    %v1144 = vld [vmem:[#allocation2 + $0x7b8] sm:$0xff]
    %v1145 = vld [vmem:[#allocation2 + $0x7c0] sm:$0xf]
    %v1146 = vld [vmem:[#allocation2 + $0x7c4] sm:$0xff]
    %v1147 = vld [vmem:[#allocation2 + $0x7cc] sm:$0xff]
    %v1148 = vld [vmem:[#allocation2 + $0x7d4] sm:$0xff]
    %v1149 = vld [vmem:[#allocation2 + $0x7dc] sm:$0xf]
    %v1150 = vld [vmem:[#allocation2 + $0x7e0] sm:$0xff]
    %v1151 = vld [vmem:[#allocation2 + $0x7e8] sm:$0xff]
    %v1152 = vld [vmem:[#allocation2 + $0x7f0] sm:$0xff]
    %v1153 = vld [vmem:[#allocation2 + $0x7f8] sm:$0xf]
    %v1154 = vld [vmem:[#allocation2 + $0x7fc] sm:$0xff]
    %v1155 = vld [vmem:[#allocation2 + $0x804] sm:$0xff]
    %v1156 = vld [vmem:[#allocation2 + $0x80c] sm:$0xff]
    %v1157 = vld [vmem:[#allocation2 + $0x814] sm:$0xf]
    %v1158 = vld [vmem:[#allocation2 + $0x818] sm:$0xff]
    %v1159 = vld [vmem:[#allocation2 + $0x820] sm:$0xff]
    %v1160 = vld [vmem:[#allocation2 + $0x828] sm:$0xff]
    %v1161 = vld [vmem:[#allocation2 + $0x830] sm:$0xf]
    %v1162 = vld [vmem:[#allocation2 + $0x834] sm:$0xff]
    %v1163 = vld [vmem:[#allocation2 + $0x83c] sm:$0xff]
    %v1164 = vld [vmem:[#allocation2 + $0x844] sm:$0xff]
    %v1165 = vld [vmem:[#allocation2 + $0x84c] sm:$0xf]
    %v1166 = vld [vmem:[#allocation2 + $0x850] sm:$0xff]
    %v1167 = vld [vmem:[#allocation2 + $0x858] sm:$0xff]
    %v1168 = vld [vmem:[#allocation2 + $0x860] sm:$0xff]
    %v1169 = vld [vmem:[#allocation2 + $0x868] sm:$0xf]
    %v1170 = vld [vmem:[#allocation2 + $0x86c] sm:$0xff]
    %v1171 = vld [vmem:[#allocation2 + $0x874] sm:$0xff]
    %v1172 = vld [vmem:[#allocation2 + $0x87c] sm:$0xff]
    %v1173 = vld [vmem:[#allocation2 + $0x884] sm:$0xf]
    %v1174 = vld [vmem:[#allocation2 + $0x888] sm:$0xff]
    %v1175 = vld [vmem:[#allocation2 + $0x890] sm:$0xff]
    %v1176 = vld [vmem:[#allocation2 + $0x898] sm:$0xff]
    %v1177 = vld [vmem:[#allocation2 + $0x8a0] sm:$0xf]
    %v1178 = vld [vmem:[#allocation2 + $0x8a4] sm:$0xff]
    %v1179 = vld [vmem:[#allocation2 + $0x8ac] sm:$0xff]
    %v1180 = vld [vmem:[#allocation2 + $0x8b4] sm:$0xff]
    %v1181 = vld [vmem:[#allocation2 + $0x8bc] sm:$0xf]
    %v1182 = vld [vmem:[#allocation2 + $0x8c0] sm:$0xff]
    %v1183 = vld [vmem:[#allocation2 + $0x8c8] sm:$0xff]
    %v1184 = vld [vmem:[#allocation2 + $0x8d0] sm:$0xff]
    %v1185 = vld [vmem:[#allocation2 + $0x8d8] sm:$0xf]
    %v1186 = vld [vmem:[#allocation2 + $0x8dc] sm:$0xff]
    %v1187 = vld [vmem:[#allocation2 + $0x8e4] sm:$0xff]
    %v1188 = vld [vmem:[#allocation2 + $0x8ec] sm:$0xff]
    %v1189 = vld [vmem:[#allocation2 + $0x8f4] sm:$0xf]
    %v1190 = vld [vmem:[#allocation2 + $0x8f8] sm:$0xff]
    %v1191 = vld [vmem:[#allocation2 + $0x900] sm:$0xff]
    %v1192 = vld [vmem:[#allocation2 + $0x908] sm:$0xff]
    %v1193 = vld [vmem:[#allocation2 + $0x910] sm:$0xf]
    %v1194 = vld [vmem:[#allocation2 + $0x914] sm:$0xff]
    %v1195 = vld [vmem:[#allocation2 + $0x91c] sm:$0xff]
    %v1196 = vld [vmem:[#allocation2 + $0x924] sm:$0xff]
    %v1197 = vld [vmem:[#allocation2 + $0x92c] sm:$0xf]
    %v1198 = vld [vmem:[#allocation2 + $0x930] sm:$0xff]
    %v1199 = vld [vmem:[#allocation2 + $0x938] sm:$0xff]
    %v1200 = vld [vmem:[#allocation2 + $0x940] sm:$0xff]
    %v1201 = vld [vmem:[#allocation2 + $0x948] sm:$0xf]
    %v1202 = vld [vmem:[#allocation2 + $0x94c] sm:$0xff]
    %v1203 = vld [vmem:[#allocation2 + $0x954] sm:$0xff]
    %v1204 = vld [vmem:[#allocation2 + $0x95c] sm:$0xff]
    %v1205 = vld [vmem:[#allocation2 + $0x964] sm:$0xf]
    %v1206 = vld [vmem:[#allocation2 + $0x968] sm:$0xff]
    %v1207 = vld [vmem:[#allocation2 + $0x970] sm:$0xff]
    %v1208 = vld [vmem:[#allocation2 + $0x978] sm:$0xff]
    %v1209 = vld [vmem:[#allocation2 + $0x980] sm:$0xf]
    %v1210 = vld [vmem:[#allocation2 + $0x984] sm:$0xff]
    %v1211 = vld [vmem:[#allocation2 + $0x98c] sm:$0xff]
    %v1212 = vld [vmem:[#allocation2 + $0x994] sm:$0xff]
    %v1213 = vld [vmem:[#allocation2 + $0x99c] sm:$0xf]
    %v1214 = vld [vmem:[#allocation2 + $0x9a0] sm:$0xff]
    %v1215 = vld [vmem:[#allocation2 + $0x9a8] sm:$0xff]
    %v1216 = vld [vmem:[#allocation2 + $0x9b0] sm:$0xff]
    %v1217 = vld [vmem:[#allocation2 + $0x9b8] sm:$0xf]
    %v1218 = vld [vmem:[#allocation2 + $0x9bc] sm:$0xff]
    %v1219 = vld [vmem:[#allocation2 + $0x9c4] sm:$0xff]
    %v1220 = vld [vmem:[#allocation2 + $0x9cc] sm:$0xff]
    %v1221 = vld [vmem:[#allocation2 + $0x9d4] sm:$0xf]
    %v1222 = vld [vmem:[#allocation2 + $0x9d8] sm:$0xff]
    %v1223 = vld [vmem:[#allocation2 + $0x9e0] sm:$0xff]
    %v1224 = vld [vmem:[#allocation2 + $0x9e8] sm:$0xff]
    %v1225 = vld [vmem:[#allocation2 + $0x9f0] sm:$0xf]
    %v1226 = vld [vmem:[#allocation2 + $0x9f4] sm:$0xff]
    %v1227 = vld [vmem:[#allocation2 + $0x9fc] sm:$0xff]
    %v1228 = vld [vmem:[#allocation2 + $0xa04] sm:$0xff]
    %v1229 = vld [vmem:[#allocation2 + $0xa0c] sm:$0xf]
    %v1230 = vld [vmem:[#allocation2 + $0xa10] sm:$0xff]
    %v1231 = vld [vmem:[#allocation2 + $0xa18] sm:$0xff]
    %v1232 = vld [vmem:[#allocation2 + $0xa20] sm:$0xff]
    %v1233 = vld [vmem:[#allocation2 + $0xa28] sm:$0xf]
    %v1234 = vld [vmem:[#allocation2 + $0xa2c] sm:$0xff]
    %v1235 = vld [vmem:[#allocation2 + $0xa34] sm:$0xff]
    %v1236 = vld [vmem:[#allocation2 + $0xa3c] sm:$0xff]
    %v1237 = vld [vmem:[#allocation2 + $0xa44] sm:$0xf]
    %v1238 = vld [vmem:[#allocation2 + $0xa48] sm:$0xff]
    %v1239 = vld [vmem:[#allocation2 + $0xa50] sm:$0xff]
    %v1240 = vld [vmem:[#allocation2 + $0xa58] sm:$0xff]
    %v1241 = vld [vmem:[#allocation2 + $0xa60] sm:$0xf]
    %v1242 = vld [vmem:[#allocation2 + $0xa64] sm:$0xff]
    %v1243 = vld [vmem:[#allocation2 + $0xa6c] sm:$0xff]
    %v1244 = vld [vmem:[#allocation2 + $0xa74] sm:$0xff]
    %v1245 = vld [vmem:[#allocation2 + $0xa7c] sm:$0xf]
    %v1246 = vld [vmem:[#allocation2 + $0xa80] sm:$0xff]
    %v1247 = vld [vmem:[#allocation2 + $0xa88] sm:$0xff]
    %v1248 = vld [vmem:[#allocation2 + $0xa90] sm:$0xff]
    %v1249 = vld [vmem:[#allocation2 + $0xa98] sm:$0xf]
    %v1250 = vld [vmem:[#allocation2 + $0xa9c] sm:$0xff]
    %v1251 = vld [vmem:[#allocation2 + $0xaa4] sm:$0xff]
    %v1252 = vld [vmem:[#allocation2 + $0xaac] sm:$0xff]
    %v1253 = vld [vmem:[#allocation2 + $0xab4] sm:$0xf]
    %v1646 = vunpack.c.l.b16 %v862
    %v1647 = vunpack.c.h.b16 %v862
    %v1648 = vunpack.c.l.b16 %v863
    %v1649 = vunpack.c.h.b16 %v863
    %v1650 = vunpack.c.l.b16 %v864
    %v1651 = vunpack.c.h.b16 %v864
    %v1652 = vunpack.c.l.b16 %v865
    %v1653 = vunpack.c.l.b16 %v866
    %v1654 = vunpack.c.h.b16 %v866
    %v1655 = vunpack.c.l.b16 %v867
    %v1656 = vunpack.c.h.b16 %v867
    %v1657 = vunpack.c.l.b16 %v868
    %v1658 = vunpack.c.h.b16 %v868
    %v1659 = vunpack.c.l.b16 %v869
    %v1660 = vunpack.c.l.b16 %v870
    %v1661 = vunpack.c.h.b16 %v870
    %v1662 = vunpack.c.l.b16 %v871
    %v1663 = vunpack.c.h.b16 %v871
    %v1664 = vunpack.c.l.b16 %v872
    %v1665 = vunpack.c.h.b16 %v872
    %v1666 = vunpack.c.l.b16 %v873
    %v1667 = vunpack.c.l.b16 %v874
    %v1668 = vunpack.c.h.b16 %v874
    %v1669 = vunpack.c.l.b16 %v875
    %v1670 = vunpack.c.h.b16 %v875
    %v1671 = vunpack.c.l.b16 %v876
    %v1672 = vunpack.c.h.b16 %v876
    %v1673 = vunpack.c.l.b16 %v877
    %v1674 = vunpack.c.l.b16 %v878
    %v1675 = vunpack.c.h.b16 %v878
    %v1676 = vunpack.c.l.b16 %v879
    %v1677 = vunpack.c.h.b16 %v879
    %v1678 = vunpack.c.l.b16 %v880
    %v1679 = vunpack.c.h.b16 %v880
    %v1680 = vunpack.c.l.b16 %v881
    %v1681 = vunpack.c.l.b16 %v882
    %v1682 = vunpack.c.h.b16 %v882
    %v1683 = vunpack.c.l.b16 %v883
    %v1684 = vunpack.c.h.b16 %v883
    %v1685 = vunpack.c.l.b16 %v884
    %v1686 = vunpack.c.h.b16 %v884
    %v1687 = vunpack.c.l.b16 %v885
    %v1688 = vunpack.c.l.b16 %v886
    %v1689 = vunpack.c.h.b16 %v886
    %v1690 = vunpack.c.l.b16 %v887
    %v1691 = vunpack.c.h.b16 %v887
    %v1692 = vunpack.c.l.b16 %v888
    %v1693 = vunpack.c.h.b16 %v888
    %v1694 = vunpack.c.l.b16 %v889
    %v1695 = vunpack.c.l.b16 %v890
    %v1696 = vunpack.c.h.b16 %v890
    %v1697 = vunpack.c.l.b16 %v891
    %v1698 = vunpack.c.h.b16 %v891
    %v1699 = vunpack.c.l.b16 %v892
    %v1700 = vunpack.c.h.b16 %v892
    %v1701 = vunpack.c.l.b16 %v893
    %v1702 = vunpack.c.l.b16 %v894
    %v1703 = vunpack.c.h.b16 %v894
    %v1704 = vunpack.c.l.b16 %v895
    %v1705 = vunpack.c.h.b16 %v895
    %v1706 = vunpack.c.l.b16 %v896
    %v1707 = vunpack.c.h.b16 %v896
    %v1708 = vunpack.c.l.b16 %v897
    %v1709 = vunpack.c.l.b16 %v898
    %v1710 = vunpack.c.h.b16 %v898
    %v1711 = vunpack.c.l.b16 %v899
    %v1712 = vunpack.c.h.b16 %v899
    %v1713 = vunpack.c.l.b16 %v900
    %v1714 = vunpack.c.h.b16 %v900
    %v1715 = vunpack.c.l.b16 %v901
    %v1716 = vunpack.c.l.b16 %v902
    %v1717 = vunpack.c.h.b16 %v902
    %v1718 = vunpack.c.l.b16 %v903
    %v1719 = vunpack.c.h.b16 %v903
    %v1720 = vunpack.c.l.b16 %v904
    %v1721 = vunpack.c.h.b16 %v904
    %v1722 = vunpack.c.l.b16 %v905
    %v1723 = vunpack.c.l.b16 %v906
    %v1724 = vunpack.c.h.b16 %v906
    %v1725 = vunpack.c.l.b16 %v907
    %v1726 = vunpack.c.h.b16 %v907
    %v1727 = vunpack.c.l.b16 %v908
    %v1728 = vunpack.c.h.b16 %v908
    %v1729 = vunpack.c.l.b16 %v909
    %v1730 = vunpack.c.l.b16 %v910
    %v1731 = vunpack.c.h.b16 %v910
    %v1732 = vunpack.c.l.b16 %v911
    %v1733 = vunpack.c.h.b16 %v911
    %v1734 = vunpack.c.l.b16 %v912
    %v1735 = vunpack.c.h.b16 %v912
    %v1736 = vunpack.c.l.b16 %v913
    %v1737 = vunpack.c.l.b16 %v914
    %v1738 = vunpack.c.h.b16 %v914
    %v1739 = vunpack.c.l.b16 %v915
    %v1740 = vunpack.c.h.b16 %v915
    %v1741 = vunpack.c.l.b16 %v916
    %v1742 = vunpack.c.h.b16 %v916
    %v1743 = vunpack.c.l.b16 %v917
    %v1744 = vunpack.c.l.b16 %v918
    %v1745 = vunpack.c.h.b16 %v918
    %v1746 = vunpack.c.l.b16 %v919
    %v1747 = vunpack.c.h.b16 %v919
    %v1748 = vunpack.c.l.b16 %v920
    %v1749 = vunpack.c.h.b16 %v920
    %v1750 = vunpack.c.l.b16 %v921
    %v1751 = vunpack.c.l.b16 %v922
    %v1752 = vunpack.c.h.b16 %v922
    %v1753 = vunpack.c.l.b16 %v923
    %v1754 = vunpack.c.h.b16 %v923
    %v1755 = vunpack.c.l.b16 %v924
    %v1756 = vunpack.c.h.b16 %v924
    %v1757 = vunpack.c.l.b16 %v925
    %v1758 = vunpack.c.l.b16 %v926
    %v1759 = vunpack.c.h.b16 %v926
    %v1760 = vunpack.c.l.b16 %v927
    %v1761 = vunpack.c.h.b16 %v927
    %v1762 = vunpack.c.l.b16 %v928
    %v1763 = vunpack.c.h.b16 %v928
    %v1764 = vunpack.c.l.b16 %v929
    %v1765 = vunpack.c.l.b16 %v930
    %v1766 = vunpack.c.h.b16 %v930
    %v1767 = vunpack.c.l.b16 %v931
    %v1768 = vunpack.c.h.b16 %v931
    %v1769 = vunpack.c.l.b16 %v932
    %v1770 = vunpack.c.h.b16 %v932
    %v1771 = vunpack.c.l.b16 %v933
    %v1772 = vunpack.c.l.b16 %v934
    %v1773 = vunpack.c.h.b16 %v934
    %v1774 = vunpack.c.l.b16 %v935
    %v1775 = vunpack.c.h.b16 %v935
    %v1776 = vunpack.c.l.b16 %v936
    %v1777 = vunpack.c.h.b16 %v936
    %v1778 = vunpack.c.l.b16 %v937
    %v1779 = vunpack.c.l.b16 %v938
    %v1780 = vunpack.c.h.b16 %v938
    %v1781 = vunpack.c.l.b16 %v939
    %v1782 = vunpack.c.h.b16 %v939
    %v1783 = vunpack.c.l.b16 %v940
    %v1784 = vunpack.c.h.b16 %v940
    %v1785 = vunpack.c.l.b16 %v941
    %v1786 = vunpack.c.l.b16 %v942
    %v1787 = vunpack.c.h.b16 %v942
    %v1788 = vunpack.c.l.b16 %v943
    %v1789 = vunpack.c.h.b16 %v943
    %v1790 = vunpack.c.l.b16 %v944
    %v1791 = vunpack.c.h.b16 %v944
    %v1792 = vunpack.c.l.b16 %v945
    %v1793 = vunpack.c.l.b16 %v946
    %v1794 = vunpack.c.h.b16 %v946
    %v1795 = vunpack.c.l.b16 %v947
    %v1796 = vunpack.c.h.b16 %v947
    %v1797 = vunpack.c.l.b16 %v948
    %v1798 = vunpack.c.h.b16 %v948
    %v1799 = vunpack.c.l.b16 %v949
    %v1800 = vunpack.c.l.b16 %v950
    %v1801 = vunpack.c.h.b16 %v950
    %v1802 = vunpack.c.l.b16 %v951
    %v1803 = vunpack.c.h.b16 %v951
    %v1804 = vunpack.c.l.b16 %v952
    %v1805 = vunpack.c.h.b16 %v952
    %v1806 = vunpack.c.l.b16 %v953
    %v1807 = vunpack.c.l.b16 %v954
    %v1808 = vunpack.c.h.b16 %v954
    %v1809 = vunpack.c.l.b16 %v955
    %v1810 = vunpack.c.h.b16 %v955
    %v1811 = vunpack.c.l.b16 %v956
    %v1812 = vunpack.c.h.b16 %v956
    %v1813 = vunpack.c.l.b16 %v957
    %v1814 = vunpack.c.l.b16 %v958
    %v1815 = vunpack.c.h.b16 %v958
    %v1816 = vunpack.c.l.b16 %v959
    %v1817 = vunpack.c.h.b16 %v959
    %v1818 = vunpack.c.l.b16 %v960
    %v1819 = vunpack.c.h.b16 %v960
    %v1820 = vunpack.c.l.b16 %v961
    %v1821 = vunpack.c.l.b16 %v962
    %v1822 = vunpack.c.h.b16 %v962
    %v1823 = vunpack.c.l.b16 %v963
    %v1824 = vunpack.c.h.b16 %v963
    %v1825 = vunpack.c.l.b16 %v964
    %v1826 = vunpack.c.h.b16 %v964
    %v1827 = vunpack.c.l.b16 %v965
    %v1828 = vunpack.c.l.b16 %v966
    %v1829 = vunpack.c.h.b16 %v966
    %v1830 = vunpack.c.l.b16 %v967
    %v1831 = vunpack.c.h.b16 %v967
    %v1832 = vunpack.c.l.b16 %v968
    %v1833 = vunpack.c.h.b16 %v968
    %v1834 = vunpack.c.l.b16 %v969
    %v1835 = vunpack.c.l.b16 %v970
    %v1836 = vunpack.c.h.b16 %v970
    %v1837 = vunpack.c.l.b16 %v971
    %v1838 = vunpack.c.h.b16 %v971
    %v1839 = vunpack.c.l.b16 %v972
    %v1840 = vunpack.c.h.b16 %v972
    %v1841 = vunpack.c.l.b16 %v973
    %v1842 = vunpack.c.l.b16 %v974
    %v1843 = vunpack.c.h.b16 %v974
    %v1844 = vunpack.c.l.b16 %v975
    %v1845 = vunpack.c.h.b16 %v975
    %v1846 = vunpack.c.l.b16 %v976
    %v1847 = vunpack.c.h.b16 %v976
    %v1848 = vunpack.c.l.b16 %v977
    %v1849 = vunpack.c.l.b16 %v978
    %v1850 = vunpack.c.h.b16 %v978
    %v1851 = vunpack.c.l.b16 %v979
    %v1852 = vunpack.c.h.b16 %v979
    %v1853 = vunpack.c.l.b16 %v980
    %v1854 = vunpack.c.h.b16 %v980
    %v1855 = vunpack.c.l.b16 %v981
    %v1856 = vunpack.c.l.b16 %v982
    %v1857 = vunpack.c.h.b16 %v982
    %v1858 = vunpack.c.l.b16 %v983
    %v1859 = vunpack.c.h.b16 %v983
    %v1860 = vunpack.c.l.b16 %v984
    %v1861 = vunpack.c.h.b16 %v984
    %v1862 = vunpack.c.l.b16 %v985
    %v1863 = vunpack.c.l.b16 %v986
    %v1864 = vunpack.c.h.b16 %v986
    %v1865 = vunpack.c.l.b16 %v987
    %v1866 = vunpack.c.h.b16 %v987
    %v1867 = vunpack.c.l.b16 %v988
    %v1868 = vunpack.c.h.b16 %v988
    %v1869 = vunpack.c.l.b16 %v989
    %v1870 = vunpack.c.l.b16 %v990
    %v1871 = vunpack.c.h.b16 %v990
    %v1872 = vunpack.c.l.b16 %v991
    %v1873 = vunpack.c.h.b16 %v991
    %v1874 = vunpack.c.l.b16 %v992
    %v1875 = vunpack.c.h.b16 %v992
    %v1876 = vunpack.c.l.b16 %v993
    %v1877 = vunpack.c.l.b16 %v994
    %v1878 = vunpack.c.h.b16 %v994
    %v1879 = vunpack.c.l.b16 %v995
    %v1880 = vunpack.c.h.b16 %v995
    %v1881 = vunpack.c.l.b16 %v996
    %v1882 = vunpack.c.h.b16 %v996
    %v1883 = vunpack.c.l.b16 %v997
    %v1884 = vunpack.c.l.b16 %v998
    %v1885 = vunpack.c.h.b16 %v998
    %v1886 = vunpack.c.l.b16 %v999
    %v1887 = vunpack.c.h.b16 %v999
    %v1888 = vunpack.c.l.b16 %v1000
    %v1889 = vunpack.c.h.b16 %v1000
    %v1890 = vunpack.c.l.b16 %v1001
    %v1891 = vunpack.c.l.b16 %v1002
    %v1892 = vunpack.c.h.b16 %v1002
    %v1893 = vunpack.c.l.b16 %v1003
    %v1894 = vunpack.c.h.b16 %v1003
    %v1895 = vunpack.c.l.b16 %v1004
    %v1896 = vunpack.c.h.b16 %v1004
    %v1897 = vunpack.c.l.b16 %v1005
    %v1898 = vunpack.c.l.b16 %v1006
    %v1899 = vunpack.c.h.b16 %v1006
    %v1900 = vunpack.c.l.b16 %v1007
    %v1901 = vunpack.c.h.b16 %v1007
    %v1902 = vunpack.c.l.b16 %v1008
    %v1903 = vunpack.c.h.b16 %v1008
    %v1904 = vunpack.c.l.b16 %v1009
    %v1905 = vunpack.c.l.b16 %v1010
    %v1906 = vunpack.c.h.b16 %v1010
    %v1907 = vunpack.c.l.b16 %v1011
    %v1908 = vunpack.c.h.b16 %v1011
    %v1909 = vunpack.c.l.b16 %v1012
    %v1910 = vunpack.c.h.b16 %v1012
    %v1911 = vunpack.c.l.b16 %v1013
    %v1912 = vunpack.c.l.b16 %v1014
    %v1913 = vunpack.c.h.b16 %v1014
    %v1914 = vunpack.c.l.b16 %v1015
    %v1915 = vunpack.c.h.b16 %v1015
    %v1916 = vunpack.c.l.b16 %v1016
    %v1917 = vunpack.c.h.b16 %v1016
    %v1918 = vunpack.c.l.b16 %v1017
    %v1919 = vunpack.c.l.b16 %v1018
    %v1920 = vunpack.c.h.b16 %v1018
    %v1921 = vunpack.c.l.b16 %v1019
    %v1922 = vunpack.c.h.b16 %v1019
    %v1923 = vunpack.c.l.b16 %v1020
    %v1924 = vunpack.c.h.b16 %v1020
    %v1925 = vunpack.c.l.b16 %v1021
    %v1926 = vunpack.c.l.b16 %v1022
    %v1927 = vunpack.c.h.b16 %v1022
    %v1928 = vunpack.c.l.b16 %v1023
    %v1929 = vunpack.c.h.b16 %v1023
    %v1930 = vunpack.c.l.b16 %v1024
    %v1931 = vunpack.c.h.b16 %v1024
    %v1932 = vunpack.c.l.b16 %v1025
    %v1933 = vunpack.c.l.b16 %v1026
    %v1934 = vunpack.c.h.b16 %v1026
    %v1935 = vunpack.c.l.b16 %v1027
    %v1936 = vunpack.c.h.b16 %v1027
    %v1937 = vunpack.c.l.b16 %v1028
    %v1938 = vunpack.c.h.b16 %v1028
    %v1939 = vunpack.c.l.b16 %v1029
    %v1940 = vunpack.c.l.b16 %v1030
    %v1941 = vunpack.c.h.b16 %v1030
    %v1942 = vunpack.c.l.b16 %v1031
    %v1943 = vunpack.c.h.b16 %v1031
    %v1944 = vunpack.c.l.b16 %v1032
    %v1945 = vunpack.c.h.b16 %v1032
    %v1946 = vunpack.c.l.b16 %v1033
    %v1947 = vunpack.c.l.b16 %v1034
    %v1948 = vunpack.c.h.b16 %v1034
    %v1949 = vunpack.c.l.b16 %v1035
    %v1950 = vunpack.c.h.b16 %v1035
    %v1951 = vunpack.c.l.b16 %v1036
    %v1952 = vunpack.c.h.b16 %v1036
    %v1953 = vunpack.c.l.b16 %v1037
    %v1954 = vunpack.c.l.b16 %v1038
    %v1955 = vunpack.c.h.b16 %v1038
    %v1956 = vunpack.c.l.b16 %v1039
    %v1957 = vunpack.c.h.b16 %v1039
    %v1958 = vunpack.c.l.b16 %v1040
    %v1959 = vunpack.c.h.b16 %v1040
    %v1960 = vunpack.c.l.b16 %v1041
    %v1961 = vunpack.c.l.b16 %v1042
    %v1962 = vunpack.c.h.b16 %v1042
    %v1963 = vunpack.c.l.b16 %v1043
    %v1964 = vunpack.c.h.b16 %v1043
    %v1965 = vunpack.c.l.b16 %v1044
    %v1966 = vunpack.c.h.b16 %v1044
    %v1967 = vunpack.c.l.b16 %v1045
    %v1968 = vunpack.c.l.b16 %v1046
    %v1969 = vunpack.c.h.b16 %v1046
    %v1970 = vunpack.c.l.b16 %v1047
    %v1971 = vunpack.c.h.b16 %v1047
    %v1972 = vunpack.c.l.b16 %v1048
    %v1973 = vunpack.c.h.b16 %v1048
    %v1974 = vunpack.c.l.b16 %v1049
    %v1975 = vunpack.c.l.b16 %v1050
    %v1976 = vunpack.c.h.b16 %v1050
    %v1977 = vunpack.c.l.b16 %v1051
    %v1978 = vunpack.c.h.b16 %v1051
    %v1979 = vunpack.c.l.b16 %v1052
    %v1980 = vunpack.c.h.b16 %v1052
    %v1981 = vunpack.c.l.b16 %v1053
    %v1982 = vunpack.c.l.b16 %v1054
    %v1983 = vunpack.c.h.b16 %v1054
    %v1984 = vunpack.c.l.b16 %v1055
    %v1985 = vunpack.c.h.b16 %v1055
    %v1986 = vunpack.c.l.b16 %v1056
    %v1987 = vunpack.c.h.b16 %v1056
    %v1988 = vunpack.c.l.b16 %v1057
    %v1989 = vunpack.c.l.b16 %v1058
    %v1990 = vunpack.c.h.b16 %v1058
    %v1991 = vunpack.c.l.b16 %v1059
    %v1992 = vunpack.c.h.b16 %v1059
    %v1993 = vunpack.c.l.b16 %v1060
    %v1994 = vunpack.c.h.b16 %v1060
    %v1995 = vunpack.c.l.b16 %v1061
    %v1996 = vunpack.c.l.b16 %v1062
    %v1997 = vunpack.c.h.b16 %v1062
    %v1998 = vunpack.c.l.b16 %v1063
    %v1999 = vunpack.c.h.b16 %v1063
    %v2000 = vunpack.c.l.b16 %v1064
    %v2001 = vunpack.c.h.b16 %v1064
    %v2002 = vunpack.c.l.b16 %v1065
    %v2003 = vunpack.c.l.b16 %v1066
    %v2004 = vunpack.c.h.b16 %v1066
    %v2005 = vunpack.c.l.b16 %v1067
    %v2006 = vunpack.c.h.b16 %v1067
    %v2007 = vunpack.c.l.b16 %v1068
    %v2008 = vunpack.c.h.b16 %v1068
    %v2009 = vunpack.c.l.b16 %v1069
    %v2010 = vunpack.c.l.b16 %v1070
    %v2011 = vunpack.c.h.b16 %v1070
    %v2012 = vunpack.c.l.b16 %v1071
    %v2013 = vunpack.c.h.b16 %v1071
    %v2014 = vunpack.c.l.b16 %v1072
    %v2015 = vunpack.c.h.b16 %v1072
    %v2016 = vunpack.c.l.b16 %v1073
    %v2017 = vunpack.c.l.b16 %v1074
    %v2018 = vunpack.c.h.b16 %v1074
    %v2019 = vunpack.c.l.b16 %v1075
    %v2020 = vunpack.c.h.b16 %v1075
    %v2021 = vunpack.c.l.b16 %v1076
    %v2022 = vunpack.c.h.b16 %v1076
    %v2023 = vunpack.c.l.b16 %v1077
    %v2024 = vunpack.c.l.b16 %v1078
    %v2025 = vunpack.c.h.b16 %v1078
    %v2026 = vunpack.c.l.b16 %v1079
    %v2027 = vunpack.c.h.b16 %v1079
    %v2028 = vunpack.c.l.b16 %v1080
    %v2029 = vunpack.c.h.b16 %v1080
    %v2030 = vunpack.c.l.b16 %v1081
    %v2031 = vunpack.c.l.b16 %v1082
    %v2032 = vunpack.c.h.b16 %v1082
    %v2033 = vunpack.c.l.b16 %v1083
    %v2034 = vunpack.c.h.b16 %v1083
    %v2035 = vunpack.c.l.b16 %v1084
    %v2036 = vunpack.c.h.b16 %v1084
    %v2037 = vunpack.c.l.b16 %v1085
    %v2038 = vunpack.c.l.b16 %v1086
    %v2039 = vunpack.c.h.b16 %v1086
    %v2040 = vunpack.c.l.b16 %v1087
    %v2041 = vunpack.c.h.b16 %v1087
    %v2042 = vunpack.c.l.b16 %v1088
    %v2043 = vunpack.c.h.b16 %v1088
    %v2044 = vunpack.c.l.b16 %v1089
    %v2045 = vunpack.c.l.b16 %v1090
    %v2046 = vunpack.c.h.b16 %v1090
    %v2047 = vunpack.c.l.b16 %v1091
    %v2048 = vunpack.c.h.b16 %v1091
    %v2049 = vunpack.c.l.b16 %v1092
    %v2050 = vunpack.c.h.b16 %v1092
    %v2051 = vunpack.c.l.b16 %v1093
    %v2052 = vunpack.c.l.b16 %v1094
    %v2053 = vunpack.c.h.b16 %v1094
    %v2054 = vunpack.c.l.b16 %v1095
    %v2055 = vunpack.c.h.b16 %v1095
    %v2056 = vunpack.c.l.b16 %v1096
    %v2057 = vunpack.c.h.b16 %v1096
    %v2058 = vunpack.c.l.b16 %v1097
    %v2059 = vunpack.c.l.b16 %v1098
    %v2060 = vunpack.c.h.b16 %v1098
    %v2061 = vunpack.c.l.b16 %v1099
    %v2062 = vunpack.c.h.b16 %v1099
    %v2063 = vunpack.c.l.b16 %v1100
    %v2064 = vunpack.c.h.b16 %v1100
    %v2065 = vunpack.c.l.b16 %v1101
    %v2066 = vunpack.c.l.b16 %v1102
    %v2067 = vunpack.c.h.b16 %v1102
    %v2068 = vunpack.c.l.b16 %v1103
    %v2069 = vunpack.c.h.b16 %v1103
    %v2070 = vunpack.c.l.b16 %v1104
    %v2071 = vunpack.c.h.b16 %v1104
    %v2072 = vunpack.c.l.b16 %v1105
    %v2073 = vunpack.c.l.b16 %v1106
    %v2074 = vunpack.c.h.b16 %v1106
    %v2075 = vunpack.c.l.b16 %v1107
    %v2076 = vunpack.c.h.b16 %v1107
    %v2077 = vunpack.c.l.b16 %v1108
    %v2078 = vunpack.c.h.b16 %v1108
    %v2079 = vunpack.c.l.b16 %v1109
    %v2080 = vunpack.c.l.b16 %v1110
    %v2081 = vunpack.c.h.b16 %v1110
    %v2082 = vunpack.c.l.b16 %v1111
    %v2083 = vunpack.c.h.b16 %v1111
    %v2084 = vunpack.c.l.b16 %v1112
    %v2085 = vunpack.c.h.b16 %v1112
    %v2086 = vunpack.c.l.b16 %v1113
    %v2087 = vunpack.c.l.b16 %v1114
    %v2088 = vunpack.c.h.b16 %v1114
    %v2089 = vunpack.c.l.b16 %v1115
    %v2090 = vunpack.c.h.b16 %v1115
    %v2091 = vunpack.c.l.b16 %v1116
    %v2092 = vunpack.c.h.b16 %v1116
    %v2093 = vunpack.c.l.b16 %v1117
    %v2094 = vunpack.c.l.b16 %v1118
    %v2095 = vunpack.c.h.b16 %v1118
    %v2096 = vunpack.c.l.b16 %v1119
    %v2097 = vunpack.c.h.b16 %v1119
    %v2098 = vunpack.c.l.b16 %v1120
    %v2099 = vunpack.c.h.b16 %v1120
    %v2100 = vunpack.c.l.b16 %v1121
    %v2101 = vunpack.c.l.b16 %v1122
    %v2102 = vunpack.c.h.b16 %v1122
    %v2103 = vunpack.c.l.b16 %v1123
    %v2104 = vunpack.c.h.b16 %v1123
    %v2105 = vunpack.c.l.b16 %v1124
    %v2106 = vunpack.c.h.b16 %v1124
    %v2107 = vunpack.c.l.b16 %v1125
    %v2108 = vunpack.c.l.b16 %v1126
    %v2109 = vunpack.c.h.b16 %v1126
    %v2110 = vunpack.c.l.b16 %v1127
    %v2111 = vunpack.c.h.b16 %v1127
    %v2112 = vunpack.c.l.b16 %v1128
    %v2113 = vunpack.c.h.b16 %v1128
    %v2114 = vunpack.c.l.b16 %v1129
    %v2115 = vunpack.c.l.b16 %v1130
    %v2116 = vunpack.c.h.b16 %v1130
    %v2117 = vunpack.c.l.b16 %v1131
    %v2118 = vunpack.c.h.b16 %v1131
    %v2119 = vunpack.c.l.b16 %v1132
    %v2120 = vunpack.c.h.b16 %v1132
    %v2121 = vunpack.c.l.b16 %v1133
    %v2122 = vunpack.c.l.b16 %v1134
    %v2123 = vunpack.c.h.b16 %v1134
    %v2124 = vunpack.c.l.b16 %v1135
    %v2125 = vunpack.c.h.b16 %v1135
    %v2126 = vunpack.c.l.b16 %v1136
    %v2127 = vunpack.c.h.b16 %v1136
    %v2128 = vunpack.c.l.b16 %v1137
    %v2129 = vunpack.c.l.b16 %v1138
    %v2130 = vunpack.c.h.b16 %v1138
    %v2131 = vunpack.c.l.b16 %v1139
    %v2132 = vunpack.c.h.b16 %v1139
    %v2133 = vunpack.c.l.b16 %v1140
    %v2134 = vunpack.c.h.b16 %v1140
    %v2135 = vunpack.c.l.b16 %v1141
    %v2136 = vunpack.c.l.b16 %v1142
    %v2137 = vunpack.c.h.b16 %v1142
    %v2138 = vunpack.c.l.b16 %v1143
    %v2139 = vunpack.c.h.b16 %v1143
    %v2140 = vunpack.c.l.b16 %v1144
    %v2141 = vunpack.c.h.b16 %v1144
    %v2142 = vunpack.c.l.b16 %v1145
    %v2143 = vunpack.c.l.b16 %v1146
    %v2144 = vunpack.c.h.b16 %v1146
    %v2145 = vunpack.c.l.b16 %v1147
    %v2146 = vunpack.c.h.b16 %v1147
    %v2147 = vunpack.c.l.b16 %v1148
    %v2148 = vunpack.c.h.b16 %v1148
    %v2149 = vunpack.c.l.b16 %v1149
    %v2150 = vunpack.c.l.b16 %v1150
    %v2151 = vunpack.c.h.b16 %v1150
    %v2152 = vunpack.c.l.b16 %v1151
    %v2153 = vunpack.c.h.b16 %v1151
    %v2154 = vunpack.c.l.b16 %v1152
    %v2155 = vunpack.c.h.b16 %v1152
    %v2156 = vunpack.c.l.b16 %v1153
    %v2157 = vunpack.c.l.b16 %v1154
    %v2158 = vunpack.c.h.b16 %v1154
    %v2159 = vunpack.c.l.b16 %v1155
    %v2160 = vunpack.c.h.b16 %v1155
    %v2161 = vunpack.c.l.b16 %v1156
    %v2162 = vunpack.c.h.b16 %v1156
    %v2163 = vunpack.c.l.b16 %v1157
    %v2164 = vunpack.c.l.b16 %v1158
    %v2165 = vunpack.c.h.b16 %v1158
    %v2166 = vunpack.c.l.b16 %v1159
    %v2167 = vunpack.c.h.b16 %v1159
    %v2168 = vunpack.c.l.b16 %v1160
    %v2169 = vunpack.c.h.b16 %v1160
    %v2170 = vunpack.c.l.b16 %v1161
    %v2171 = vunpack.c.l.b16 %v1162
    %v2172 = vunpack.c.h.b16 %v1162
    %v2173 = vunpack.c.l.b16 %v1163
    %v2174 = vunpack.c.h.b16 %v1163
    %v2175 = vunpack.c.l.b16 %v1164
    %v2176 = vunpack.c.h.b16 %v1164
    %v2177 = vunpack.c.l.b16 %v1165
    %v2178 = vunpack.c.l.b16 %v1166
    %v2179 = vunpack.c.h.b16 %v1166
    %v2180 = vunpack.c.l.b16 %v1167
    %v2181 = vunpack.c.h.b16 %v1167
    %v2182 = vunpack.c.l.b16 %v1168
    %v2183 = vunpack.c.h.b16 %v1168
    %v2184 = vunpack.c.l.b16 %v1169
    %v2185 = vunpack.c.l.b16 %v1170
    %v2186 = vunpack.c.h.b16 %v1170
    %v2187 = vunpack.c.l.b16 %v1171
    %v2188 = vunpack.c.h.b16 %v1171
    %v2189 = vunpack.c.l.b16 %v1172
    %v2190 = vunpack.c.h.b16 %v1172
    %v2191 = vunpack.c.l.b16 %v1173
    %v2192 = vunpack.c.l.b16 %v1174
    %v2193 = vunpack.c.h.b16 %v1174
    %v2194 = vunpack.c.l.b16 %v1175
    %v2195 = vunpack.c.h.b16 %v1175
    %v2196 = vunpack.c.l.b16 %v1176
    %v2197 = vunpack.c.h.b16 %v1176
    %v2198 = vunpack.c.l.b16 %v1177
    %v2199 = vunpack.c.l.b16 %v1178
    %v2200 = vunpack.c.h.b16 %v1178
    %v2201 = vunpack.c.l.b16 %v1179
    %v2202 = vunpack.c.h.b16 %v1179
    %v2203 = vunpack.c.l.b16 %v1180
    %v2204 = vunpack.c.h.b16 %v1180
    %v2205 = vunpack.c.l.b16 %v1181
    %v2206 = vunpack.c.l.b16 %v1182
    %v2207 = vunpack.c.h.b16 %v1182
    %v2208 = vunpack.c.l.b16 %v1183
    %v2209 = vunpack.c.h.b16 %v1183
    %v2210 = vunpack.c.l.b16 %v1184
    %v2211 = vunpack.c.h.b16 %v1184
    %v2212 = vunpack.c.l.b16 %v1185
    %v2213 = vunpack.c.l.b16 %v1186
    %v2214 = vunpack.c.h.b16 %v1186
    %v2215 = vunpack.c.l.b16 %v1187
    %v2216 = vunpack.c.h.b16 %v1187
    %v2217 = vunpack.c.l.b16 %v1188
    %v2218 = vunpack.c.h.b16 %v1188
    %v2219 = vunpack.c.l.b16 %v1189
    %v2220 = vunpack.c.l.b16 %v1190
    %v2221 = vunpack.c.h.b16 %v1190
    %v2222 = vunpack.c.l.b16 %v1191
    %v2223 = vunpack.c.h.b16 %v1191
    %v2224 = vunpack.c.l.b16 %v1192
    %v2225 = vunpack.c.h.b16 %v1192
    %v2226 = vunpack.c.l.b16 %v1193
    %v2227 = vunpack.c.l.b16 %v1194
    %v2228 = vunpack.c.h.b16 %v1194
    %v2229 = vunpack.c.l.b16 %v1195
    %v2230 = vunpack.c.h.b16 %v1195
    %v2231 = vunpack.c.l.b16 %v1196
    %v2232 = vunpack.c.h.b16 %v1196
    %v2233 = vunpack.c.l.b16 %v1197
    %v2234 = vunpack.c.l.b16 %v1198
    %v2235 = vunpack.c.h.b16 %v1198
    %v2236 = vunpack.c.l.b16 %v1199
    %v2237 = vunpack.c.h.b16 %v1199
    %v2238 = vunpack.c.l.b16 %v1200
    %v2239 = vunpack.c.h.b16 %v1200
    %v2240 = vunpack.c.l.b16 %v1201
    %v2241 = vunpack.c.l.b16 %v1202
    %v2242 = vunpack.c.h.b16 %v1202
    %v2243 = vunpack.c.l.b16 %v1203
    %v2244 = vunpack.c.h.b16 %v1203
    %v2245 = vunpack.c.l.b16 %v1204
    %v2246 = vunpack.c.h.b16 %v1204
    %v2247 = vunpack.c.l.b16 %v1205
    %v2248 = vunpack.c.l.b16 %v1206
    %v2249 = vunpack.c.h.b16 %v1206
    %v2250 = vunpack.c.l.b16 %v1207
    %v2251 = vunpack.c.h.b16 %v1207
    %v2252 = vunpack.c.l.b16 %v1208
    %v2253 = vunpack.c.h.b16 %v1208
    %v2254 = vunpack.c.l.b16 %v1209
    %v2255 = vunpack.c.l.b16 %v1210
    %v2256 = vunpack.c.h.b16 %v1210
    %v2257 = vunpack.c.l.b16 %v1211
    %v2258 = vunpack.c.h.b16 %v1211
    %v2259 = vunpack.c.l.b16 %v1212
    %v2260 = vunpack.c.h.b16 %v1212
    %v2261 = vunpack.c.l.b16 %v1213
    %v2262 = vunpack.c.l.b16 %v1214
    %v2263 = vunpack.c.h.b16 %v1214
    %v2264 = vunpack.c.l.b16 %v1215
    %v2265 = vunpack.c.h.b16 %v1215
    %v2266 = vunpack.c.l.b16 %v1216
    %v2267 = vunpack.c.h.b16 %v1216
    %v2268 = vunpack.c.l.b16 %v1217
    %v2269 = vunpack.c.l.b16 %v1218
    %v2270 = vunpack.c.h.b16 %v1218
    %v2271 = vunpack.c.l.b16 %v1219
    %v2272 = vunpack.c.h.b16 %v1219
    %v2273 = vunpack.c.l.b16 %v1220
    %v2274 = vunpack.c.h.b16 %v1220
    %v2275 = vunpack.c.l.b16 %v1221
    %v2276 = vunpack.c.l.b16 %v1222
    %v2277 = vunpack.c.h.b16 %v1222
    %v2278 = vunpack.c.l.b16 %v1223
    %v2279 = vunpack.c.h.b16 %v1223
    %v2280 = vunpack.c.l.b16 %v1224
    %v2281 = vunpack.c.h.b16 %v1224
    %v2282 = vunpack.c.l.b16 %v1225
    %v2283 = vunpack.c.l.b16 %v1226
    %v2284 = vunpack.c.h.b16 %v1226
    %v2285 = vunpack.c.l.b16 %v1227
    %v2286 = vunpack.c.h.b16 %v1227
    %v2287 = vunpack.c.l.b16 %v1228
    %v2288 = vunpack.c.h.b16 %v1228
    %v2289 = vunpack.c.l.b16 %v1229
    %v2290 = vunpack.c.l.b16 %v1230
    %v2291 = vunpack.c.h.b16 %v1230
    %v2292 = vunpack.c.l.b16 %v1231
    %v2293 = vunpack.c.h.b16 %v1231
    %v2294 = vunpack.c.l.b16 %v1232
    %v2295 = vunpack.c.h.b16 %v1232
    %v2296 = vunpack.c.l.b16 %v1233
    %v2297 = vunpack.c.l.b16 %v1234
    %v2298 = vunpack.c.h.b16 %v1234
    %v2299 = vunpack.c.l.b16 %v1235
    %v2300 = vunpack.c.h.b16 %v1235
    %v2301 = vunpack.c.l.b16 %v1236
    %v2302 = vunpack.c.h.b16 %v1236
    %v2303 = vunpack.c.l.b16 %v1237
    %v2304 = vunpack.c.l.b16 %v1238
    %v2305 = vunpack.c.h.b16 %v1238
    %v2306 = vunpack.c.l.b16 %v1239
    %v2307 = vunpack.c.h.b16 %v1239
    %v2308 = vunpack.c.l.b16 %v1240
    %v2309 = vunpack.c.h.b16 %v1240
    %v2310 = vunpack.c.l.b16 %v1241
    %v2311 = vunpack.c.l.b16 %v1242
    %v2312 = vunpack.c.h.b16 %v1242
    %v2313 = vunpack.c.l.b16 %v1243
    %v2314 = vunpack.c.h.b16 %v1243
    %v2315 = vunpack.c.l.b16 %v1244
    %v2316 = vunpack.c.h.b16 %v1244
    %v2317 = vunpack.c.l.b16 %v1245
    %v2318 = vunpack.c.l.b16 %v1246
    %v2319 = vunpack.c.h.b16 %v1246
    %v2320 = vunpack.c.l.b16 %v1247
    %v2321 = vunpack.c.h.b16 %v1247
    %v2322 = vunpack.c.l.b16 %v1248
    %v2323 = vunpack.c.h.b16 %v1248
    %v2324 = vunpack.c.l.b16 %v1249
    %v2325 = vunpack.c.l.b16 %v1250
    %v2326 = vunpack.c.h.b16 %v1250
    %v2327 = vunpack.c.l.b16 %v1251
    %v2328 = vunpack.c.h.b16 %v1251
    %v2329 = vunpack.c.l.b16 %v1252
    %v2330 = vunpack.c.h.b16 %v1252
    %v2331 = vunpack.c.l.b16 %v1253
    %v2332 = vpack.c.b16 %v1653, %v1646
    %v2333 = vpack.c.b16 %v1654, %v1647
    %v2334 = vpack.c.b16 %v1655, %v1648
    %v2335 = vpack.c.b16 %v1656, %v1649
    %v2336 = vpack.c.b16 %v1657, %v1650
    %v2337 = vpack.c.b16 %v1658, %v1651
    %v2338 = vpack.c.b16 %v1659, %v1652
    %v2339 = vpack.c.b16 %v1667, %v1660
    %v2340 = vpack.c.b16 %v1668, %v1661
    %v2341 = vpack.c.b16 %v1669, %v1662
    %v2342 = vpack.c.b16 %v1670, %v1663
    %v2343 = vpack.c.b16 %v1671, %v1664
    %v2344 = vpack.c.b16 %v1672, %v1665
    %v2345 = vpack.c.b16 %v1673, %v1666
    %v2346 = vpack.c.b16 %v1681, %v1674
    %v2347 = vpack.c.b16 %v1682, %v1675
    %v2348 = vpack.c.b16 %v1683, %v1676
    %v2349 = vpack.c.b16 %v1684, %v1677
    %v2350 = vpack.c.b16 %v1685, %v1678
    %v2351 = vpack.c.b16 %v1686, %v1679
    %v2352 = vpack.c.b16 %v1687, %v1680
    %v2353 = vpack.c.b16 %v1695, %v1688
    %v2354 = vpack.c.b16 %v1696, %v1689
    %v2355 = vpack.c.b16 %v1697, %v1690
    %v2356 = vpack.c.b16 %v1698, %v1691
    %v2357 = vpack.c.b16 %v1699, %v1692
    %v2358 = vpack.c.b16 %v1700, %v1693
    %v2359 = vpack.c.b16 %v1701, %v1694
    %v2360 = vpack.c.b16 %v1709, %v1702
    %v2361 = vpack.c.b16 %v1710, %v1703
    %v2362 = vpack.c.b16 %v1711, %v1704
    %v2363 = vpack.c.b16 %v1712, %v1705
    %v2364 = vpack.c.b16 %v1713, %v1706
    %v2365 = vpack.c.b16 %v1714, %v1707
    %v2366 = vpack.c.b16 %v1715, %v1708
    %v2367 = vpack.c.b16 %v1723, %v1716
    %v2368 = vpack.c.b16 %v1724, %v1717
    %v2369 = vpack.c.b16 %v1725, %v1718
    %v2370 = vpack.c.b16 %v1726, %v1719
    %v2371 = vpack.c.b16 %v1727, %v1720
    %v2372 = vpack.c.b16 %v1728, %v1721
    %v2373 = vpack.c.b16 %v1729, %v1722
    %v2374 = vpack.c.b16 %v1737, %v1730
    %v2375 = vpack.c.b16 %v1738, %v1731
    %v2376 = vpack.c.b16 %v1739, %v1732
    %v2377 = vpack.c.b16 %v1740, %v1733
    %v2378 = vpack.c.b16 %v1741, %v1734
    %v2379 = vpack.c.b16 %v1742, %v1735
    %v2380 = vpack.c.b16 %v1743, %v1736
    %v2381 = vpack.c.b16 %v1751, %v1744
    %v2382 = vpack.c.b16 %v1752, %v1745
    %v2383 = vpack.c.b16 %v1753, %v1746
    %v2384 = vpack.c.b16 %v1754, %v1747
    %v2385 = vpack.c.b16 %v1755, %v1748
    %v2386 = vpack.c.b16 %v1756, %v1749
    %v2387 = vpack.c.b16 %v1757, %v1750
    %v2388 = vpack.c.b16 %v1765, %v1758
    %v2389 = vpack.c.b16 %v1766, %v1759
    %v2390 = vpack.c.b16 %v1767, %v1760
    %v2391 = vpack.c.b16 %v1768, %v1761
    %v2392 = vpack.c.b16 %v1769, %v1762
    %v2393 = vpack.c.b16 %v1770, %v1763
    %v2394 = vpack.c.b16 %v1771, %v1764
    %v2395 = vpack.c.b16 %v1779, %v1772
    %v2396 = vpack.c.b16 %v1780, %v1773
    %v2397 = vpack.c.b16 %v1781, %v1774
    %v2398 = vpack.c.b16 %v1782, %v1775
    %v2399 = vpack.c.b16 %v1783, %v1776
    %v2400 = vpack.c.b16 %v1784, %v1777
    %v2401 = vpack.c.b16 %v1785, %v1778
    %v2402 = vpack.c.b16 %v1793, %v1786
    %v2403 = vpack.c.b16 %v1794, %v1787
    %v2404 = vpack.c.b16 %v1795, %v1788
    %v2405 = vpack.c.b16 %v1796, %v1789
    %v2406 = vpack.c.b16 %v1797, %v1790
    %v2407 = vpack.c.b16 %v1798, %v1791
    %v2408 = vpack.c.b16 %v1799, %v1792
    %v2409 = vpack.c.b16 %v1807, %v1800
    %v2410 = vpack.c.b16 %v1808, %v1801
    %v2411 = vpack.c.b16 %v1809, %v1802
    %v2412 = vpack.c.b16 %v1810, %v1803
    %v2413 = vpack.c.b16 %v1811, %v1804
    %v2414 = vpack.c.b16 %v1812, %v1805
    %v2415 = vpack.c.b16 %v1813, %v1806
    %v2416 = vpack.c.b16 %v1821, %v1814
    %v2417 = vpack.c.b16 %v1822, %v1815
    %v2418 = vpack.c.b16 %v1823, %v1816
    %v2419 = vpack.c.b16 %v1824, %v1817
    %v2420 = vpack.c.b16 %v1825, %v1818
    %v2421 = vpack.c.b16 %v1826, %v1819
    %v2422 = vpack.c.b16 %v1827, %v1820
    %v2423 = vpack.c.b16 %v1835, %v1828
    %v2424 = vpack.c.b16 %v1836, %v1829
    %v2425 = vpack.c.b16 %v1837, %v1830
    %v2426 = vpack.c.b16 %v1838, %v1831
    %v2427 = vpack.c.b16 %v1839, %v1832
    %v2428 = vpack.c.b16 %v1840, %v1833
    %v2429 = vpack.c.b16 %v1841, %v1834
    %v2430 = vpack.c.b16 %v1849, %v1842
    %v2431 = vpack.c.b16 %v1850, %v1843
    %v2432 = vpack.c.b16 %v1851, %v1844
    %v2433 = vpack.c.b16 %v1852, %v1845
    %v2434 = vpack.c.b16 %v1853, %v1846
    %v2435 = vpack.c.b16 %v1854, %v1847
    %v2436 = vpack.c.b16 %v1855, %v1848
    %v2437 = vpack.c.b16 %v1863, %v1856
    %v2438 = vpack.c.b16 %v1864, %v1857
    %v2439 = vpack.c.b16 %v1865, %v1858
    %v2440 = vpack.c.b16 %v1866, %v1859
    %v2441 = vpack.c.b16 %v1867, %v1860
    %v2442 = vpack.c.b16 %v1868, %v1861
    %v2443 = vpack.c.b16 %v1869, %v1862
    %v2444 = vpack.c.b16 %v1877, %v1870
    %v2445 = vpack.c.b16 %v1878, %v1871
    %v2446 = vpack.c.b16 %v1879, %v1872
    %v2447 = vpack.c.b16 %v1880, %v1873
    %v2448 = vpack.c.b16 %v1881, %v1874
    %v2449 = vpack.c.b16 %v1882, %v1875
    %v2450 = vpack.c.b16 %v1883, %v1876
    %v2451 = vpack.c.b16 %v1891, %v1884
    %v2452 = vpack.c.b16 %v1892, %v1885
    %v2453 = vpack.c.b16 %v1893, %v1886
    %v2454 = vpack.c.b16 %v1894, %v1887
    %v2455 = vpack.c.b16 %v1895, %v1888
    %v2456 = vpack.c.b16 %v1896, %v1889
    %v2457 = vpack.c.b16 %v1897, %v1890
    %v2458 = vpack.c.b16 %v1905, %v1898
    %v2459 = vpack.c.b16 %v1906, %v1899
    %v2460 = vpack.c.b16 %v1907, %v1900
    %v2461 = vpack.c.b16 %v1908, %v1901
    %v2462 = vpack.c.b16 %v1909, %v1902
    %v2463 = vpack.c.b16 %v1910, %v1903
    %v2464 = vpack.c.b16 %v1911, %v1904
    %v2465 = vpack.c.b16 %v1919, %v1912
    %v2466 = vpack.c.b16 %v1920, %v1913
    %v2467 = vpack.c.b16 %v1921, %v1914
    %v2468 = vpack.c.b16 %v1922, %v1915
    %v2469 = vpack.c.b16 %v1923, %v1916
    %v2470 = vpack.c.b16 %v1924, %v1917
    %v2471 = vpack.c.b16 %v1925, %v1918
    %v2472 = vpack.c.b16 %v1933, %v1926
    %v2473 = vpack.c.b16 %v1934, %v1927
    %v2474 = vpack.c.b16 %v1935, %v1928
    %v2475 = vpack.c.b16 %v1936, %v1929
    %v2476 = vpack.c.b16 %v1937, %v1930
    %v2477 = vpack.c.b16 %v1938, %v1931
    %v2478 = vpack.c.b16 %v1939, %v1932
    %v2479 = vpack.c.b16 %v1947, %v1940
    %v2480 = vpack.c.b16 %v1948, %v1941
    %v2481 = vpack.c.b16 %v1949, %v1942
    %v2482 = vpack.c.b16 %v1950, %v1943
    %v2483 = vpack.c.b16 %v1951, %v1944
    %v2484 = vpack.c.b16 %v1952, %v1945
    %v2485 = vpack.c.b16 %v1953, %v1946
    %v2486 = vpack.c.b16 %v1961, %v1954
    %v2487 = vpack.c.b16 %v1962, %v1955
    %v2488 = vpack.c.b16 %v1963, %v1956
    %v2489 = vpack.c.b16 %v1964, %v1957
    %v2490 = vpack.c.b16 %v1965, %v1958
    %v2491 = vpack.c.b16 %v1966, %v1959
    %v2492 = vpack.c.b16 %v1967, %v1960
    %v2493 = vpack.c.b16 %v1975, %v1968
    %v2494 = vpack.c.b16 %v1976, %v1969
    %v2495 = vpack.c.b16 %v1977, %v1970
    %v2496 = vpack.c.b16 %v1978, %v1971
    %v2497 = vpack.c.b16 %v1979, %v1972
    %v2498 = vpack.c.b16 %v1980, %v1973
    %v2499 = vpack.c.b16 %v1981, %v1974
    %v2500 = vpack.c.b16 %v1989, %v1982
    %v2501 = vpack.c.b16 %v1990, %v1983
    %v2502 = vpack.c.b16 %v1991, %v1984
    %v2503 = vpack.c.b16 %v1992, %v1985
    %v2504 = vpack.c.b16 %v1993, %v1986
    %v2505 = vpack.c.b16 %v1994, %v1987
    %v2506 = vpack.c.b16 %v1995, %v1988
    %v2507 = vpack.c.b16 %v2003, %v1996
    %v2508 = vpack.c.b16 %v2004, %v1997
    %v2509 = vpack.c.b16 %v2005, %v1998
    %v2510 = vpack.c.b16 %v2006, %v1999
    %v2511 = vpack.c.b16 %v2007, %v2000
    %v2512 = vpack.c.b16 %v2008, %v2001
    %v2513 = vpack.c.b16 %v2009, %v2002
    %v2514 = vpack.c.b16 %v2017, %v2010
    %v2515 = vpack.c.b16 %v2018, %v2011
    %v2516 = vpack.c.b16 %v2019, %v2012
    %v2517 = vpack.c.b16 %v2020, %v2013
    %v2518 = vpack.c.b16 %v2021, %v2014
    %v2519 = vpack.c.b16 %v2022, %v2015
    %v2520 = vpack.c.b16 %v2023, %v2016
    %v2521 = vpack.c.b16 %v2031, %v2024
    %v2522 = vpack.c.b16 %v2032, %v2025
    %v2523 = vpack.c.b16 %v2033, %v2026
    %v2524 = vpack.c.b16 %v2034, %v2027
    %v2525 = vpack.c.b16 %v2035, %v2028
    %v2526 = vpack.c.b16 %v2036, %v2029
    %v2527 = vpack.c.b16 %v2037, %v2030
    %v2528 = vpack.c.b16 %v2045, %v2038
    %v2529 = vpack.c.b16 %v2046, %v2039
    %v2530 = vpack.c.b16 %v2047, %v2040
    %v2531 = vpack.c.b16 %v2048, %v2041
    %v2532 = vpack.c.b16 %v2049, %v2042
    %v2533 = vpack.c.b16 %v2050, %v2043
    %v2534 = vpack.c.b16 %v2051, %v2044
    %v2535 = vpack.c.b16 %v2059, %v2052
    %v2536 = vpack.c.b16 %v2060, %v2053
    %v2537 = vpack.c.b16 %v2061, %v2054
    %v2538 = vpack.c.b16 %v2062, %v2055
    %v2539 = vpack.c.b16 %v2063, %v2056
    %v2540 = vpack.c.b16 %v2064, %v2057
    %v2541 = vpack.c.b16 %v2065, %v2058
    %v2542 = vpack.c.b16 %v2073, %v2066
    %v2543 = vpack.c.b16 %v2074, %v2067
    %v2544 = vpack.c.b16 %v2075, %v2068
    %v2545 = vpack.c.b16 %v2076, %v2069
    %v2546 = vpack.c.b16 %v2077, %v2070
    %v2547 = vpack.c.b16 %v2078, %v2071
    %v2548 = vpack.c.b16 %v2079, %v2072
    %v2549 = vpack.c.b16 %v2087, %v2080
    %v2550 = vpack.c.b16 %v2088, %v2081
    %v2551 = vpack.c.b16 %v2089, %v2082
    %v2552 = vpack.c.b16 %v2090, %v2083
    %v2553 = vpack.c.b16 %v2091, %v2084
    %v2554 = vpack.c.b16 %v2092, %v2085
    %v2555 = vpack.c.b16 %v2093, %v2086
    %v2556 = vpack.c.b16 %v2101, %v2094
    %v2557 = vpack.c.b16 %v2102, %v2095
    %v2558 = vpack.c.b16 %v2103, %v2096
    %v2559 = vpack.c.b16 %v2104, %v2097
    %v2560 = vpack.c.b16 %v2105, %v2098
    %v2561 = vpack.c.b16 %v2106, %v2099
    %v2562 = vpack.c.b16 %v2107, %v2100
    %v2563 = vpack.c.b16 %v2115, %v2108
    %v2564 = vpack.c.b16 %v2116, %v2109
    %v2565 = vpack.c.b16 %v2117, %v2110
    %v2566 = vpack.c.b16 %v2118, %v2111
    %v2567 = vpack.c.b16 %v2119, %v2112
    %v2568 = vpack.c.b16 %v2120, %v2113
    %v2569 = vpack.c.b16 %v2121, %v2114
    %v2570 = vpack.c.b16 %v2129, %v2122
    %v2571 = vpack.c.b16 %v2130, %v2123
    %v2572 = vpack.c.b16 %v2131, %v2124
    %v2573 = vpack.c.b16 %v2132, %v2125
    %v2574 = vpack.c.b16 %v2133, %v2126
    %v2575 = vpack.c.b16 %v2134, %v2127
    %v2576 = vpack.c.b16 %v2135, %v2128
    %v2577 = vpack.c.b16 %v2143, %v2136
    %v2578 = vpack.c.b16 %v2144, %v2137
    %v2579 = vpack.c.b16 %v2145, %v2138
    %v2580 = vpack.c.b16 %v2146, %v2139
    %v2581 = vpack.c.b16 %v2147, %v2140
    %v2582 = vpack.c.b16 %v2148, %v2141
    %v2583 = vpack.c.b16 %v2149, %v2142
    %v2584 = vpack.c.b16 %v2157, %v2150
    %v2585 = vpack.c.b16 %v2158, %v2151
    %v2586 = vpack.c.b16 %v2159, %v2152
    %v2587 = vpack.c.b16 %v2160, %v2153
    %v2588 = vpack.c.b16 %v2161, %v2154
    %v2589 = vpack.c.b16 %v2162, %v2155
    %v2590 = vpack.c.b16 %v2163, %v2156
    %v2591 = vpack.c.b16 %v2171, %v2164
    %v2592 = vpack.c.b16 %v2172, %v2165
    %v2593 = vpack.c.b16 %v2173, %v2166
    %v2594 = vpack.c.b16 %v2174, %v2167
    %v2595 = vpack.c.b16 %v2175, %v2168
    %v2596 = vpack.c.b16 %v2176, %v2169
    %v2597 = vpack.c.b16 %v2177, %v2170
    %v2598 = vpack.c.b16 %v2185, %v2178
    %v2599 = vpack.c.b16 %v2186, %v2179
    %v2600 = vpack.c.b16 %v2187, %v2180
    %v2601 = vpack.c.b16 %v2188, %v2181
    %v2602 = vpack.c.b16 %v2189, %v2182
    %v2603 = vpack.c.b16 %v2190, %v2183
    %v2604 = vpack.c.b16 %v2191, %v2184
    %v2605 = vpack.c.b16 %v2199, %v2192
    %v2606 = vpack.c.b16 %v2200, %v2193
    %v2607 = vpack.c.b16 %v2201, %v2194
    %v2608 = vpack.c.b16 %v2202, %v2195
    %v2609 = vpack.c.b16 %v2203, %v2196
    %v2610 = vpack.c.b16 %v2204, %v2197
    %v2611 = vpack.c.b16 %v2205, %v2198
    %v2612 = vpack.c.b16 %v2213, %v2206
    %v2613 = vpack.c.b16 %v2214, %v2207
    %v2614 = vpack.c.b16 %v2215, %v2208
    %v2615 = vpack.c.b16 %v2216, %v2209
    %v2616 = vpack.c.b16 %v2217, %v2210
    %v2617 = vpack.c.b16 %v2218, %v2211
    %v2618 = vpack.c.b16 %v2219, %v2212
    %v2619 = vpack.c.b16 %v2227, %v2220
    %v2620 = vpack.c.b16 %v2228, %v2221
    %v2621 = vpack.c.b16 %v2229, %v2222
    %v2622 = vpack.c.b16 %v2230, %v2223
    %v2623 = vpack.c.b16 %v2231, %v2224
    %v2624 = vpack.c.b16 %v2232, %v2225
    %v2625 = vpack.c.b16 %v2233, %v2226
    %v2626 = vpack.c.b16 %v2241, %v2234
    %v2627 = vpack.c.b16 %v2242, %v2235
    %v2628 = vpack.c.b16 %v2243, %v2236
    %v2629 = vpack.c.b16 %v2244, %v2237
    %v2630 = vpack.c.b16 %v2245, %v2238
    %v2631 = vpack.c.b16 %v2246, %v2239
    %v2632 = vpack.c.b16 %v2247, %v2240
    %v2633 = vpack.c.b16 %v2255, %v2248
    %v2634 = vpack.c.b16 %v2256, %v2249
    %v2635 = vpack.c.b16 %v2257, %v2250
    %v2636 = vpack.c.b16 %v2258, %v2251
    %v2637 = vpack.c.b16 %v2259, %v2252
    %v2638 = vpack.c.b16 %v2260, %v2253
    %v2639 = vpack.c.b16 %v2261, %v2254
    %v2640 = vpack.c.b16 %v2269, %v2262
    %v2641 = vpack.c.b16 %v2270, %v2263
    %v2642 = vpack.c.b16 %v2271, %v2264
    %v2643 = vpack.c.b16 %v2272, %v2265
    %v2644 = vpack.c.b16 %v2273, %v2266
    %v2645 = vpack.c.b16 %v2274, %v2267
    %v2646 = vpack.c.b16 %v2275, %v2268
    %v2647 = vpack.c.b16 %v2283, %v2276
    %v2648 = vpack.c.b16 %v2284, %v2277
    %v2649 = vpack.c.b16 %v2285, %v2278
    %v2650 = vpack.c.b16 %v2286, %v2279
    %v2651 = vpack.c.b16 %v2287, %v2280
    %v2652 = vpack.c.b16 %v2288, %v2281
    %v2653 = vpack.c.b16 %v2289, %v2282
    %v2654 = vpack.c.b16 %v2297, %v2290
    %v2655 = vpack.c.b16 %v2298, %v2291
    %v2656 = vpack.c.b16 %v2299, %v2292
    %v2657 = vpack.c.b16 %v2300, %v2293
    %v2658 = vpack.c.b16 %v2301, %v2294
    %v2659 = vpack.c.b16 %v2302, %v2295
    %v2660 = vpack.c.b16 %v2303, %v2296
    %v2661 = vpack.c.b16 %v2311, %v2304
    %v2662 = vpack.c.b16 %v2312, %v2305
    %v2663 = vpack.c.b16 %v2313, %v2306
    %v2664 = vpack.c.b16 %v2314, %v2307
    %v2665 = vpack.c.b16 %v2315, %v2308
    %v2666 = vpack.c.b16 %v2316, %v2309
    %v2667 = vpack.c.b16 %v2317, %v2310
    %v2668 = vpack.c.b16 %v2325, %v2318
    %v2669 = vpack.c.b16 %v2326, %v2319
    %v2670 = vpack.c.b16 %v2327, %v2320
    %v2671 = vpack.c.b16 %v2328, %v2321
    %v2672 = vpack.c.b16 %v2329, %v2322
    %v2673 = vpack.c.b16 %v2330, %v2323
    %v2674 = vpack.c.b16 %v2331, %v2324
    %vm2969 = vcmask 130048
    %v2971 = vsel %vm2969, %v2338, 0
    %v2974 = vsel %vm2969, %v2345, 0
    %v2977 = vsel %vm2969, %v2352, 0
    %v2980 = vsel %vm2969, %v2359, 0
    %v2983 = vsel %vm2969, %v2366, 0
    %v2986 = vsel %vm2969, %v2373, 0
    %v2989 = vsel %vm2969, %v2380, 0
    %v2992 = vsel %vm2969, %v2387, 0
    %v2995 = vsel %vm2969, %v2394, 0
    %v2998 = vsel %vm2969, %v2401, 0
    %v3001 = vsel %vm2969, %v2408, 0
    %v3004 = vsel %vm2969, %v2415, 0
    %v3007 = vsel %vm2969, %v2422, 0
    %v3010 = vsel %vm2969, %v2429, 0
    %v3013 = vsel %vm2969, %v2436, 0
    %v3016 = vsel %vm2969, %v2443, 0
    %v3019 = vsel %vm2969, %v2450, 0
    %v3022 = vsel %vm2969, %v2457, 0
    %v3025 = vsel %vm2969, %v2464, 0
    %v3028 = vsel %vm2969, %v2471, 0
    %v3031 = vsel %vm2969, %v2478, 0
    %v3034 = vsel %vm2969, %v2485, 0
    %v3037 = vsel %vm2969, %v2492, 0
    %v3040 = vsel %vm2969, %v2499, 0
    %v3043 = vsel %vm2969, %v2506, 0
    %v3046 = vsel %vm2969, %v2513, 0
    %v3049 = vsel %vm2969, %v2520, 0
    %v3052 = vsel %vm2969, %v2527, 0
    %v3055 = vsel %vm2969, %v2534, 0
    %v3058 = vsel %vm2969, %v2541, 0
    %v3061 = vsel %vm2969, %v2548, 0
    %v3064 = vsel %vm2969, %v2555, 0
    %v3067 = vsel %vm2969, %v2562, 0
    %v3070 = vsel %vm2969, %v2569, 0
    %v3073 = vsel %vm2969, %v2576, 0
    %v3076 = vsel %vm2969, %v2583, 0
    %v3079 = vsel %vm2969, %v2590, 0
    %v3082 = vsel %vm2969, %v2597, 0
    %v3085 = vsel %vm2969, %v2604, 0
    %v3088 = vsel %vm2969, %v2611, 0
    %v3091 = vsel %vm2969, %v2618, 0
    %v3094 = vsel %vm2969, %v2625, 0
    %v3097 = vsel %vm2969, %v2632, 0
    %v3100 = vsel %vm2969, %v2639, 0
    %v3103 = vsel %vm2969, %v2646, 0
    %v3106 = vsel %vm2969, %v2653, 0
    %v3109 = vsel %vm2969, %v2660, 0
    %v3112 = vsel %vm2969, %v2667, 0
    %v3115 = vsel %vm2969, %v2674, 0
    %3117 = vmatprep.subr.bf16.mxu0 0
    %3118 = vmatpush1.bf16.msra.mxu0 %v820
    %3119 = vmatprep.subr.bf16.mxu0 0
    %3120 = vmatpush1.bf16.msra.mxu0 %v819
    %3121 = vmatprep.subr.bf16.mxu0 0
    %3122 = vmatpush1.bf16.msra.mxu0 %v818
    %3123 = vmatprep.subr.bf16.mxu0 0
    %3124 = vmatpush1.bf16.msra.mxu0 %v817
    %3125 = vmatprep.subr.bf16.mxu0 0
    %3126 = vmatpush1.bf16.msra.mxu0 %v816
    %3127 = vmatprep.subr.bf16.mxu0 0
    %3128 = vmatpush1.bf16.msra.mxu0 %v815
    %3129 = vmatprep.subr.bf16.mxu0 0
    %3130 = vmatpush1.bf16.msra.mxu0 %v814
    %3131 = vmatprep.subr.bf16.mxu0 0
    %3132 = vmatpush1.bf16.msra.mxu0 %v813
    %3133 = vmatprep.subr.bf16.mxu0 0
    %3134 = vmatpush2.bf16.msra.mxu0 %v828
    %3135 = vmatprep.subr.bf16.mxu0 0
    %3136 = vmatpush2.bf16.msra.mxu0 %v827
    %3137 = vmatprep.subr.bf16.mxu0 0
    %3138 = vmatpush2.bf16.msra.mxu0 %v826
    %3139 = vmatprep.subr.bf16.mxu0 0
    %3140 = vmatpush2.bf16.msra.mxu0 %v825
    %3141 = vmatprep.subr.bf16.mxu0 0
    %3142 = vmatpush2.bf16.msra.mxu0 %v824
    %3143 = vmatprep.subr.bf16.mxu0 0
    %3144 = vmatpush2.bf16.msra.mxu0 %v823
    %3145 = vmatprep.subr.bf16.mxu0 0
    %3146 = vmatpush2.bf16.msra.mxu0 %v822
    %3147 = vmatprep.subr.bf16.mxu0 0
    %3148 = vmatpush2.bf16.msra.mxu0 %v821
    %3149 = vmatprep.mubr.bf16.mxu0 %v2333
    %3150 = vmatmul.mubr.bf16.gmra.mxu0 %v2332
    %v3151 = vpop.f32.mrf.mxu0
    %v3152 = vadd.f32 0.0, %v3151
    %v3153 = vpop.f32.mrf.mxu0
    %v3154 = vpop.f32.mrf.mxu0
    %v3155 = vadd.f32 0.0, %v3154
    %v3156 = vpop.f32.mrf.mxu0
    %3157 = vmatprep.mubr.bf16.mxu0 %v2340
    %3158 = vmatmul.mubr.bf16.gmra.mxu0 %v2339
    %v3159 = vpop.f32.mrf.mxu0
    %v3160 = vadd.f32 0.0, %v3159
    %v3161 = vpop.f32.mrf.mxu0
    %v3162 = vpop.f32.mrf.mxu0
    %v3163 = vadd.f32 0.0, %v3162
    %v3164 = vpop.f32.mrf.mxu0
    %3165 = vmatprep.mubr.bf16.mxu0 %v2347
    %3166 = vmatmul.mubr.bf16.gmra.mxu0 %v2346
    %v3167 = vpop.f32.mrf.mxu0
    %v3168 = vadd.f32 0.0, %v3167
    %v3169 = vpop.f32.mrf.mxu0
    %v3170 = vpop.f32.mrf.mxu0
    %v3171 = vadd.f32 0.0, %v3170
    %v3172 = vpop.f32.mrf.mxu0
    %3173 = vmatprep.mubr.bf16.mxu0 %v2354
    %3174 = vmatmul.mubr.bf16.gmra.mxu0 %v2353
    %v3175 = vpop.f32.mrf.mxu0
    %v3176 = vadd.f32 0.0, %v3175
    %v3177 = vpop.f32.mrf.mxu0
    %v3178 = vpop.f32.mrf.mxu0
    %v3179 = vadd.f32 0.0, %v3178
    %v3180 = vpop.f32.mrf.mxu0
    %3181 = vmatprep.mubr.bf16.mxu0 %v2361
    %3182 = vmatmul.mubr.bf16.gmra.mxu0 %v2360
    %v3183 = vpop.f32.mrf.mxu0
    %v3184 = vadd.f32 0.0, %v3183
    %v3185 = vpop.f32.mrf.mxu0
    %v3186 = vpop.f32.mrf.mxu0
    %v3187 = vadd.f32 0.0, %v3186
    %v3188 = vpop.f32.mrf.mxu0
    %3189 = vmatprep.mubr.bf16.mxu0 %v2368
    %3190 = vmatmul.mubr.bf16.gmra.mxu0 %v2367
    %v3191 = vpop.f32.mrf.mxu0
    %v3192 = vadd.f32 0.0, %v3191
    %v3193 = vpop.f32.mrf.mxu0
    %v3194 = vpop.f32.mrf.mxu0
    %v3195 = vadd.f32 0.0, %v3194
    %v3196 = vpop.f32.mrf.mxu0
    %3197 = vmatprep.mubr.bf16.mxu0 %v2375
    %3198 = vmatmul.mubr.bf16.gmra.mxu0 %v2374
    %v3199 = vpop.f32.mrf.mxu0
    %v3200 = vadd.f32 0.0, %v3199
    %v3201 = vpop.f32.mrf.mxu0
    %v3202 = vpop.f32.mrf.mxu0
    %v3203 = vadd.f32 0.0, %v3202
    %v3204 = vpop.f32.mrf.mxu0
    %3205 = vmatprep.mubr.bf16.mxu0 %v2382
    %3206 = vmatmul.mubr.bf16.gmra.mxu0 %v2381
    %v3207 = vpop.f32.mrf.mxu0
    %v3208 = vadd.f32 0.0, %v3207
    %v3209 = vpop.f32.mrf.mxu0
    %v3210 = vpop.f32.mrf.mxu0
    %v3211 = vadd.f32 0.0, %v3210
    %v3212 = vpop.f32.mrf.mxu0
    %3213 = vmatprep.mubr.bf16.mxu0 %v2389
    %3214 = vmatmul.mubr.bf16.gmra.mxu0 %v2388
    %v3215 = vpop.f32.mrf.mxu0
    %v3216 = vadd.f32 0.0, %v3215
    %v3217 = vpop.f32.mrf.mxu0
    %v3218 = vpop.f32.mrf.mxu0
    %v3219 = vadd.f32 0.0, %v3218
    %v3220 = vpop.f32.mrf.mxu0
    %3221 = vmatprep.mubr.bf16.mxu0 %v2396
    %3222 = vmatmul.mubr.bf16.gmra.mxu0 %v2395
    %v3223 = vpop.f32.mrf.mxu0
    %v3224 = vadd.f32 0.0, %v3223
    %v3225 = vpop.f32.mrf.mxu0
    %v3226 = vpop.f32.mrf.mxu0
    %v3227 = vadd.f32 0.0, %v3226
    %v3228 = vpop.f32.mrf.mxu0
    %3229 = vmatprep.mubr.bf16.mxu0 %v2403
    %3230 = vmatmul.mubr.bf16.gmra.mxu0 %v2402
    %v3231 = vpop.f32.mrf.mxu0
    %v3232 = vadd.f32 0.0, %v3231
    %v3233 = vpop.f32.mrf.mxu0
    %v3234 = vpop.f32.mrf.mxu0
    %v3235 = vadd.f32 0.0, %v3234
    %v3236 = vpop.f32.mrf.mxu0
    %3237 = vmatprep.mubr.bf16.mxu0 %v2410
    %3238 = vmatmul.mubr.bf16.gmra.mxu0 %v2409
    %v3239 = vpop.f32.mrf.mxu0
    %v3240 = vadd.f32 0.0, %v3239
    %v3241 = vpop.f32.mrf.mxu0
    %v3242 = vpop.f32.mrf.mxu0
    %v3243 = vadd.f32 0.0, %v3242
    %v3244 = vpop.f32.mrf.mxu0
    %3245 = vmatprep.mubr.bf16.mxu0 %v2417
    %3246 = vmatmul.mubr.bf16.gmra.mxu0 %v2416
    %v3247 = vpop.f32.mrf.mxu0
    %v3248 = vadd.f32 0.0, %v3247
    %v3249 = vpop.f32.mrf.mxu0
    %v3250 = vpop.f32.mrf.mxu0
    %v3251 = vadd.f32 0.0, %v3250
    %v3252 = vpop.f32.mrf.mxu0
    %3253 = vmatprep.mubr.bf16.mxu0 %v2424
    %3254 = vmatmul.mubr.bf16.gmra.mxu0 %v2423
    %v3255 = vpop.f32.mrf.mxu0
    %v3256 = vadd.f32 0.0, %v3255
    %v3257 = vpop.f32.mrf.mxu0
    %v3258 = vpop.f32.mrf.mxu0
    %v3259 = vadd.f32 0.0, %v3258
    %v3260 = vpop.f32.mrf.mxu0
    %3261 = vmatprep.mubr.bf16.mxu0 %v2431
    %3262 = vmatmul.mubr.bf16.gmra.mxu0 %v2430
    %v3263 = vpop.f32.mrf.mxu0
    %v3264 = vadd.f32 0.0, %v3263
    %v3265 = vpop.f32.mrf.mxu0
    %v3266 = vpop.f32.mrf.mxu0
    %v3267 = vadd.f32 0.0, %v3266
    %v3268 = vpop.f32.mrf.mxu0
    %3269 = vmatprep.mubr.bf16.mxu0 %v2438
    %3270 = vmatmul.mubr.bf16.gmra.mxu0 %v2437
    %v3271 = vpop.f32.mrf.mxu0
    %v3272 = vadd.f32 0.0, %v3271
    %v3273 = vpop.f32.mrf.mxu0
    %v3274 = vpop.f32.mrf.mxu0
    %v3275 = vadd.f32 0.0, %v3274
    %v3276 = vpop.f32.mrf.mxu0
    %3277 = vmatprep.mubr.bf16.mxu0 %v2445
    %3278 = vmatmul.mubr.bf16.gmra.mxu0 %v2444
    %v3279 = vpop.f32.mrf.mxu0
    %v3280 = vadd.f32 0.0, %v3279
    %v3281 = vpop.f32.mrf.mxu0
    %v3282 = vpop.f32.mrf.mxu0
    %v3283 = vadd.f32 0.0, %v3282
    %v3284 = vpop.f32.mrf.mxu0
    %3285 = vmatprep.mubr.bf16.mxu0 %v2452
    %3286 = vmatmul.mubr.bf16.gmra.mxu0 %v2451
    %v3287 = vpop.f32.mrf.mxu0
    %v3288 = vadd.f32 0.0, %v3287
    %v3289 = vpop.f32.mrf.mxu0
    %v3290 = vpop.f32.mrf.mxu0
    %v3291 = vadd.f32 0.0, %v3290
    %v3292 = vpop.f32.mrf.mxu0
    %3293 = vmatprep.mubr.bf16.mxu0 %v2459
    %3294 = vmatmul.mubr.bf16.gmra.mxu0 %v2458
    %v3295 = vpop.f32.mrf.mxu0
    %v3296 = vadd.f32 0.0, %v3295
    %v3297 = vpop.f32.mrf.mxu0
    %v3298 = vpop.f32.mrf.mxu0
    %v3299 = vadd.f32 0.0, %v3298
    %v3300 = vpop.f32.mrf.mxu0
    %3301 = vmatprep.mubr.bf16.mxu0 %v2466
    %3302 = vmatmul.mubr.bf16.gmra.mxu0 %v2465
    %v3303 = vpop.f32.mrf.mxu0
    %v3304 = vadd.f32 0.0, %v3303
    %v3305 = vpop.f32.mrf.mxu0
    %v3306 = vpop.f32.mrf.mxu0
    %v3307 = vadd.f32 0.0, %v3306
    %v3308 = vpop.f32.mrf.mxu0
    %3309 = vmatprep.mubr.bf16.mxu0 %v2473
    %3310 = vmatmul.mubr.bf16.gmra.mxu0 %v2472
    %v3311 = vpop.f32.mrf.mxu0
    %v3312 = vadd.f32 0.0, %v3311
    %v3313 = vpop.f32.mrf.mxu0
    %v3314 = vpop.f32.mrf.mxu0
    %v3315 = vadd.f32 0.0, %v3314
    %v3316 = vpop.f32.mrf.mxu0
    %3317 = vmatprep.mubr.bf16.mxu0 %v2480
    %3318 = vmatmul.mubr.bf16.gmra.mxu0 %v2479
    %v3319 = vpop.f32.mrf.mxu0
    %v3320 = vadd.f32 0.0, %v3319
    %v3321 = vpop.f32.mrf.mxu0
    %v3322 = vpop.f32.mrf.mxu0
    %v3323 = vadd.f32 0.0, %v3322
    %v3324 = vpop.f32.mrf.mxu0
    %3325 = vmatprep.mubr.bf16.mxu0 %v2487
    %3326 = vmatmul.mubr.bf16.gmra.mxu0 %v2486
    %v3327 = vpop.f32.mrf.mxu0
    %v3328 = vadd.f32 0.0, %v3327
    %v3329 = vpop.f32.mrf.mxu0
    %v3330 = vpop.f32.mrf.mxu0
    %v3331 = vadd.f32 0.0, %v3330
    %v3332 = vpop.f32.mrf.mxu0
    %3333 = vmatprep.mubr.bf16.mxu0 %v2494
    %3334 = vmatmul.mubr.bf16.gmra.mxu0 %v2493
    %v3335 = vpop.f32.mrf.mxu0
    %v3336 = vadd.f32 0.0, %v3335
    %v3337 = vpop.f32.mrf.mxu0
    %v3338 = vpop.f32.mrf.mxu0
    %v3339 = vadd.f32 0.0, %v3338
    %v3340 = vpop.f32.mrf.mxu0
    %3341 = vmatprep.mubr.bf16.mxu0 %v2501
    %3342 = vmatmul.mubr.bf16.gmra.mxu0 %v2500
    %v3343 = vpop.f32.mrf.mxu0
    %v3344 = vadd.f32 0.0, %v3343
    %v3345 = vpop.f32.mrf.mxu0
    %v3346 = vpop.f32.mrf.mxu0
    %v3347 = vadd.f32 0.0, %v3346
    %v3348 = vpop.f32.mrf.mxu0
    %3349 = vmatprep.mubr.bf16.mxu0 %v2508
    %3350 = vmatmul.mubr.bf16.gmra.mxu0 %v2507
    %v3351 = vpop.f32.mrf.mxu0
    %v3352 = vadd.f32 0.0, %v3351
    %v3353 = vpop.f32.mrf.mxu0
    %v3354 = vpop.f32.mrf.mxu0
    %v3355 = vadd.f32 0.0, %v3354
    %v3356 = vpop.f32.mrf.mxu0
    %3357 = vmatprep.mubr.bf16.mxu0 %v2515
    %3358 = vmatmul.mubr.bf16.gmra.mxu0 %v2514
    %v3359 = vpop.f32.mrf.mxu0
    %v3360 = vadd.f32 0.0, %v3359
    %v3361 = vpop.f32.mrf.mxu0
    %v3362 = vpop.f32.mrf.mxu0
    %v3363 = vadd.f32 0.0, %v3362
    %v3364 = vpop.f32.mrf.mxu0
    %3365 = vmatprep.mubr.bf16.mxu0 %v2522
    %3366 = vmatmul.mubr.bf16.gmra.mxu0 %v2521
    %v3367 = vpop.f32.mrf.mxu0
    %v3368 = vadd.f32 0.0, %v3367
    %v3369 = vpop.f32.mrf.mxu0
    %v3370 = vpop.f32.mrf.mxu0
    %v3371 = vadd.f32 0.0, %v3370
    %v3372 = vpop.f32.mrf.mxu0
    %3373 = vmatprep.mubr.bf16.mxu0 %v2529
    %3374 = vmatmul.mubr.bf16.gmra.mxu0 %v2528
    %v3375 = vpop.f32.mrf.mxu0
    %v3376 = vadd.f32 0.0, %v3375
    %v3377 = vpop.f32.mrf.mxu0
    %v3378 = vpop.f32.mrf.mxu0
    %v3379 = vadd.f32 0.0, %v3378
    %v3380 = vpop.f32.mrf.mxu0
    %3381 = vmatprep.mubr.bf16.mxu0 %v2536
    %3382 = vmatmul.mubr.bf16.gmra.mxu0 %v2535
    %v3383 = vpop.f32.mrf.mxu0
    %v3384 = vadd.f32 0.0, %v3383
    %v3385 = vpop.f32.mrf.mxu0
    %v3386 = vpop.f32.mrf.mxu0
    %v3387 = vadd.f32 0.0, %v3386
    %v3388 = vpop.f32.mrf.mxu0
    %3389 = vmatprep.mubr.bf16.mxu0 %v2543
    %3390 = vmatmul.mubr.bf16.gmra.mxu0 %v2542
    %v3391 = vpop.f32.mrf.mxu0
    %v3392 = vadd.f32 0.0, %v3391
    %v3393 = vpop.f32.mrf.mxu0
    %v3394 = vpop.f32.mrf.mxu0
    %v3395 = vadd.f32 0.0, %v3394
    %v3396 = vpop.f32.mrf.mxu0
    %3397 = vmatprep.mubr.bf16.mxu0 %v2550
    %3398 = vmatmul.mubr.bf16.gmra.mxu0 %v2549
    %v3399 = vpop.f32.mrf.mxu0
    %v3400 = vadd.f32 0.0, %v3399
    %v3401 = vpop.f32.mrf.mxu0
    %v3402 = vpop.f32.mrf.mxu0
    %v3403 = vadd.f32 0.0, %v3402
    %v3404 = vpop.f32.mrf.mxu0
    %3405 = vmatprep.mubr.bf16.mxu0 %v2557
    %3406 = vmatmul.mubr.bf16.gmra.mxu0 %v2556
    %v3407 = vpop.f32.mrf.mxu0
    %v3408 = vadd.f32 0.0, %v3407
    %v3409 = vpop.f32.mrf.mxu0
    %v3410 = vpop.f32.mrf.mxu0
    %v3411 = vadd.f32 0.0, %v3410
    %v3412 = vpop.f32.mrf.mxu0
    %3413 = vmatprep.mubr.bf16.mxu0 %v2564
    %3414 = vmatmul.mubr.bf16.gmra.mxu0 %v2563
    %v3415 = vpop.f32.mrf.mxu0
    %v3416 = vadd.f32 0.0, %v3415
    %v3417 = vpop.f32.mrf.mxu0
    %v3418 = vpop.f32.mrf.mxu0
    %v3419 = vadd.f32 0.0, %v3418
    %v3420 = vpop.f32.mrf.mxu0
    %3421 = vmatprep.mubr.bf16.mxu0 %v2571
    %3422 = vmatmul.mubr.bf16.gmra.mxu0 %v2570
    %v3423 = vpop.f32.mrf.mxu0
    %v3424 = vadd.f32 0.0, %v3423
    %v3425 = vpop.f32.mrf.mxu0
    %v3426 = vpop.f32.mrf.mxu0
    %v3427 = vadd.f32 0.0, %v3426
    %v3428 = vpop.f32.mrf.mxu0
    %3429 = vmatprep.mubr.bf16.mxu0 %v2578
    %3430 = vmatmul.mubr.bf16.gmra.mxu0 %v2577
    %v3431 = vpop.f32.mrf.mxu0
    %v3432 = vadd.f32 0.0, %v3431
    %v3433 = vpop.f32.mrf.mxu0
    %v3434 = vpop.f32.mrf.mxu0
    %v3435 = vadd.f32 0.0, %v3434
    %v3436 = vpop.f32.mrf.mxu0
    %3437 = vmatprep.mubr.bf16.mxu0 %v2585
    %3438 = vmatmul.mubr.bf16.gmra.mxu0 %v2584
    %v3439 = vpop.f32.mrf.mxu0
    %v3440 = vadd.f32 0.0, %v3439
    %v3441 = vpop.f32.mrf.mxu0
    %v3442 = vpop.f32.mrf.mxu0
    %v3443 = vadd.f32 0.0, %v3442
    %v3444 = vpop.f32.mrf.mxu0
    %3445 = vmatprep.mubr.bf16.mxu0 %v2592
    %3446 = vmatmul.mubr.bf16.gmra.mxu0 %v2591
    %v3447 = vpop.f32.mrf.mxu0
    %v3448 = vadd.f32 0.0, %v3447
    %v3449 = vpop.f32.mrf.mxu0
    %v3450 = vpop.f32.mrf.mxu0
    %v3451 = vadd.f32 0.0, %v3450
    %v3452 = vpop.f32.mrf.mxu0
    %3453 = vmatprep.mubr.bf16.mxu0 %v2599
    %3454 = vmatmul.mubr.bf16.gmra.mxu0 %v2598
    %v3455 = vpop.f32.mrf.mxu0
    %v3456 = vadd.f32 0.0, %v3455
    %v3457 = vpop.f32.mrf.mxu0
    %v3458 = vpop.f32.mrf.mxu0
    %v3459 = vadd.f32 0.0, %v3458
    %v3460 = vpop.f32.mrf.mxu0
    %3461 = vmatprep.mubr.bf16.mxu0 %v2606
    %3462 = vmatmul.mubr.bf16.gmra.mxu0 %v2605
    %v3463 = vpop.f32.mrf.mxu0
    %v3464 = vadd.f32 0.0, %v3463
    %v3465 = vpop.f32.mrf.mxu0
    %v3466 = vpop.f32.mrf.mxu0
    %v3467 = vadd.f32 0.0, %v3466
    %v3468 = vpop.f32.mrf.mxu0
    %3469 = vmatprep.mubr.bf16.mxu0 %v2613
    %3470 = vmatmul.mubr.bf16.gmra.mxu0 %v2612
    %v3471 = vpop.f32.mrf.mxu0
    %v3472 = vadd.f32 0.0, %v3471
    %v3473 = vpop.f32.mrf.mxu0
    %v3474 = vpop.f32.mrf.mxu0
    %v3475 = vadd.f32 0.0, %v3474
    %v3476 = vpop.f32.mrf.mxu0
    %3477 = vmatprep.mubr.bf16.mxu0 %v2620
    %3478 = vmatmul.mubr.bf16.gmra.mxu0 %v2619
    %v3479 = vpop.f32.mrf.mxu0
    %v3480 = vadd.f32 0.0, %v3479
    %v3481 = vpop.f32.mrf.mxu0
    %v3482 = vpop.f32.mrf.mxu0
    %v3483 = vadd.f32 0.0, %v3482
    %v3484 = vpop.f32.mrf.mxu0
    %3485 = vmatprep.mubr.bf16.mxu0 %v2627
    %3486 = vmatmul.mubr.bf16.gmra.mxu0 %v2626
    %v3487 = vpop.f32.mrf.mxu0
    %v3488 = vadd.f32 0.0, %v3487
    %v3489 = vpop.f32.mrf.mxu0
    %v3490 = vpop.f32.mrf.mxu0
    %v3491 = vadd.f32 0.0, %v3490
    %v3492 = vpop.f32.mrf.mxu0
    %3493 = vmatprep.mubr.bf16.mxu0 %v2634
    %3494 = vmatmul.mubr.bf16.gmra.mxu0 %v2633
    %v3495 = vpop.f32.mrf.mxu0
    %v3496 = vadd.f32 0.0, %v3495
    %v3497 = vpop.f32.mrf.mxu0
    %v3498 = vpop.f32.mrf.mxu0
    %v3499 = vadd.f32 0.0, %v3498
    %v3500 = vpop.f32.mrf.mxu0
    %3501 = vmatprep.mubr.bf16.mxu0 %v2641
    %3502 = vmatmul.mubr.bf16.gmra.mxu0 %v2640
    %v3503 = vpop.f32.mrf.mxu0
    %v3504 = vadd.f32 0.0, %v3503
    %v3505 = vpop.f32.mrf.mxu0
    %v3506 = vpop.f32.mrf.mxu0
    %v3507 = vadd.f32 0.0, %v3506
    %v3508 = vpop.f32.mrf.mxu0
    %3509 = vmatprep.mubr.bf16.mxu0 %v2648
    %3510 = vmatmul.mubr.bf16.gmra.mxu0 %v2647
    %v3511 = vpop.f32.mrf.mxu0
    %v3512 = vadd.f32 0.0, %v3511
    %v3513 = vpop.f32.mrf.mxu0
    %v3514 = vpop.f32.mrf.mxu0
    %v3515 = vadd.f32 0.0, %v3514
    %v3516 = vpop.f32.mrf.mxu0
    %3517 = vmatprep.mubr.bf16.mxu0 %v2655
    %3518 = vmatmul.mubr.bf16.gmra.mxu0 %v2654
    %v3519 = vpop.f32.mrf.mxu0
    %v3520 = vadd.f32 0.0, %v3519
    %v3521 = vpop.f32.mrf.mxu0
    %v3522 = vpop.f32.mrf.mxu0
    %v3523 = vadd.f32 0.0, %v3522
    %v3524 = vpop.f32.mrf.mxu0
    %3525 = vmatprep.mubr.bf16.mxu0 %v2662
    %3526 = vmatmul.mubr.bf16.gmra.mxu0 %v2661
    %v3527 = vpop.f32.mrf.mxu0
    %v3528 = vadd.f32 0.0, %v3527
    %v3529 = vpop.f32.mrf.mxu0
    %v3530 = vpop.f32.mrf.mxu0
    %v3531 = vadd.f32 0.0, %v3530
    %v3532 = vpop.f32.mrf.mxu0
    %3533 = vmatprep.mubr.bf16.mxu0 %v2669
    %3534 = vmatmul.mubr.bf16.gmra.mxu0 %v2668
    %v3535 = vpop.f32.mrf.mxu0
    %v3536 = vadd.f32 0.0, %v3535
    %v3537 = vpop.f32.mrf.mxu0
    %v3538 = vpop.f32.mrf.mxu0
    %v3539 = vadd.f32 0.0, %v3538
    %v3540 = vpop.f32.mrf.mxu0
    %3541 = vdwg.mxu0
    %3542 = vmatprep.subr.bf16.mxu0 0
    %3543 = vmatpush1.bf16.msra.mxu0 %v836
    %3544 = vmatprep.subr.bf16.mxu0 0
    %3545 = vmatpush1.bf16.msra.mxu0 %v835
    %3546 = vmatprep.subr.bf16.mxu0 0
    %3547 = vmatpush1.bf16.msra.mxu0 %v834
    %3548 = vmatprep.subr.bf16.mxu0 0
    %3549 = vmatpush1.bf16.msra.mxu0 %v833
    %3550 = vmatprep.subr.bf16.mxu0 0
    %3551 = vmatpush1.bf16.msra.mxu0 %v832
    %3552 = vmatprep.subr.bf16.mxu0 0
    %3553 = vmatpush1.bf16.msra.mxu0 %v831
    %3554 = vmatprep.subr.bf16.mxu0 0
    %3555 = vmatpush1.bf16.msra.mxu0 %v830
    %3556 = vmatprep.subr.bf16.mxu0 0
    %3557 = vmatpush1.bf16.msra.mxu0 %v829
    %3558 = vmatprep.subr.bf16.mxu0 0
    %3559 = vmatpush2.bf16.msra.mxu0 %v844
    %3560 = vmatprep.subr.bf16.mxu0 0
    %3561 = vmatpush2.bf16.msra.mxu0 %v843
    %3562 = vmatprep.subr.bf16.mxu0 0
    %3563 = vmatpush2.bf16.msra.mxu0 %v842
    %3564 = vmatprep.subr.bf16.mxu0 0
    %3565 = vmatpush2.bf16.msra.mxu0 %v841
    %3566 = vmatprep.subr.bf16.mxu0 0
    %3567 = vmatpush2.bf16.msra.mxu0 %v840
    %3568 = vmatprep.subr.bf16.mxu0 0
    %3569 = vmatpush2.bf16.msra.mxu0 %v839
    %3570 = vmatprep.subr.bf16.mxu0 0
    %3571 = vmatpush2.bf16.msra.mxu0 %v838
    %3572 = vmatprep.subr.bf16.mxu0 0
    %3573 = vmatpush2.bf16.msra.mxu0 %v837
    %3574 = vmatprep.mubr.bf16.mxu0 %v2335
    %3575 = vmatmul.mubr.bf16.gmra.mxu0 %v2334
    %v3576 = vpop.f32.mrf.mxu0
    %v3577 = vadd.f32 %v3152, %v3576
    %v3578 = vpop.f32.mrf.mxu0
    %v3579 = vpop.f32.mrf.mxu0
    %v3580 = vadd.f32 %v3155, %v3579
    %v3581 = vpop.f32.mrf.mxu0
    %3582 = vmatprep.mubr.bf16.mxu0 %v2342
    %3583 = vmatmul.mubr.bf16.gmra.mxu0 %v2341
    %v3584 = vpop.f32.mrf.mxu0
    %v3585 = vadd.f32 %v3160, %v3584
    %v3586 = vpop.f32.mrf.mxu0
    %v3587 = vpop.f32.mrf.mxu0
    %v3588 = vadd.f32 %v3163, %v3587
    %v3589 = vpop.f32.mrf.mxu0
    %3590 = vmatprep.mubr.bf16.mxu0 %v2349
    %3591 = vmatmul.mubr.bf16.gmra.mxu0 %v2348
    %v3592 = vpop.f32.mrf.mxu0
    %v3593 = vadd.f32 %v3168, %v3592
    %v3594 = vpop.f32.mrf.mxu0
    %v3595 = vpop.f32.mrf.mxu0
    %v3596 = vadd.f32 %v3171, %v3595
    %v3597 = vpop.f32.mrf.mxu0
    %3598 = vmatprep.mubr.bf16.mxu0 %v2356
    %3599 = vmatmul.mubr.bf16.gmra.mxu0 %v2355
    %v3600 = vpop.f32.mrf.mxu0
    %v3601 = vadd.f32 %v3176, %v3600
    %v3602 = vpop.f32.mrf.mxu0
    %v3603 = vpop.f32.mrf.mxu0
    %v3604 = vadd.f32 %v3179, %v3603
    %v3605 = vpop.f32.mrf.mxu0
    %3606 = vmatprep.mubr.bf16.mxu0 %v2363
    %3607 = vmatmul.mubr.bf16.gmra.mxu0 %v2362
    %v3608 = vpop.f32.mrf.mxu0
    %v3609 = vadd.f32 %v3184, %v3608
    %v3610 = vpop.f32.mrf.mxu0
    %v3611 = vpop.f32.mrf.mxu0
    %v3612 = vadd.f32 %v3187, %v3611
    %v3613 = vpop.f32.mrf.mxu0
    %3614 = vmatprep.mubr.bf16.mxu0 %v2370
    %3615 = vmatmul.mubr.bf16.gmra.mxu0 %v2369
    %v3616 = vpop.f32.mrf.mxu0
    %v3617 = vadd.f32 %v3192, %v3616
    %v3618 = vpop.f32.mrf.mxu0
    %v3619 = vpop.f32.mrf.mxu0
    %v3620 = vadd.f32 %v3195, %v3619
    %v3621 = vpop.f32.mrf.mxu0
    %3622 = vmatprep.mubr.bf16.mxu0 %v2377
    %3623 = vmatmul.mubr.bf16.gmra.mxu0 %v2376
    %v3624 = vpop.f32.mrf.mxu0
    %v3625 = vadd.f32 %v3200, %v3624
    %v3626 = vpop.f32.mrf.mxu0
    %v3627 = vpop.f32.mrf.mxu0
    %v3628 = vadd.f32 %v3203, %v3627
    %v3629 = vpop.f32.mrf.mxu0
    %3630 = vmatprep.mubr.bf16.mxu0 %v2384
    %3631 = vmatmul.mubr.bf16.gmra.mxu0 %v2383
    %v3632 = vpop.f32.mrf.mxu0
    %v3633 = vadd.f32 %v3208, %v3632
    %v3634 = vpop.f32.mrf.mxu0
    %v3635 = vpop.f32.mrf.mxu0
    %v3636 = vadd.f32 %v3211, %v3635
    %v3637 = vpop.f32.mrf.mxu0
    %3638 = vmatprep.mubr.bf16.mxu0 %v2391
    %3639 = vmatmul.mubr.bf16.gmra.mxu0 %v2390
    %v3640 = vpop.f32.mrf.mxu0
    %v3641 = vadd.f32 %v3216, %v3640
    %v3642 = vpop.f32.mrf.mxu0
    %v3643 = vpop.f32.mrf.mxu0
    %v3644 = vadd.f32 %v3219, %v3643
    %v3645 = vpop.f32.mrf.mxu0
    %3646 = vmatprep.mubr.bf16.mxu0 %v2398
    %3647 = vmatmul.mubr.bf16.gmra.mxu0 %v2397
    %v3648 = vpop.f32.mrf.mxu0
    %v3649 = vadd.f32 %v3224, %v3648
    %v3650 = vpop.f32.mrf.mxu0
    %v3651 = vpop.f32.mrf.mxu0
    %v3652 = vadd.f32 %v3227, %v3651
    %v3653 = vpop.f32.mrf.mxu0
    %3654 = vmatprep.mubr.bf16.mxu0 %v2405
    %3655 = vmatmul.mubr.bf16.gmra.mxu0 %v2404
    %v3656 = vpop.f32.mrf.mxu0
    %v3657 = vadd.f32 %v3232, %v3656
    %v3658 = vpop.f32.mrf.mxu0
    %v3659 = vpop.f32.mrf.mxu0
    %v3660 = vadd.f32 %v3235, %v3659
    %v3661 = vpop.f32.mrf.mxu0
    %3662 = vmatprep.mubr.bf16.mxu0 %v2412
    %3663 = vmatmul.mubr.bf16.gmra.mxu0 %v2411
    %v3664 = vpop.f32.mrf.mxu0
    %v3665 = vadd.f32 %v3240, %v3664
    %v3666 = vpop.f32.mrf.mxu0
    %v3667 = vpop.f32.mrf.mxu0
    %v3668 = vadd.f32 %v3243, %v3667
    %v3669 = vpop.f32.mrf.mxu0
    %3670 = vmatprep.mubr.bf16.mxu0 %v2419
    %3671 = vmatmul.mubr.bf16.gmra.mxu0 %v2418
    %v3672 = vpop.f32.mrf.mxu0
    %v3673 = vadd.f32 %v3248, %v3672
    %v3674 = vpop.f32.mrf.mxu0
    %v3675 = vpop.f32.mrf.mxu0
    %v3676 = vadd.f32 %v3251, %v3675
    %v3677 = vpop.f32.mrf.mxu0
    %3678 = vmatprep.mubr.bf16.mxu0 %v2426
    %3679 = vmatmul.mubr.bf16.gmra.mxu0 %v2425
    %v3680 = vpop.f32.mrf.mxu0
    %v3681 = vadd.f32 %v3256, %v3680
    %v3682 = vpop.f32.mrf.mxu0
    %v3683 = vpop.f32.mrf.mxu0
    %v3684 = vadd.f32 %v3259, %v3683
    %v3685 = vpop.f32.mrf.mxu0
    %3686 = vmatprep.mubr.bf16.mxu0 %v2433
    %3687 = vmatmul.mubr.bf16.gmra.mxu0 %v2432
    %v3688 = vpop.f32.mrf.mxu0
    %v3689 = vadd.f32 %v3264, %v3688
    %v3690 = vpop.f32.mrf.mxu0
    %v3691 = vpop.f32.mrf.mxu0
    %v3692 = vadd.f32 %v3267, %v3691
    %v3693 = vpop.f32.mrf.mxu0
    %3694 = vmatprep.mubr.bf16.mxu0 %v2440
    %3695 = vmatmul.mubr.bf16.gmra.mxu0 %v2439
    %v3696 = vpop.f32.mrf.mxu0
    %v3697 = vadd.f32 %v3272, %v3696
    %v3698 = vpop.f32.mrf.mxu0
    %v3699 = vpop.f32.mrf.mxu0
    %v3700 = vadd.f32 %v3275, %v3699
    %v3701 = vpop.f32.mrf.mxu0
    %3702 = vmatprep.mubr.bf16.mxu0 %v2447
    %3703 = vmatmul.mubr.bf16.gmra.mxu0 %v2446
    %v3704 = vpop.f32.mrf.mxu0
    %v3705 = vadd.f32 %v3280, %v3704
    %v3706 = vpop.f32.mrf.mxu0
    %v3707 = vpop.f32.mrf.mxu0
    %v3708 = vadd.f32 %v3283, %v3707
    %v3709 = vpop.f32.mrf.mxu0
    %3710 = vmatprep.mubr.bf16.mxu0 %v2454
    %3711 = vmatmul.mubr.bf16.gmra.mxu0 %v2453
    %v3712 = vpop.f32.mrf.mxu0
    %v3713 = vadd.f32 %v3288, %v3712
    %v3714 = vpop.f32.mrf.mxu0
    %v3715 = vpop.f32.mrf.mxu0
    %v3716 = vadd.f32 %v3291, %v3715
    %v3717 = vpop.f32.mrf.mxu0
    %3718 = vmatprep.mubr.bf16.mxu0 %v2461
    %3719 = vmatmul.mubr.bf16.gmra.mxu0 %v2460
    %v3720 = vpop.f32.mrf.mxu0
    %v3721 = vadd.f32 %v3296, %v3720
    %v3722 = vpop.f32.mrf.mxu0
    %v3723 = vpop.f32.mrf.mxu0
    %v3724 = vadd.f32 %v3299, %v3723
    %v3725 = vpop.f32.mrf.mxu0
    %3726 = vmatprep.mubr.bf16.mxu0 %v2468
    %3727 = vmatmul.mubr.bf16.gmra.mxu0 %v2467
    %v3728 = vpop.f32.mrf.mxu0
    %v3729 = vadd.f32 %v3304, %v3728
    %v3730 = vpop.f32.mrf.mxu0
    %v3731 = vpop.f32.mrf.mxu0
    %v3732 = vadd.f32 %v3307, %v3731
    %v3733 = vpop.f32.mrf.mxu0
    %3734 = vmatprep.mubr.bf16.mxu0 %v2475
    %3735 = vmatmul.mubr.bf16.gmra.mxu0 %v2474
    %v3736 = vpop.f32.mrf.mxu0
    %v3737 = vadd.f32 %v3312, %v3736
    %v3738 = vpop.f32.mrf.mxu0
    %v3739 = vpop.f32.mrf.mxu0
    %v3740 = vadd.f32 %v3315, %v3739
    %v3741 = vpop.f32.mrf.mxu0
    %3742 = vmatprep.mubr.bf16.mxu0 %v2482
    %3743 = vmatmul.mubr.bf16.gmra.mxu0 %v2481
    %v3744 = vpop.f32.mrf.mxu0
    %v3745 = vadd.f32 %v3320, %v3744
    %v3746 = vpop.f32.mrf.mxu0
    %v3747 = vpop.f32.mrf.mxu0
    %v3748 = vadd.f32 %v3323, %v3747
    %v3749 = vpop.f32.mrf.mxu0
    %3750 = vmatprep.mubr.bf16.mxu0 %v2489
    %3751 = vmatmul.mubr.bf16.gmra.mxu0 %v2488
    %v3752 = vpop.f32.mrf.mxu0
    %v3753 = vadd.f32 %v3328, %v3752
    %v3754 = vpop.f32.mrf.mxu0
    %v3755 = vpop.f32.mrf.mxu0
    %v3756 = vadd.f32 %v3331, %v3755
    %v3757 = vpop.f32.mrf.mxu0
    %3758 = vmatprep.mubr.bf16.mxu0 %v2496
    %3759 = vmatmul.mubr.bf16.gmra.mxu0 %v2495
    %v3760 = vpop.f32.mrf.mxu0
    %v3761 = vadd.f32 %v3336, %v3760
    %v3762 = vpop.f32.mrf.mxu0
    %v3763 = vpop.f32.mrf.mxu0
    %v3764 = vadd.f32 %v3339, %v3763
    %v3765 = vpop.f32.mrf.mxu0
    %3766 = vmatprep.mubr.bf16.mxu0 %v2503
    %3767 = vmatmul.mubr.bf16.gmra.mxu0 %v2502
    %v3768 = vpop.f32.mrf.mxu0
    %v3769 = vadd.f32 %v3344, %v3768
    %v3770 = vpop.f32.mrf.mxu0
    %v3771 = vpop.f32.mrf.mxu0
    %v3772 = vadd.f32 %v3347, %v3771
    %v3773 = vpop.f32.mrf.mxu0
    %3774 = vmatprep.mubr.bf16.mxu0 %v2510
    %3775 = vmatmul.mubr.bf16.gmra.mxu0 %v2509
    %v3776 = vpop.f32.mrf.mxu0
    %v3777 = vadd.f32 %v3352, %v3776
    %v3778 = vpop.f32.mrf.mxu0
    %v3779 = vpop.f32.mrf.mxu0
    %v3780 = vadd.f32 %v3355, %v3779
    %v3781 = vpop.f32.mrf.mxu0
    %3782 = vmatprep.mubr.bf16.mxu0 %v2517
    %3783 = vmatmul.mubr.bf16.gmra.mxu0 %v2516
    %v3784 = vpop.f32.mrf.mxu0
    %v3785 = vadd.f32 %v3360, %v3784
    %v3786 = vpop.f32.mrf.mxu0
    %v3787 = vpop.f32.mrf.mxu0
    %v3788 = vadd.f32 %v3363, %v3787
    %v3789 = vpop.f32.mrf.mxu0
    %3790 = vmatprep.mubr.bf16.mxu0 %v2524
    %3791 = vmatmul.mubr.bf16.gmra.mxu0 %v2523
    %v3792 = vpop.f32.mrf.mxu0
    %v3793 = vadd.f32 %v3368, %v3792
    %v3794 = vpop.f32.mrf.mxu0
    %v3795 = vpop.f32.mrf.mxu0
    %v3796 = vadd.f32 %v3371, %v3795
    %v3797 = vpop.f32.mrf.mxu0
    %3798 = vmatprep.mubr.bf16.mxu0 %v2531
    %3799 = vmatmul.mubr.bf16.gmra.mxu0 %v2530
    %v3800 = vpop.f32.mrf.mxu0
    %v3801 = vadd.f32 %v3376, %v3800
    %v3802 = vpop.f32.mrf.mxu0
    %v3803 = vpop.f32.mrf.mxu0
    %v3804 = vadd.f32 %v3379, %v3803
    %v3805 = vpop.f32.mrf.mxu0
    %3806 = vmatprep.mubr.bf16.mxu0 %v2538
    %3807 = vmatmul.mubr.bf16.gmra.mxu0 %v2537
    %v3808 = vpop.f32.mrf.mxu0
    %v3809 = vadd.f32 %v3384, %v3808
    %v3810 = vpop.f32.mrf.mxu0
    %v3811 = vpop.f32.mrf.mxu0
    %v3812 = vadd.f32 %v3387, %v3811
    %v3813 = vpop.f32.mrf.mxu0
    %3814 = vmatprep.mubr.bf16.mxu0 %v2545
    %3815 = vmatmul.mubr.bf16.gmra.mxu0 %v2544
    %v3816 = vpop.f32.mrf.mxu0
    %v3817 = vadd.f32 %v3392, %v3816
    %v3818 = vpop.f32.mrf.mxu0
    %v3819 = vpop.f32.mrf.mxu0
    %v3820 = vadd.f32 %v3395, %v3819
    %v3821 = vpop.f32.mrf.mxu0
    %3822 = vmatprep.mubr.bf16.mxu0 %v2552
    %3823 = vmatmul.mubr.bf16.gmra.mxu0 %v2551
    %v3824 = vpop.f32.mrf.mxu0
    %v3825 = vadd.f32 %v3400, %v3824
    %v3826 = vpop.f32.mrf.mxu0
    %v3827 = vpop.f32.mrf.mxu0
    %v3828 = vadd.f32 %v3403, %v3827
    %v3829 = vpop.f32.mrf.mxu0
    %3830 = vmatprep.mubr.bf16.mxu0 %v2559
    %3831 = vmatmul.mubr.bf16.gmra.mxu0 %v2558
    %v3832 = vpop.f32.mrf.mxu0
    %v3833 = vadd.f32 %v3408, %v3832
    %v3834 = vpop.f32.mrf.mxu0
    %v3835 = vpop.f32.mrf.mxu0
    %v3836 = vadd.f32 %v3411, %v3835
    %v3837 = vpop.f32.mrf.mxu0
    %3838 = vmatprep.mubr.bf16.mxu0 %v2566
    %3839 = vmatmul.mubr.bf16.gmra.mxu0 %v2565
    %v3840 = vpop.f32.mrf.mxu0
    %v3841 = vadd.f32 %v3416, %v3840
    %v3842 = vpop.f32.mrf.mxu0
    %v3843 = vpop.f32.mrf.mxu0
    %v3844 = vadd.f32 %v3419, %v3843
    %v3845 = vpop.f32.mrf.mxu0
    %3846 = vmatprep.mubr.bf16.mxu0 %v2573
    %3847 = vmatmul.mubr.bf16.gmra.mxu0 %v2572
    %v3848 = vpop.f32.mrf.mxu0
    %v3849 = vadd.f32 %v3424, %v3848
    %v3850 = vpop.f32.mrf.mxu0
    %v3851 = vpop.f32.mrf.mxu0
    %v3852 = vadd.f32 %v3427, %v3851
    %v3853 = vpop.f32.mrf.mxu0
    %3854 = vmatprep.mubr.bf16.mxu0 %v2580
    %3855 = vmatmul.mubr.bf16.gmra.mxu0 %v2579
    %v3856 = vpop.f32.mrf.mxu0
    %v3857 = vadd.f32 %v3432, %v3856
    %v3858 = vpop.f32.mrf.mxu0
    %v3859 = vpop.f32.mrf.mxu0
    %v3860 = vadd.f32 %v3435, %v3859
    %v3861 = vpop.f32.mrf.mxu0
    %3862 = vmatprep.mubr.bf16.mxu0 %v2587
    %3863 = vmatmul.mubr.bf16.gmra.mxu0 %v2586
    %v3864 = vpop.f32.mrf.mxu0
    %v3865 = vadd.f32 %v3440, %v3864
    %v3866 = vpop.f32.mrf.mxu0
    %v3867 = vpop.f32.mrf.mxu0
    %v3868 = vadd.f32 %v3443, %v3867
    %v3869 = vpop.f32.mrf.mxu0
    %3870 = vmatprep.mubr.bf16.mxu0 %v2594
    %3871 = vmatmul.mubr.bf16.gmra.mxu0 %v2593
    %v3872 = vpop.f32.mrf.mxu0
    %v3873 = vadd.f32 %v3448, %v3872
    %v3874 = vpop.f32.mrf.mxu0
    %v3875 = vpop.f32.mrf.mxu0
    %v3876 = vadd.f32 %v3451, %v3875
    %v3877 = vpop.f32.mrf.mxu0
    %3878 = vmatprep.mubr.bf16.mxu0 %v2601
    %3879 = vmatmul.mubr.bf16.gmra.mxu0 %v2600
    %v3880 = vpop.f32.mrf.mxu0
    %v3881 = vadd.f32 %v3456, %v3880
    %v3882 = vpop.f32.mrf.mxu0
    %v3883 = vpop.f32.mrf.mxu0
    %v3884 = vadd.f32 %v3459, %v3883
    %v3885 = vpop.f32.mrf.mxu0
    %3886 = vmatprep.mubr.bf16.mxu0 %v2608
    %3887 = vmatmul.mubr.bf16.gmra.mxu0 %v2607
    %v3888 = vpop.f32.mrf.mxu0
    %v3889 = vadd.f32 %v3464, %v3888
    %v3890 = vpop.f32.mrf.mxu0
    %v3891 = vpop.f32.mrf.mxu0
    %v3892 = vadd.f32 %v3467, %v3891
    %v3893 = vpop.f32.mrf.mxu0
    %3894 = vmatprep.mubr.bf16.mxu0 %v2615
    %3895 = vmatmul.mubr.bf16.gmra.mxu0 %v2614
    %v3896 = vpop.f32.mrf.mxu0
    %v3897 = vadd.f32 %v3472, %v3896
    %v3898 = vpop.f32.mrf.mxu0
    %v3899 = vpop.f32.mrf.mxu0
    %v3900 = vadd.f32 %v3475, %v3899
    %v3901 = vpop.f32.mrf.mxu0
    %3902 = vmatprep.mubr.bf16.mxu0 %v2622
    %3903 = vmatmul.mubr.bf16.gmra.mxu0 %v2621
    %v3904 = vpop.f32.mrf.mxu0
    %v3905 = vadd.f32 %v3480, %v3904
    %v3906 = vpop.f32.mrf.mxu0
    %v3907 = vpop.f32.mrf.mxu0
    %v3908 = vadd.f32 %v3483, %v3907
    %v3909 = vpop.f32.mrf.mxu0
    %3910 = vmatprep.mubr.bf16.mxu0 %v2629
    %3911 = vmatmul.mubr.bf16.gmra.mxu0 %v2628
    %v3912 = vpop.f32.mrf.mxu0
    %v3913 = vadd.f32 %v3488, %v3912
    %v3914 = vpop.f32.mrf.mxu0
    %v3915 = vpop.f32.mrf.mxu0
    %v3916 = vadd.f32 %v3491, %v3915
    %v3917 = vpop.f32.mrf.mxu0
    %3918 = vmatprep.mubr.bf16.mxu0 %v2636
    %3919 = vmatmul.mubr.bf16.gmra.mxu0 %v2635
    %v3920 = vpop.f32.mrf.mxu0
    %v3921 = vadd.f32 %v3496, %v3920
    %v3922 = vpop.f32.mrf.mxu0
    %v3923 = vpop.f32.mrf.mxu0
    %v3924 = vadd.f32 %v3499, %v3923
    %v3925 = vpop.f32.mrf.mxu0
    %3926 = vmatprep.mubr.bf16.mxu0 %v2643
    %3927 = vmatmul.mubr.bf16.gmra.mxu0 %v2642
    %v3928 = vpop.f32.mrf.mxu0
    %v3929 = vadd.f32 %v3504, %v3928
    %v3930 = vpop.f32.mrf.mxu0
    %v3931 = vpop.f32.mrf.mxu0
    %v3932 = vadd.f32 %v3507, %v3931
    %v3933 = vpop.f32.mrf.mxu0
    %3934 = vmatprep.mubr.bf16.mxu0 %v2650
    %3935 = vmatmul.mubr.bf16.gmra.mxu0 %v2649
    %v3936 = vpop.f32.mrf.mxu0
    %v3937 = vadd.f32 %v3512, %v3936
    %v3938 = vpop.f32.mrf.mxu0
    %v3939 = vpop.f32.mrf.mxu0
    %v3940 = vadd.f32 %v3515, %v3939
    %v3941 = vpop.f32.mrf.mxu0
    %3942 = vmatprep.mubr.bf16.mxu0 %v2657
    %3943 = vmatmul.mubr.bf16.gmra.mxu0 %v2656
    %v3944 = vpop.f32.mrf.mxu0
    %v3945 = vadd.f32 %v3520, %v3944
    %v3946 = vpop.f32.mrf.mxu0
    %v3947 = vpop.f32.mrf.mxu0
    %v3948 = vadd.f32 %v3523, %v3947
    %v3949 = vpop.f32.mrf.mxu0
    %3950 = vmatprep.mubr.bf16.mxu0 %v2664
    %3951 = vmatmul.mubr.bf16.gmra.mxu0 %v2663
    %v3952 = vpop.f32.mrf.mxu0
    %v3953 = vadd.f32 %v3528, %v3952
    %v3954 = vpop.f32.mrf.mxu0
    %v3955 = vpop.f32.mrf.mxu0
    %v3956 = vadd.f32 %v3531, %v3955
    %v3957 = vpop.f32.mrf.mxu0
    %3958 = vmatprep.mubr.bf16.mxu0 %v2671
    %3959 = vmatmul.mubr.bf16.gmra.mxu0 %v2670
    %v3960 = vpop.f32.mrf.mxu0
    %v3961 = vadd.f32 %v3536, %v3960
    %v3962 = vpop.f32.mrf.mxu0
    %v3963 = vpop.f32.mrf.mxu0
    %v3964 = vadd.f32 %v3539, %v3963
    %v3965 = vpop.f32.mrf.mxu0
    %3966 = vdwg.mxu0
    %3967 = vmatprep.subr.bf16.mxu0 0
    %3968 = vmatpush1.bf16.msra.mxu0 %v852
    %3969 = vmatprep.subr.bf16.mxu0 0
    %3970 = vmatpush1.bf16.msra.mxu0 %v851
    %3971 = vmatprep.subr.bf16.mxu0 0
    %3972 = vmatpush1.bf16.msra.mxu0 %v850
    %3973 = vmatprep.subr.bf16.mxu0 0
    %3974 = vmatpush1.bf16.msra.mxu0 %v849
    %3975 = vmatprep.subr.bf16.mxu0 0
    %3976 = vmatpush1.bf16.msra.mxu0 %v848
    %3977 = vmatprep.subr.bf16.mxu0 0
    %3978 = vmatpush1.bf16.msra.mxu0 %v847
    %3979 = vmatprep.subr.bf16.mxu0 0
    %3980 = vmatpush1.bf16.msra.mxu0 %v846
    %3981 = vmatprep.subr.bf16.mxu0 0
    %3982 = vmatpush1.bf16.msra.mxu0 %v845
    %3983 = vmatprep.subr.bf16.mxu0 0
    %3984 = vmatpush2.bf16.msra.mxu0 %v860
    %3985 = vmatprep.subr.bf16.mxu0 0
    %3986 = vmatpush2.bf16.msra.mxu0 %v859
    %3987 = vmatprep.subr.bf16.mxu0 0
    %3988 = vmatpush2.bf16.msra.mxu0 %v858
    %3989 = vmatprep.subr.bf16.mxu0 0
    %3990 = vmatpush2.bf16.msra.mxu0 %v857
    %3991 = vmatprep.subr.bf16.mxu0 0
    %3992 = vmatpush2.bf16.msra.mxu0 %v856
    %3993 = vmatprep.subr.bf16.mxu0 0
    %3994 = vmatpush2.bf16.msra.mxu0 %v855
    %3995 = vmatprep.subr.bf16.mxu0 0
    %3996 = vmatpush2.bf16.msra.mxu0 %v854
    %3997 = vmatprep.subr.bf16.mxu0 0
    %3998 = vmatpush2.bf16.msra.mxu0 %v853
    %3999 = vmatprep.mubr.bf16.mxu0 %v2337
    %4000 = vmatmul.mubr.bf16.gmra.mxu0 %v2336
    %v4001 = vpop.f32.mrf.mxu0
    %v4002 = vadd.f32 %v3577, %v4001
    %v4003 = vpop.f32.mrf.mxu0
    %v4004 = vpop.f32.mrf.mxu0
    %v4005 = vadd.f32 %v3580, %v4004
    %v4006 = vpop.f32.mrf.mxu0
    %4007 = vmatprep.mubr.bf16.mxu0 %v2344
    %4008 = vmatmul.mubr.bf16.gmra.mxu0 %v2343
    %v4009 = vpop.f32.mrf.mxu0
    %v4010 = vadd.f32 %v3585, %v4009
    %v4011 = vpop.f32.mrf.mxu0
    %v4012 = vpop.f32.mrf.mxu0
    %v4013 = vadd.f32 %v3588, %v4012
    %v4014 = vpop.f32.mrf.mxu0
    %4015 = vmatprep.mubr.bf16.mxu0 %v2351
    %4016 = vmatmul.mubr.bf16.gmra.mxu0 %v2350
    %v4017 = vpop.f32.mrf.mxu0
    %v4018 = vadd.f32 %v3593, %v4017
    %v4019 = vpop.f32.mrf.mxu0
    %v4020 = vpop.f32.mrf.mxu0
    %v4021 = vadd.f32 %v3596, %v4020
    %v4022 = vpop.f32.mrf.mxu0
    %4023 = vmatprep.mubr.bf16.mxu0 %v2358
    %4024 = vmatmul.mubr.bf16.gmra.mxu0 %v2357
    %v4025 = vpop.f32.mrf.mxu0
    %v4026 = vadd.f32 %v3601, %v4025
    %v4027 = vpop.f32.mrf.mxu0
    %v4028 = vpop.f32.mrf.mxu0
    %v4029 = vadd.f32 %v3604, %v4028
    %v4030 = vpop.f32.mrf.mxu0
    %4031 = vmatprep.mubr.bf16.mxu0 %v2365
    %4032 = vmatmul.mubr.bf16.gmra.mxu0 %v2364
    %v4033 = vpop.f32.mrf.mxu0
    %v4034 = vadd.f32 %v3609, %v4033
    %v4035 = vpop.f32.mrf.mxu0
    %v4036 = vpop.f32.mrf.mxu0
    %v4037 = vadd.f32 %v3612, %v4036
    %v4038 = vpop.f32.mrf.mxu0
    %4039 = vmatprep.mubr.bf16.mxu0 %v2372
    %4040 = vmatmul.mubr.bf16.gmra.mxu0 %v2371
    %v4041 = vpop.f32.mrf.mxu0
    %v4042 = vadd.f32 %v3617, %v4041
    %v4043 = vpop.f32.mrf.mxu0
    %v4044 = vpop.f32.mrf.mxu0
    %v4045 = vadd.f32 %v3620, %v4044
    %v4046 = vpop.f32.mrf.mxu0
    %4047 = vmatprep.mubr.bf16.mxu0 %v2379
    %4048 = vmatmul.mubr.bf16.gmra.mxu0 %v2378
    %v4049 = vpop.f32.mrf.mxu0
    %v4050 = vadd.f32 %v3625, %v4049
    %v4051 = vpop.f32.mrf.mxu0
    %v4052 = vpop.f32.mrf.mxu0
    %v4053 = vadd.f32 %v3628, %v4052
    %v4054 = vpop.f32.mrf.mxu0
    %4055 = vmatprep.mubr.bf16.mxu0 %v2386
    %4056 = vmatmul.mubr.bf16.gmra.mxu0 %v2385
    %v4057 = vpop.f32.mrf.mxu0
    %v4058 = vadd.f32 %v3633, %v4057
    %v4059 = vpop.f32.mrf.mxu0
    %v4060 = vpop.f32.mrf.mxu0
    %v4061 = vadd.f32 %v3636, %v4060
    %v4062 = vpop.f32.mrf.mxu0
    %4063 = vmatprep.mubr.bf16.mxu0 %v2393
    %4064 = vmatmul.mubr.bf16.gmra.mxu0 %v2392
    %v4065 = vpop.f32.mrf.mxu0
    %v4066 = vadd.f32 %v3641, %v4065
    %v4067 = vpop.f32.mrf.mxu0
    %v4068 = vpop.f32.mrf.mxu0
    %v4069 = vadd.f32 %v3644, %v4068
    %v4070 = vpop.f32.mrf.mxu0
    %4071 = vmatprep.mubr.bf16.mxu0 %v2400
    %4072 = vmatmul.mubr.bf16.gmra.mxu0 %v2399
    %v4073 = vpop.f32.mrf.mxu0
    %v4074 = vadd.f32 %v3649, %v4073
    %v4075 = vpop.f32.mrf.mxu0
    %v4076 = vpop.f32.mrf.mxu0
    %v4077 = vadd.f32 %v3652, %v4076
    %v4078 = vpop.f32.mrf.mxu0
    %4079 = vmatprep.mubr.bf16.mxu0 %v2407
    %4080 = vmatmul.mubr.bf16.gmra.mxu0 %v2406
    %v4081 = vpop.f32.mrf.mxu0
    %v4082 = vadd.f32 %v3657, %v4081
    %v4083 = vpop.f32.mrf.mxu0
    %v4084 = vpop.f32.mrf.mxu0
    %v4085 = vadd.f32 %v3660, %v4084
    %v4086 = vpop.f32.mrf.mxu0
    %4087 = vmatprep.mubr.bf16.mxu0 %v2414
    %4088 = vmatmul.mubr.bf16.gmra.mxu0 %v2413
    %v4089 = vpop.f32.mrf.mxu0
    %v4090 = vadd.f32 %v3665, %v4089
    %v4091 = vpop.f32.mrf.mxu0
    %v4092 = vpop.f32.mrf.mxu0
    %v4093 = vadd.f32 %v3668, %v4092
    %v4094 = vpop.f32.mrf.mxu0
    %4095 = vmatprep.mubr.bf16.mxu0 %v2421
    %4096 = vmatmul.mubr.bf16.gmra.mxu0 %v2420
    %v4097 = vpop.f32.mrf.mxu0
    %v4098 = vadd.f32 %v3673, %v4097
    %v4099 = vpop.f32.mrf.mxu0
    %v4100 = vpop.f32.mrf.mxu0
    %v4101 = vadd.f32 %v3676, %v4100
    %v4102 = vpop.f32.mrf.mxu0
    %4103 = vmatprep.mubr.bf16.mxu0 %v2428
    %4104 = vmatmul.mubr.bf16.gmra.mxu0 %v2427
    %v4105 = vpop.f32.mrf.mxu0
    %v4106 = vadd.f32 %v3681, %v4105
    %v4107 = vpop.f32.mrf.mxu0
    %v4108 = vpop.f32.mrf.mxu0
    %v4109 = vadd.f32 %v3684, %v4108
    %v4110 = vpop.f32.mrf.mxu0
    %4111 = vmatprep.mubr.bf16.mxu0 %v2435
    %4112 = vmatmul.mubr.bf16.gmra.mxu0 %v2434
    %v4113 = vpop.f32.mrf.mxu0
    %v4114 = vadd.f32 %v3689, %v4113
    %v4115 = vpop.f32.mrf.mxu0
    %v4116 = vpop.f32.mrf.mxu0
    %v4117 = vadd.f32 %v3692, %v4116
    %v4118 = vpop.f32.mrf.mxu0
    %4119 = vmatprep.mubr.bf16.mxu0 %v2442
    %4120 = vmatmul.mubr.bf16.gmra.mxu0 %v2441
    %v4121 = vpop.f32.mrf.mxu0
    %v4122 = vadd.f32 %v3697, %v4121
    %v4123 = vpop.f32.mrf.mxu0
    %v4124 = vpop.f32.mrf.mxu0
    %v4125 = vadd.f32 %v3700, %v4124
    %v4126 = vpop.f32.mrf.mxu0
    %4127 = vmatprep.mubr.bf16.mxu0 %v2449
    %4128 = vmatmul.mubr.bf16.gmra.mxu0 %v2448
    %v4129 = vpop.f32.mrf.mxu0
    %v4130 = vadd.f32 %v3705, %v4129
    %v4131 = vpop.f32.mrf.mxu0
    %v4132 = vpop.f32.mrf.mxu0
    %v4133 = vadd.f32 %v3708, %v4132
    %v4134 = vpop.f32.mrf.mxu0
    %4135 = vmatprep.mubr.bf16.mxu0 %v2456
    %4136 = vmatmul.mubr.bf16.gmra.mxu0 %v2455
    %v4137 = vpop.f32.mrf.mxu0
    %v4138 = vadd.f32 %v3713, %v4137
    %v4139 = vpop.f32.mrf.mxu0
    %v4140 = vpop.f32.mrf.mxu0
    %v4141 = vadd.f32 %v3716, %v4140
    %v4142 = vpop.f32.mrf.mxu0
    %4143 = vmatprep.mubr.bf16.mxu0 %v2463
    %4144 = vmatmul.mubr.bf16.gmra.mxu0 %v2462
    %v4145 = vpop.f32.mrf.mxu0
    %v4146 = vadd.f32 %v3721, %v4145
    %v4147 = vpop.f32.mrf.mxu0
    %v4148 = vpop.f32.mrf.mxu0
    %v4149 = vadd.f32 %v3724, %v4148
    %v4150 = vpop.f32.mrf.mxu0
    %4151 = vmatprep.mubr.bf16.mxu0 %v2470
    %4152 = vmatmul.mubr.bf16.gmra.mxu0 %v2469
    %v4153 = vpop.f32.mrf.mxu0
    %v4154 = vadd.f32 %v3729, %v4153
    %v4155 = vpop.f32.mrf.mxu0
    %v4156 = vpop.f32.mrf.mxu0
    %v4157 = vadd.f32 %v3732, %v4156
    %v4158 = vpop.f32.mrf.mxu0
    %4159 = vmatprep.mubr.bf16.mxu0 %v2477
    %4160 = vmatmul.mubr.bf16.gmra.mxu0 %v2476
    %v4161 = vpop.f32.mrf.mxu0
    %v4162 = vadd.f32 %v3737, %v4161
    %v4163 = vpop.f32.mrf.mxu0
    %v4164 = vpop.f32.mrf.mxu0
    %v4165 = vadd.f32 %v3740, %v4164
    %v4166 = vpop.f32.mrf.mxu0
    %4167 = vmatprep.mubr.bf16.mxu0 %v2484
    %4168 = vmatmul.mubr.bf16.gmra.mxu0 %v2483
    %v4169 = vpop.f32.mrf.mxu0
    %v4170 = vadd.f32 %v3745, %v4169
    %v4171 = vpop.f32.mrf.mxu0
    %v4172 = vpop.f32.mrf.mxu0
    %v4173 = vadd.f32 %v3748, %v4172
    %v4174 = vpop.f32.mrf.mxu0
    %4175 = vmatprep.mubr.bf16.mxu0 %v2491
    %4176 = vmatmul.mubr.bf16.gmra.mxu0 %v2490
    %v4177 = vpop.f32.mrf.mxu0
    %v4178 = vadd.f32 %v3753, %v4177
    %v4179 = vpop.f32.mrf.mxu0
    %v4180 = vpop.f32.mrf.mxu0
    %v4181 = vadd.f32 %v3756, %v4180
    %v4182 = vpop.f32.mrf.mxu0
    %4183 = vmatprep.mubr.bf16.mxu0 %v2498
    %4184 = vmatmul.mubr.bf16.gmra.mxu0 %v2497
    %v4185 = vpop.f32.mrf.mxu0
    %v4186 = vadd.f32 %v3761, %v4185
    %v4187 = vpop.f32.mrf.mxu0
    %v4188 = vpop.f32.mrf.mxu0
    %v4189 = vadd.f32 %v3764, %v4188
    %v4190 = vpop.f32.mrf.mxu0
    %4191 = vmatprep.mubr.bf16.mxu0 %v2505
    %4192 = vmatmul.mubr.bf16.gmra.mxu0 %v2504
    %v4193 = vpop.f32.mrf.mxu0
    %v4194 = vadd.f32 %v3769, %v4193
    %v4195 = vpop.f32.mrf.mxu0
    %v4196 = vpop.f32.mrf.mxu0
    %v4197 = vadd.f32 %v3772, %v4196
    %v4198 = vpop.f32.mrf.mxu0
    %4199 = vmatprep.mubr.bf16.mxu0 %v2512
    %4200 = vmatmul.mubr.bf16.gmra.mxu0 %v2511
    %v4201 = vpop.f32.mrf.mxu0
    %v4202 = vadd.f32 %v3777, %v4201
    %v4203 = vpop.f32.mrf.mxu0
    %v4204 = vpop.f32.mrf.mxu0
    %v4205 = vadd.f32 %v3780, %v4204
    %v4206 = vpop.f32.mrf.mxu0
    %4207 = vmatprep.mubr.bf16.mxu0 %v2519
    %4208 = vmatmul.mubr.bf16.gmra.mxu0 %v2518
    %v4209 = vpop.f32.mrf.mxu0
    %v4210 = vadd.f32 %v3785, %v4209
    %v4211 = vpop.f32.mrf.mxu0
    %v4212 = vpop.f32.mrf.mxu0
    %v4213 = vadd.f32 %v3788, %v4212
    %v4214 = vpop.f32.mrf.mxu0
    %4215 = vmatprep.mubr.bf16.mxu0 %v2526
    %4216 = vmatmul.mubr.bf16.gmra.mxu0 %v2525
    %v4217 = vpop.f32.mrf.mxu0
    %v4218 = vadd.f32 %v3793, %v4217
    %v4219 = vpop.f32.mrf.mxu0
    %v4220 = vpop.f32.mrf.mxu0
    %v4221 = vadd.f32 %v3796, %v4220
    %v4222 = vpop.f32.mrf.mxu0
    %4223 = vmatprep.mubr.bf16.mxu0 %v2533
    %4224 = vmatmul.mubr.bf16.gmra.mxu0 %v2532
    %v4225 = vpop.f32.mrf.mxu0
    %v4226 = vadd.f32 %v3801, %v4225
    %v4227 = vpop.f32.mrf.mxu0
    %v4228 = vpop.f32.mrf.mxu0
    %v4229 = vadd.f32 %v3804, %v4228
    %v4230 = vpop.f32.mrf.mxu0
    %4231 = vmatprep.mubr.bf16.mxu0 %v2540
    %4232 = vmatmul.mubr.bf16.gmra.mxu0 %v2539
    %v4233 = vpop.f32.mrf.mxu0
    %v4234 = vadd.f32 %v3809, %v4233
    %v4235 = vpop.f32.mrf.mxu0
    %v4236 = vpop.f32.mrf.mxu0
    %v4237 = vadd.f32 %v3812, %v4236
    %v4238 = vpop.f32.mrf.mxu0
    %4239 = vmatprep.mubr.bf16.mxu0 %v2547
    %4240 = vmatmul.mubr.bf16.gmra.mxu0 %v2546
    %v4241 = vpop.f32.mrf.mxu0
    %v4242 = vadd.f32 %v3817, %v4241
    %v4243 = vpop.f32.mrf.mxu0
    %v4244 = vpop.f32.mrf.mxu0
    %v4245 = vadd.f32 %v3820, %v4244
    %v4246 = vpop.f32.mrf.mxu0
    %4247 = vmatprep.mubr.bf16.mxu0 %v2554
    %4248 = vmatmul.mubr.bf16.gmra.mxu0 %v2553
    %v4249 = vpop.f32.mrf.mxu0
    %v4250 = vadd.f32 %v3825, %v4249
    %v4251 = vpop.f32.mrf.mxu0
    %v4252 = vpop.f32.mrf.mxu0
    %v4253 = vadd.f32 %v3828, %v4252
    %v4254 = vpop.f32.mrf.mxu0
    %4255 = vmatprep.mubr.bf16.mxu0 %v2561
    %4256 = vmatmul.mubr.bf16.gmra.mxu0 %v2560
    %v4257 = vpop.f32.mrf.mxu0
    %v4258 = vadd.f32 %v3833, %v4257
    %v4259 = vpop.f32.mrf.mxu0
    %v4260 = vpop.f32.mrf.mxu0
    %v4261 = vadd.f32 %v3836, %v4260
    %v4262 = vpop.f32.mrf.mxu0
    %4263 = vmatprep.mubr.bf16.mxu0 %v2568
    %4264 = vmatmul.mubr.bf16.gmra.mxu0 %v2567
    %v4265 = vpop.f32.mrf.mxu0
    %v4266 = vadd.f32 %v3841, %v4265
    %v4267 = vpop.f32.mrf.mxu0
    %v4268 = vpop.f32.mrf.mxu0
    %v4269 = vadd.f32 %v3844, %v4268
    %v4270 = vpop.f32.mrf.mxu0
    %4271 = vmatprep.mubr.bf16.mxu0 %v2575
    %4272 = vmatmul.mubr.bf16.gmra.mxu0 %v2574
    %v4273 = vpop.f32.mrf.mxu0
    %v4274 = vadd.f32 %v3849, %v4273
    %v4275 = vpop.f32.mrf.mxu0
    %v4276 = vpop.f32.mrf.mxu0
    %v4277 = vadd.f32 %v3852, %v4276
    %v4278 = vpop.f32.mrf.mxu0
    %4279 = vmatprep.mubr.bf16.mxu0 %v2582
    %4280 = vmatmul.mubr.bf16.gmra.mxu0 %v2581
    %v4281 = vpop.f32.mrf.mxu0
    %v4282 = vadd.f32 %v3857, %v4281
    %v4283 = vpop.f32.mrf.mxu0
    %v4284 = vpop.f32.mrf.mxu0
    %v4285 = vadd.f32 %v3860, %v4284
    %v4286 = vpop.f32.mrf.mxu0
    %4287 = vmatprep.mubr.bf16.mxu0 %v2589
    %4288 = vmatmul.mubr.bf16.gmra.mxu0 %v2588
    %v4289 = vpop.f32.mrf.mxu0
    %v4290 = vadd.f32 %v3865, %v4289
    %v4291 = vpop.f32.mrf.mxu0
    %v4292 = vpop.f32.mrf.mxu0
    %v4293 = vadd.f32 %v3868, %v4292
    %v4294 = vpop.f32.mrf.mxu0
    %4295 = vmatprep.mubr.bf16.mxu0 %v2596
    %4296 = vmatmul.mubr.bf16.gmra.mxu0 %v2595
    %v4297 = vpop.f32.mrf.mxu0
    %v4298 = vadd.f32 %v3873, %v4297
    %v4299 = vpop.f32.mrf.mxu0
    %v4300 = vpop.f32.mrf.mxu0
    %v4301 = vadd.f32 %v3876, %v4300
    %v4302 = vpop.f32.mrf.mxu0
    %4303 = vmatprep.mubr.bf16.mxu0 %v2603
    %4304 = vmatmul.mubr.bf16.gmra.mxu0 %v2602
    %v4305 = vpop.f32.mrf.mxu0
    %v4306 = vadd.f32 %v3881, %v4305
    %v4307 = vpop.f32.mrf.mxu0
    %v4308 = vpop.f32.mrf.mxu0
    %v4309 = vadd.f32 %v3884, %v4308
    %v4310 = vpop.f32.mrf.mxu0
    %4311 = vmatprep.mubr.bf16.mxu0 %v2610
    %4312 = vmatmul.mubr.bf16.gmra.mxu0 %v2609
    %v4313 = vpop.f32.mrf.mxu0
    %v4314 = vadd.f32 %v3889, %v4313
    %v4315 = vpop.f32.mrf.mxu0
    %v4316 = vpop.f32.mrf.mxu0
    %v4317 = vadd.f32 %v3892, %v4316
    %v4318 = vpop.f32.mrf.mxu0
    %4319 = vmatprep.mubr.bf16.mxu0 %v2617
    %4320 = vmatmul.mubr.bf16.gmra.mxu0 %v2616
    %v4321 = vpop.f32.mrf.mxu0
    %v4322 = vadd.f32 %v3897, %v4321
    %v4323 = vpop.f32.mrf.mxu0
    %v4324 = vpop.f32.mrf.mxu0
    %v4325 = vadd.f32 %v3900, %v4324
    %v4326 = vpop.f32.mrf.mxu0
    %4327 = vmatprep.mubr.bf16.mxu0 %v2624
    %4328 = vmatmul.mubr.bf16.gmra.mxu0 %v2623
    %v4329 = vpop.f32.mrf.mxu0
    %v4330 = vadd.f32 %v3905, %v4329
    %v4331 = vpop.f32.mrf.mxu0
    %v4332 = vpop.f32.mrf.mxu0
    %v4333 = vadd.f32 %v3908, %v4332
    %v4334 = vpop.f32.mrf.mxu0
    %4335 = vmatprep.mubr.bf16.mxu0 %v2631
    %4336 = vmatmul.mubr.bf16.gmra.mxu0 %v2630
    %v4337 = vpop.f32.mrf.mxu0
    %v4338 = vadd.f32 %v3913, %v4337
    %v4339 = vpop.f32.mrf.mxu0
    %v4340 = vpop.f32.mrf.mxu0
    %v4341 = vadd.f32 %v3916, %v4340
    %v4342 = vpop.f32.mrf.mxu0
    %4343 = vmatprep.mubr.bf16.mxu0 %v2638
    %4344 = vmatmul.mubr.bf16.gmra.mxu0 %v2637
    %v4345 = vpop.f32.mrf.mxu0
    %v4346 = vadd.f32 %v3921, %v4345
    %v4347 = vpop.f32.mrf.mxu0
    %v4348 = vpop.f32.mrf.mxu0
    %v4349 = vadd.f32 %v3924, %v4348
    %v4350 = vpop.f32.mrf.mxu0
    %4351 = vmatprep.mubr.bf16.mxu0 %v2645
    %4352 = vmatmul.mubr.bf16.gmra.mxu0 %v2644
    %v4353 = vpop.f32.mrf.mxu0
    %v4354 = vadd.f32 %v3929, %v4353
    %v4355 = vpop.f32.mrf.mxu0
    %v4356 = vpop.f32.mrf.mxu0
    %v4357 = vadd.f32 %v3932, %v4356
    %v4358 = vpop.f32.mrf.mxu0
    %4359 = vmatprep.mubr.bf16.mxu0 %v2652
    %4360 = vmatmul.mubr.bf16.gmra.mxu0 %v2651
    %v4361 = vpop.f32.mrf.mxu0
    %v4362 = vadd.f32 %v3937, %v4361
    %v4363 = vpop.f32.mrf.mxu0
    %v4364 = vpop.f32.mrf.mxu0
    %v4365 = vadd.f32 %v3940, %v4364
    %v4366 = vpop.f32.mrf.mxu0
    %4367 = vmatprep.mubr.bf16.mxu0 %v2659
    %4368 = vmatmul.mubr.bf16.gmra.mxu0 %v2658
    %v4369 = vpop.f32.mrf.mxu0
    %v4370 = vadd.f32 %v3945, %v4369
    %v4371 = vpop.f32.mrf.mxu0
    %v4372 = vpop.f32.mrf.mxu0
    %v4373 = vadd.f32 %v3948, %v4372
    %v4374 = vpop.f32.mrf.mxu0
    %4375 = vmatprep.mubr.bf16.mxu0 %v2666
    %4376 = vmatmul.mubr.bf16.gmra.mxu0 %v2665
    %v4377 = vpop.f32.mrf.mxu0
    %v4378 = vadd.f32 %v3953, %v4377
    %v4379 = vpop.f32.mrf.mxu0
    %v4380 = vpop.f32.mrf.mxu0
    %v4381 = vadd.f32 %v3956, %v4380
    %v4382 = vpop.f32.mrf.mxu0
    %4383 = vmatprep.mubr.bf16.mxu0 %v2673
    %4384 = vmatmul.mubr.bf16.gmra.mxu0 %v2672
    %v4385 = vpop.f32.mrf.mxu0
    %v4386 = vadd.f32 %v3961, %v4385
    %v4387 = vpop.f32.mrf.mxu0
    %v4388 = vpop.f32.mrf.mxu0
    %v4389 = vadd.f32 %v3964, %v4388
    %v4390 = vpop.f32.mrf.mxu0
    %4391 = vdwg.mxu0
    %4392 = vmatprep.subr.bf16.mxu0 0
    %4393 = vmatpush1.bf16.msra.mxu0 0
    %4394 = vmatprep.subr.bf16.mxu0 0
    %4395 = vmatpush1.bf16.msra.mxu0 0
    %4396 = vmatprep.subr.bf16.mxu0 0
    %4397 = vmatpush1.bf16.msra.mxu0 0
    %4398 = vmatprep.subr.bf16.mxu0 0
    %4399 = vmatpush1.bf16.msra.mxu0 0
    %4400 = vmatprep.subr.bf16.mxu0 0
    %4401 = vmatpush1.bf16.msra.mxu0 0
    %4402 = vmatprep.subr.bf16.mxu0 0
    %4403 = vmatpush1.bf16.msra.mxu0 0
    %4404 = vmatprep.subr.bf16.mxu0 0
    %4405 = vmatpush1.bf16.msra.mxu0 0
    %4406 = vmatprep.subr.bf16.mxu0 0
    %4407 = vmatpush1.bf16.msra.mxu0 %v861
    %4408 = vmatprep.subr.bf16.mxu0 0
    %4409 = vmatpush2.bf16.msra.mxu0 0
    %4410 = vmatprep.subr.bf16.mxu0 0
    %4411 = vmatpush2.bf16.msra.mxu0 0
    %4412 = vmatprep.subr.bf16.mxu0 0
    %4413 = vmatpush2.bf16.msra.mxu0 0
    %4414 = vmatprep.subr.bf16.mxu0 0
    %4415 = vmatpush2.bf16.msra.mxu0 0
    %4416 = vmatprep.subr.bf16.mxu0 0
    %4417 = vmatpush2.bf16.msra.mxu0 0
    %4418 = vmatprep.subr.bf16.mxu0 0
    %4419 = vmatpush2.bf16.msra.mxu0 0
    %4420 = vmatprep.subr.bf16.mxu0 0
    %4421 = vmatpush2.bf16.msra.mxu0 0
    %4422 = vmatprep.subr.bf16.mxu0 0
    %4423 = vmatpush2.bf16.msra.mxu0 0
    %4424 = vmatprep.mubr.bf16.mxu0 0
    %4425 = vmatmul.mubr.bf16.gmra.mxu0 %v2971
    %v4426 = vpop.f32.mrf.mxu0
    %v4427 = vadd.f32 %v4002, %v4426
    %v4428 = vpop.f32.mrf.mxu0
    %v4429 = vpop.f32.mrf.mxu0
    %v4430 = vadd.f32 %v4005, %v4429
    %v4431 = vpop.f32.mrf.mxu0
    %4432 = vmatprep.mubr.bf16.mxu0 0
    %4433 = vmatmul.mubr.bf16.gmra.mxu0 %v2974
    %v4434 = vpop.f32.mrf.mxu0
    %v4435 = vadd.f32 %v4010, %v4434
    %v4436 = vpop.f32.mrf.mxu0
    %v4437 = vpop.f32.mrf.mxu0
    %v4438 = vadd.f32 %v4013, %v4437
    %v4439 = vpop.f32.mrf.mxu0
    %4440 = vmatprep.mubr.bf16.mxu0 0
    %4441 = vmatmul.mubr.bf16.gmra.mxu0 %v2977
    %v4442 = vpop.f32.mrf.mxu0
    %v4443 = vadd.f32 %v4018, %v4442
    %v4444 = vpop.f32.mrf.mxu0
    %v4445 = vpop.f32.mrf.mxu0
    %v4446 = vadd.f32 %v4021, %v4445
    %v4447 = vpop.f32.mrf.mxu0
    %4448 = vmatprep.mubr.bf16.mxu0 0
    %4449 = vmatmul.mubr.bf16.gmra.mxu0 %v2980
    %v4450 = vpop.f32.mrf.mxu0
    %v4451 = vadd.f32 %v4026, %v4450
    %v4452 = vpop.f32.mrf.mxu0
    %v4453 = vpop.f32.mrf.mxu0
    %v4454 = vadd.f32 %v4029, %v4453
    %v4455 = vpop.f32.mrf.mxu0
    %4456 = vmatprep.mubr.bf16.mxu0 0
    %4457 = vmatmul.mubr.bf16.gmra.mxu0 %v2983
    %v4458 = vpop.f32.mrf.mxu0
    %v4459 = vadd.f32 %v4034, %v4458
    %v4460 = vpop.f32.mrf.mxu0
    %v4461 = vpop.f32.mrf.mxu0
    %v4462 = vadd.f32 %v4037, %v4461
    %v4463 = vpop.f32.mrf.mxu0
    %4464 = vmatprep.mubr.bf16.mxu0 0
    %4465 = vmatmul.mubr.bf16.gmra.mxu0 %v2986
    %v4466 = vpop.f32.mrf.mxu0
    %v4467 = vadd.f32 %v4042, %v4466
    %v4468 = vpop.f32.mrf.mxu0
    %v4469 = vpop.f32.mrf.mxu0
    %v4470 = vadd.f32 %v4045, %v4469
    %v4471 = vpop.f32.mrf.mxu0
    %4472 = vmatprep.mubr.bf16.mxu0 0
    %4473 = vmatmul.mubr.bf16.gmra.mxu0 %v2989
    %v4474 = vpop.f32.mrf.mxu0
    %v4475 = vadd.f32 %v4050, %v4474
    %v4476 = vpop.f32.mrf.mxu0
    %v4477 = vpop.f32.mrf.mxu0
    %v4478 = vadd.f32 %v4053, %v4477
    %v4479 = vpop.f32.mrf.mxu0
    %4480 = vmatprep.mubr.bf16.mxu0 0
    %4481 = vmatmul.mubr.bf16.gmra.mxu0 %v2992
    %v4482 = vpop.f32.mrf.mxu0
    %v4483 = vadd.f32 %v4058, %v4482
    %v4484 = vpop.f32.mrf.mxu0
    %v4485 = vpop.f32.mrf.mxu0
    %v4486 = vadd.f32 %v4061, %v4485
    %v4487 = vpop.f32.mrf.mxu0
    %4488 = vmatprep.mubr.bf16.mxu0 0
    %4489 = vmatmul.mubr.bf16.gmra.mxu0 %v2995
    %v4490 = vpop.f32.mrf.mxu0
    %v4491 = vadd.f32 %v4066, %v4490
    %v4492 = vpop.f32.mrf.mxu0
    %v4493 = vpop.f32.mrf.mxu0
    %v4494 = vadd.f32 %v4069, %v4493
    %v4495 = vpop.f32.mrf.mxu0
    %4496 = vmatprep.mubr.bf16.mxu0 0
    %4497 = vmatmul.mubr.bf16.gmra.mxu0 %v2998
    %v4498 = vpop.f32.mrf.mxu0
    %v4499 = vadd.f32 %v4074, %v4498
    %v4500 = vpop.f32.mrf.mxu0
    %v4501 = vpop.f32.mrf.mxu0
    %v4502 = vadd.f32 %v4077, %v4501
    %v4503 = vpop.f32.mrf.mxu0
    %4504 = vmatprep.mubr.bf16.mxu0 0
    %4505 = vmatmul.mubr.bf16.gmra.mxu0 %v3001
    %v4506 = vpop.f32.mrf.mxu0
    %v4507 = vadd.f32 %v4082, %v4506
    %v4508 = vpop.f32.mrf.mxu0
    %v4509 = vpop.f32.mrf.mxu0
    %v4510 = vadd.f32 %v4085, %v4509
    %v4511 = vpop.f32.mrf.mxu0
    %4512 = vmatprep.mubr.bf16.mxu0 0
    %4513 = vmatmul.mubr.bf16.gmra.mxu0 %v3004
    %v4514 = vpop.f32.mrf.mxu0
    %v4515 = vadd.f32 %v4090, %v4514
    %v4516 = vpop.f32.mrf.mxu0
    %v4517 = vpop.f32.mrf.mxu0
    %v4518 = vadd.f32 %v4093, %v4517
    %v4519 = vpop.f32.mrf.mxu0
    %4520 = vmatprep.mubr.bf16.mxu0 0
    %4521 = vmatmul.mubr.bf16.gmra.mxu0 %v3007
    %v4522 = vpop.f32.mrf.mxu0
    %v4523 = vadd.f32 %v4098, %v4522
    %v4524 = vpop.f32.mrf.mxu0
    %v4525 = vpop.f32.mrf.mxu0
    %v4526 = vadd.f32 %v4101, %v4525
    %v4527 = vpop.f32.mrf.mxu0
    %4528 = vmatprep.mubr.bf16.mxu0 0
    %4529 = vmatmul.mubr.bf16.gmra.mxu0 %v3010
    %v4530 = vpop.f32.mrf.mxu0
    %v4531 = vadd.f32 %v4106, %v4530
    %v4532 = vpop.f32.mrf.mxu0
    %v4533 = vpop.f32.mrf.mxu0
    %v4534 = vadd.f32 %v4109, %v4533
    %v4535 = vpop.f32.mrf.mxu0
    %4536 = vmatprep.mubr.bf16.mxu0 0
    %4537 = vmatmul.mubr.bf16.gmra.mxu0 %v3013
    %v4538 = vpop.f32.mrf.mxu0
    %v4539 = vadd.f32 %v4114, %v4538
    %v4540 = vpop.f32.mrf.mxu0
    %v4541 = vpop.f32.mrf.mxu0
    %v4542 = vadd.f32 %v4117, %v4541
    %v4543 = vpop.f32.mrf.mxu0
    %4544 = vmatprep.mubr.bf16.mxu0 0
    %4545 = vmatmul.mubr.bf16.gmra.mxu0 %v3016
    %v4546 = vpop.f32.mrf.mxu0
    %v4547 = vadd.f32 %v4122, %v4546
    %v4548 = vpop.f32.mrf.mxu0
    %v4549 = vpop.f32.mrf.mxu0
    %v4550 = vadd.f32 %v4125, %v4549
    %v4551 = vpop.f32.mrf.mxu0
    %4552 = vmatprep.mubr.bf16.mxu0 0
    %4553 = vmatmul.mubr.bf16.gmra.mxu0 %v3019
    %v4554 = vpop.f32.mrf.mxu0
    %v4555 = vadd.f32 %v4130, %v4554
    %v4556 = vpop.f32.mrf.mxu0
    %v4557 = vpop.f32.mrf.mxu0
    %v4558 = vadd.f32 %v4133, %v4557
    %v4559 = vpop.f32.mrf.mxu0
    %4560 = vmatprep.mubr.bf16.mxu0 0
    %4561 = vmatmul.mubr.bf16.gmra.mxu0 %v3022
    %v4562 = vpop.f32.mrf.mxu0
    %v4563 = vadd.f32 %v4138, %v4562
    %v4564 = vpop.f32.mrf.mxu0
    %v4565 = vpop.f32.mrf.mxu0
    %v4566 = vadd.f32 %v4141, %v4565
    %v4567 = vpop.f32.mrf.mxu0
    %4568 = vmatprep.mubr.bf16.mxu0 0
    %4569 = vmatmul.mubr.bf16.gmra.mxu0 %v3025
    %v4570 = vpop.f32.mrf.mxu0
    %v4571 = vadd.f32 %v4146, %v4570
    %v4572 = vpop.f32.mrf.mxu0
    %v4573 = vpop.f32.mrf.mxu0
    %v4574 = vadd.f32 %v4149, %v4573
    %v4575 = vpop.f32.mrf.mxu0
    %4576 = vmatprep.mubr.bf16.mxu0 0
    %4577 = vmatmul.mubr.bf16.gmra.mxu0 %v3028
    %v4578 = vpop.f32.mrf.mxu0
    %v4579 = vadd.f32 %v4154, %v4578
    %v4580 = vpop.f32.mrf.mxu0
    %v4581 = vpop.f32.mrf.mxu0
    %v4582 = vadd.f32 %v4157, %v4581
    %v4583 = vpop.f32.mrf.mxu0
    %4584 = vmatprep.mubr.bf16.mxu0 0
    %4585 = vmatmul.mubr.bf16.gmra.mxu0 %v3031
    %v4586 = vpop.f32.mrf.mxu0
    %v4587 = vadd.f32 %v4162, %v4586
    %v4588 = vpop.f32.mrf.mxu0
    %v4589 = vpop.f32.mrf.mxu0
    %v4590 = vadd.f32 %v4165, %v4589
    %v4591 = vpop.f32.mrf.mxu0
    %4592 = vmatprep.mubr.bf16.mxu0 0
    %4593 = vmatmul.mubr.bf16.gmra.mxu0 %v3034
    %v4594 = vpop.f32.mrf.mxu0
    %v4595 = vadd.f32 %v4170, %v4594
    %v4596 = vpop.f32.mrf.mxu0
    %v4597 = vpop.f32.mrf.mxu0
    %v4598 = vadd.f32 %v4173, %v4597
    %v4599 = vpop.f32.mrf.mxu0
    %4600 = vmatprep.mubr.bf16.mxu0 0
    %4601 = vmatmul.mubr.bf16.gmra.mxu0 %v3037
    %v4602 = vpop.f32.mrf.mxu0
    %v4603 = vadd.f32 %v4178, %v4602
    %v4604 = vpop.f32.mrf.mxu0
    %v4605 = vpop.f32.mrf.mxu0
    %v4606 = vadd.f32 %v4181, %v4605
    %v4607 = vpop.f32.mrf.mxu0
    %4608 = vmatprep.mubr.bf16.mxu0 0
    %4609 = vmatmul.mubr.bf16.gmra.mxu0 %v3040
    %v4610 = vpop.f32.mrf.mxu0
    %v4611 = vadd.f32 %v4186, %v4610
    %v4612 = vpop.f32.mrf.mxu0
    %v4613 = vpop.f32.mrf.mxu0
    %v4614 = vadd.f32 %v4189, %v4613
    %v4615 = vpop.f32.mrf.mxu0
    %4616 = vmatprep.mubr.bf16.mxu0 0
    %4617 = vmatmul.mubr.bf16.gmra.mxu0 %v3043
    %v4618 = vpop.f32.mrf.mxu0
    %v4619 = vadd.f32 %v4194, %v4618
    %v4620 = vpop.f32.mrf.mxu0
    %v4621 = vpop.f32.mrf.mxu0
    %v4622 = vadd.f32 %v4197, %v4621
    %v4623 = vpop.f32.mrf.mxu0
    %4624 = vmatprep.mubr.bf16.mxu0 0
    %4625 = vmatmul.mubr.bf16.gmra.mxu0 %v3046
    %v4626 = vpop.f32.mrf.mxu0
    %v4627 = vadd.f32 %v4202, %v4626
    %v4628 = vpop.f32.mrf.mxu0
    %v4629 = vpop.f32.mrf.mxu0
    %v4630 = vadd.f32 %v4205, %v4629
    %v4631 = vpop.f32.mrf.mxu0
    %4632 = vmatprep.mubr.bf16.mxu0 0
    %4633 = vmatmul.mubr.bf16.gmra.mxu0 %v3049
    %v4634 = vpop.f32.mrf.mxu0
    %v4635 = vadd.f32 %v4210, %v4634
    %v4636 = vpop.f32.mrf.mxu0
    %v4637 = vpop.f32.mrf.mxu0
    %v4638 = vadd.f32 %v4213, %v4637
    %v4639 = vpop.f32.mrf.mxu0
    %4640 = vmatprep.mubr.bf16.mxu0 0
    %4641 = vmatmul.mubr.bf16.gmra.mxu0 %v3052
    %v4642 = vpop.f32.mrf.mxu0
    %v4643 = vadd.f32 %v4218, %v4642
    %v4644 = vpop.f32.mrf.mxu0
    %v4645 = vpop.f32.mrf.mxu0
    %v4646 = vadd.f32 %v4221, %v4645
    %v4647 = vpop.f32.mrf.mxu0
    %4648 = vmatprep.mubr.bf16.mxu0 0
    %4649 = vmatmul.mubr.bf16.gmra.mxu0 %v3055
    %v4650 = vpop.f32.mrf.mxu0
    %v4651 = vadd.f32 %v4226, %v4650
    %v4652 = vpop.f32.mrf.mxu0
    %v4653 = vpop.f32.mrf.mxu0
    %v4654 = vadd.f32 %v4229, %v4653
    %v4655 = vpop.f32.mrf.mxu0
    %4656 = vmatprep.mubr.bf16.mxu0 0
    %4657 = vmatmul.mubr.bf16.gmra.mxu0 %v3058
    %v4658 = vpop.f32.mrf.mxu0
    %v4659 = vadd.f32 %v4234, %v4658
    %v4660 = vpop.f32.mrf.mxu0
    %v4661 = vpop.f32.mrf.mxu0
    %v4662 = vadd.f32 %v4237, %v4661
    %v4663 = vpop.f32.mrf.mxu0
    %4664 = vmatprep.mubr.bf16.mxu0 0
    %4665 = vmatmul.mubr.bf16.gmra.mxu0 %v3061
    %v4666 = vpop.f32.mrf.mxu0
    %v4667 = vadd.f32 %v4242, %v4666
    %v4668 = vpop.f32.mrf.mxu0
    %v4669 = vpop.f32.mrf.mxu0
    %v4670 = vadd.f32 %v4245, %v4669
    %v4671 = vpop.f32.mrf.mxu0
    %4672 = vmatprep.mubr.bf16.mxu0 0
    %4673 = vmatmul.mubr.bf16.gmra.mxu0 %v3064
    %v4674 = vpop.f32.mrf.mxu0
    %v4675 = vadd.f32 %v4250, %v4674
    %v4676 = vpop.f32.mrf.mxu0
    %v4677 = vpop.f32.mrf.mxu0
    %v4678 = vadd.f32 %v4253, %v4677
    %v4679 = vpop.f32.mrf.mxu0
    %4680 = vmatprep.mubr.bf16.mxu0 0
    %4681 = vmatmul.mubr.bf16.gmra.mxu0 %v3067
    %v4682 = vpop.f32.mrf.mxu0
    %v4683 = vadd.f32 %v4258, %v4682
    %v4684 = vpop.f32.mrf.mxu0
    %v4685 = vpop.f32.mrf.mxu0
    %v4686 = vadd.f32 %v4261, %v4685
    %v4687 = vpop.f32.mrf.mxu0
    %4688 = vmatprep.mubr.bf16.mxu0 0
    %4689 = vmatmul.mubr.bf16.gmra.mxu0 %v3070
    %v4690 = vpop.f32.mrf.mxu0
    %v4691 = vadd.f32 %v4266, %v4690
    %v4692 = vpop.f32.mrf.mxu0
    %v4693 = vpop.f32.mrf.mxu0
    %v4694 = vadd.f32 %v4269, %v4693
    %v4695 = vpop.f32.mrf.mxu0
    %4696 = vmatprep.mubr.bf16.mxu0 0
    %4697 = vmatmul.mubr.bf16.gmra.mxu0 %v3073
    %v4698 = vpop.f32.mrf.mxu0
    %v4699 = vadd.f32 %v4274, %v4698
    %v4700 = vpop.f32.mrf.mxu0
    %v4701 = vpop.f32.mrf.mxu0
    %v4702 = vadd.f32 %v4277, %v4701
    %v4703 = vpop.f32.mrf.mxu0
    %4704 = vmatprep.mubr.bf16.mxu0 0
    %4705 = vmatmul.mubr.bf16.gmra.mxu0 %v3076
    %v4706 = vpop.f32.mrf.mxu0
    %v4707 = vadd.f32 %v4282, %v4706
    %v4708 = vpop.f32.mrf.mxu0
    %v4709 = vpop.f32.mrf.mxu0
    %v4710 = vadd.f32 %v4285, %v4709
    %v4711 = vpop.f32.mrf.mxu0
    %4712 = vmatprep.mubr.bf16.mxu0 0
    %4713 = vmatmul.mubr.bf16.gmra.mxu0 %v3079
    %v4714 = vpop.f32.mrf.mxu0
    %v4715 = vadd.f32 %v4290, %v4714
    %v4716 = vpop.f32.mrf.mxu0
    %v4717 = vpop.f32.mrf.mxu0
    %v4718 = vadd.f32 %v4293, %v4717
    %v4719 = vpop.f32.mrf.mxu0
    %4720 = vmatprep.mubr.bf16.mxu0 0
    %4721 = vmatmul.mubr.bf16.gmra.mxu0 %v3082
    %v4722 = vpop.f32.mrf.mxu0
    %v4723 = vadd.f32 %v4298, %v4722
    %v4724 = vpop.f32.mrf.mxu0
    %v4725 = vpop.f32.mrf.mxu0
    %v4726 = vadd.f32 %v4301, %v4725
    %v4727 = vpop.f32.mrf.mxu0
    %4728 = vmatprep.mubr.bf16.mxu0 0
    %4729 = vmatmul.mubr.bf16.gmra.mxu0 %v3085
    %v4730 = vpop.f32.mrf.mxu0
    %v4731 = vadd.f32 %v4306, %v4730
    %v4732 = vpop.f32.mrf.mxu0
    %v4733 = vpop.f32.mrf.mxu0
    %v4734 = vadd.f32 %v4309, %v4733
    %v4735 = vpop.f32.mrf.mxu0
    %4736 = vmatprep.mubr.bf16.mxu0 0
    %4737 = vmatmul.mubr.bf16.gmra.mxu0 %v3088
    %v4738 = vpop.f32.mrf.mxu0
    %v4739 = vadd.f32 %v4314, %v4738
    %v4740 = vpop.f32.mrf.mxu0
    %v4741 = vpop.f32.mrf.mxu0
    %v4742 = vadd.f32 %v4317, %v4741
    %v4743 = vpop.f32.mrf.mxu0
    %4744 = vmatprep.mubr.bf16.mxu0 0
    %4745 = vmatmul.mubr.bf16.gmra.mxu0 %v3091
    %v4746 = vpop.f32.mrf.mxu0
    %v4747 = vadd.f32 %v4322, %v4746
    %v4748 = vpop.f32.mrf.mxu0
    %v4749 = vpop.f32.mrf.mxu0
    %v4750 = vadd.f32 %v4325, %v4749
    %v4751 = vpop.f32.mrf.mxu0
    %4752 = vmatprep.mubr.bf16.mxu0 0
    %4753 = vmatmul.mubr.bf16.gmra.mxu0 %v3094
    %v4754 = vpop.f32.mrf.mxu0
    %v4755 = vadd.f32 %v4330, %v4754
    %v4756 = vpop.f32.mrf.mxu0
    %v4757 = vpop.f32.mrf.mxu0
    %v4758 = vadd.f32 %v4333, %v4757
    %v4759 = vpop.f32.mrf.mxu0
    %4760 = vmatprep.mubr.bf16.mxu0 0
    %4761 = vmatmul.mubr.bf16.gmra.mxu0 %v3097
    %v4762 = vpop.f32.mrf.mxu0
    %v4763 = vadd.f32 %v4338, %v4762
    %v4764 = vpop.f32.mrf.mxu0
    %v4765 = vpop.f32.mrf.mxu0
    %v4766 = vadd.f32 %v4341, %v4765
    %v4767 = vpop.f32.mrf.mxu0
    %4768 = vmatprep.mubr.bf16.mxu0 0
    %4769 = vmatmul.mubr.bf16.gmra.mxu0 %v3100
    %v4770 = vpop.f32.mrf.mxu0
    %v4771 = vadd.f32 %v4346, %v4770
    %v4772 = vpop.f32.mrf.mxu0
    %v4773 = vpop.f32.mrf.mxu0
    %v4774 = vadd.f32 %v4349, %v4773
    %v4775 = vpop.f32.mrf.mxu0
    %4776 = vmatprep.mubr.bf16.mxu0 0
    %4777 = vmatmul.mubr.bf16.gmra.mxu0 %v3103
    %v4778 = vpop.f32.mrf.mxu0
    %v4779 = vadd.f32 %v4354, %v4778
    %v4780 = vpop.f32.mrf.mxu0
    %v4781 = vpop.f32.mrf.mxu0
    %v4782 = vadd.f32 %v4357, %v4781
    %v4783 = vpop.f32.mrf.mxu0
    %4784 = vmatprep.mubr.bf16.mxu0 0
    %4785 = vmatmul.mubr.bf16.gmra.mxu0 %v3106
    %v4786 = vpop.f32.mrf.mxu0
    %v4787 = vadd.f32 %v4362, %v4786
    %v4788 = vpop.f32.mrf.mxu0
    %v4789 = vpop.f32.mrf.mxu0
    %v4790 = vadd.f32 %v4365, %v4789
    %v4791 = vpop.f32.mrf.mxu0
    %4792 = vmatprep.mubr.bf16.mxu0 0
    %4793 = vmatmul.mubr.bf16.gmra.mxu0 %v3109
    %v4794 = vpop.f32.mrf.mxu0
    %v4795 = vadd.f32 %v4370, %v4794
    %v4796 = vpop.f32.mrf.mxu0
    %v4797 = vpop.f32.mrf.mxu0
    %v4798 = vadd.f32 %v4373, %v4797
    %v4799 = vpop.f32.mrf.mxu0
    %4800 = vmatprep.mubr.bf16.mxu0 0
    %4801 = vmatmul.mubr.bf16.gmra.mxu0 %v3112
    %v4802 = vpop.f32.mrf.mxu0
    %v4803 = vadd.f32 %v4378, %v4802
    %v4804 = vpop.f32.mrf.mxu0
    %v4805 = vpop.f32.mrf.mxu0
    %v4806 = vadd.f32 %v4381, %v4805
    %v4807 = vpop.f32.mrf.mxu0
    %4808 = vmatprep.mubr.bf16.mxu0 0
    %4809 = vmatmul.mubr.bf16.gmra.mxu0 %v3115
    %v4810 = vpop.f32.mrf.mxu0
    %v4811 = vadd.f32 %v4386, %v4810
    %v4812 = vpop.f32.mrf.mxu0
    %v4813 = vpop.f32.mrf.mxu0
    %v4814 = vadd.f32 %v4389, %v4813
    %v4815 = vpop.f32.mrf.mxu0
    %4816 = vdwg.mxu0
    %vm4817 = vcmask 400384
    %4818 = vst.msk [vmem:[%s3] sm:$0xff] %vm4817, %v4427
    %4819 = vst.msk [vmem:[%s3 + $0x8] sm:$0xff] %vm4817, %v4430
    %4820 = vst.msk [vmem:[%s3 + $0x10] sm:$0xff] %vm4817, %v4435
    %4821 = vst.msk [vmem:[%s3 + $0x18] sm:$0xff] %vm4817, %v4438
    %4822 = vst.msk [vmem:[%s3 + $0x20] sm:$0xff] %vm4817, %v4443
    %4823 = vst.msk [vmem:[%s3 + $0x28] sm:$0xff] %vm4817, %v4446
    %4824 = vst.msk [vmem:[%s3 + $0x30] sm:$0xff] %vm4817, %v4451
    %4825 = vst.msk [vmem:[%s3 + $0x38] sm:$0xff] %vm4817, %v4454
    %4826 = vst.msk [vmem:[%s3 + $0x40] sm:$0xff] %vm4817, %v4459
    %4827 = vst.msk [vmem:[%s3 + $0x48] sm:$0xff] %vm4817, %v4462
    %4828 = vst.msk [vmem:[%s3 + $0x50] sm:$0xff] %vm4817, %v4467
    %4829 = vst.msk [vmem:[%s3 + $0x58] sm:$0xff] %vm4817, %v4470
    %4830 = vst.msk [vmem:[%s3 + $0x60] sm:$0xff] %vm4817, %v4475
    %4831 = vst.msk [vmem:[%s3 + $0x68] sm:$0xff] %vm4817, %v4478
    %4832 = vst.msk [vmem:[%s3 + $0x70] sm:$0xff] %vm4817, %v4483
    %4833 = vst.msk [vmem:[%s3 + $0x78] sm:$0xff] %vm4817, %v4486
    %4834 = vst.msk [vmem:[%s3 + $0x80] sm:$0xff] %vm4817, %v4491
    %4835 = vst.msk [vmem:[%s3 + $0x88] sm:$0xff] %vm4817, %v4494
    %4836 = vst.msk [vmem:[%s3 + $0x90] sm:$0xff] %vm4817, %v4499
    %4837 = vst.msk [vmem:[%s3 + $0x98] sm:$0xff] %vm4817, %v4502
    %4838 = vst.msk [vmem:[%s3 + $0xa0] sm:$0xff] %vm4817, %v4507
    %4839 = vst.msk [vmem:[%s3 + $0xa8] sm:$0xff] %vm4817, %v4510
    %4840 = vst.msk [vmem:[%s3 + $0xb0] sm:$0xff] %vm4817, %v4515
    %4841 = vst.msk [vmem:[%s3 + $0xb8] sm:$0xff] %vm4817, %v4518
    %4842 = vst.msk [vmem:[%s3 + $0xc0] sm:$0xff] %vm4817, %v4523
    %4843 = vst.msk [vmem:[%s3 + $0xc8] sm:$0xff] %vm4817, %v4526
    %4844 = vst.msk [vmem:[%s3 + $0xd0] sm:$0xff] %vm4817, %v4531
    %4845 = vst.msk [vmem:[%s3 + $0xd8] sm:$0xff] %vm4817, %v4534
    %4846 = vst.msk [vmem:[%s3 + $0xe0] sm:$0xff] %vm4817, %v4539
    %4847 = vst.msk [vmem:[%s3 + $0xe8] sm:$0xff] %vm4817, %v4542
    %4848 = vst.msk [vmem:[%s3 + $0xf0] sm:$0xff] %vm4817, %v4547
    %4849 = vst.msk [vmem:[%s3 + $0xf8] sm:$0xff] %vm4817, %v4550
    %4850 = vst.msk [vmem:[%s3 + $0x100] sm:$0xff] %vm4817, %v4555
    %4851 = vst.msk [vmem:[%s3 + $0x108] sm:$0xff] %vm4817, %v4558
    %4852 = vst.msk [vmem:[%s3 + $0x110] sm:$0xff] %vm4817, %v4563
    %4853 = vst.msk [vmem:[%s3 + $0x118] sm:$0xff] %vm4817, %v4566
    %4854 = vst.msk [vmem:[%s3 + $0x120] sm:$0xff] %vm4817, %v4571
    %4855 = vst.msk [vmem:[%s3 + $0x128] sm:$0xff] %vm4817, %v4574
    %4856 = vst.msk [vmem:[%s3 + $0x130] sm:$0xff] %vm4817, %v4579
    %4857 = vst.msk [vmem:[%s3 + $0x138] sm:$0xff] %vm4817, %v4582
    %4858 = vst.msk [vmem:[%s3 + $0x140] sm:$0xff] %vm4817, %v4587
    %4859 = vst.msk [vmem:[%s3 + $0x148] sm:$0xff] %vm4817, %v4590
    %4860 = vst.msk [vmem:[%s3 + $0x150] sm:$0xff] %vm4817, %v4595
    %4861 = vst.msk [vmem:[%s3 + $0x158] sm:$0xff] %vm4817, %v4598
    %4862 = vst.msk [vmem:[%s3 + $0x160] sm:$0xff] %vm4817, %v4603
    %4863 = vst.msk [vmem:[%s3 + $0x168] sm:$0xff] %vm4817, %v4606
    %4864 = vst.msk [vmem:[%s3 + $0x170] sm:$0xff] %vm4817, %v4611
    %4865 = vst.msk [vmem:[%s3 + $0x178] sm:$0xff] %vm4817, %v4614
    %4866 = vst.msk [vmem:[%s3 + $0x180] sm:$0xff] %vm4817, %v4619
    %4867 = vst.msk [vmem:[%s3 + $0x188] sm:$0xff] %vm4817, %v4622
    %4868 = vst.msk [vmem:[%s3 + $0x190] sm:$0xff] %vm4817, %v4627
    %4869 = vst.msk [vmem:[%s3 + $0x198] sm:$0xff] %vm4817, %v4630
    %4870 = vst.msk [vmem:[%s3 + $0x1a0] sm:$0xff] %vm4817, %v4635
    %4871 = vst.msk [vmem:[%s3 + $0x1a8] sm:$0xff] %vm4817, %v4638
    %4872 = vst.msk [vmem:[%s3 + $0x1b0] sm:$0xff] %vm4817, %v4643
    %4873 = vst.msk [vmem:[%s3 + $0x1b8] sm:$0xff] %vm4817, %v4646
    %4874 = vst.msk [vmem:[%s3 + $0x1c0] sm:$0xff] %vm4817, %v4651
    %4875 = vst.msk [vmem:[%s3 + $0x1c8] sm:$0xff] %vm4817, %v4654
    %4876 = vst.msk [vmem:[%s3 + $0x1d0] sm:$0xff] %vm4817, %v4659
    %4877 = vst.msk [vmem:[%s3 + $0x1d8] sm:$0xff] %vm4817, %v4662
    %4878 = vst.msk [vmem:[%s3 + $0x1e0] sm:$0xff] %vm4817, %v4667
    %4879 = vst.msk [vmem:[%s3 + $0x1e8] sm:$0xff] %vm4817, %v4670
    %4880 = vst.msk [vmem:[%s3 + $0x1f0] sm:$0xff] %vm4817, %v4675
    %4881 = vst.msk [vmem:[%s3 + $0x1f8] sm:$0xff] %vm4817, %v4678
    %4882 = vst.msk [vmem:[%s3 + $0x200] sm:$0xff] %vm4817, %v4683
    %4883 = vst.msk [vmem:[%s3 + $0x208] sm:$0xff] %vm4817, %v4686
    %4884 = vst.msk [vmem:[%s3 + $0x210] sm:$0xff] %vm4817, %v4691
    %4885 = vst.msk [vmem:[%s3 + $0x218] sm:$0xff] %vm4817, %v4694
    %4886 = vst.msk [vmem:[%s3 + $0x220] sm:$0xff] %vm4817, %v4699
    %4887 = vst.msk [vmem:[%s3 + $0x228] sm:$0xff] %vm4817, %v4702
    %4888 = vst.msk [vmem:[%s3 + $0x230] sm:$0xff] %vm4817, %v4707
    %4889 = vst.msk [vmem:[%s3 + $0x238] sm:$0xff] %vm4817, %v4710
    %4890 = vst.msk [vmem:[%s3 + $0x240] sm:$0xff] %vm4817, %v4715
    %4891 = vst.msk [vmem:[%s3 + $0x248] sm:$0xff] %vm4817, %v4718
    %4892 = vst.msk [vmem:[%s3 + $0x250] sm:$0xff] %vm4817, %v4723
    %4893 = vst.msk [vmem:[%s3 + $0x258] sm:$0xff] %vm4817, %v4726
    %4894 = vst.msk [vmem:[%s3 + $0x260] sm:$0xff] %vm4817, %v4731
    %4895 = vst.msk [vmem:[%s3 + $0x268] sm:$0xff] %vm4817, %v4734
    %4896 = vst.msk [vmem:[%s3 + $0x270] sm:$0xff] %vm4817, %v4739
    %4897 = vst.msk [vmem:[%s3 + $0x278] sm:$0xff] %vm4817, %v4742
    %4898 = vst.msk [vmem:[%s3 + $0x280] sm:$0xff] %vm4817, %v4747
    %4899 = vst.msk [vmem:[%s3 + $0x288] sm:$0xff] %vm4817, %v4750
    %4900 = vst.msk [vmem:[%s3 + $0x290] sm:$0xff] %vm4817, %v4755
    %4901 = vst.msk [vmem:[%s3 + $0x298] sm:$0xff] %vm4817, %v4758
    %4902 = vst.msk [vmem:[%s3 + $0x2a0] sm:$0xff] %vm4817, %v4763
    %4903 = vst.msk [vmem:[%s3 + $0x2a8] sm:$0xff] %vm4817, %v4766
    %4904 = vst.msk [vmem:[%s3 + $0x2b0] sm:$0xff] %vm4817, %v4771
    %4905 = vst.msk [vmem:[%s3 + $0x2b8] sm:$0xff] %vm4817, %v4774
    %4906 = vst.msk [vmem:[%s3 + $0x2c0] sm:$0xff] %vm4817, %v4779
    %4907 = vst.msk [vmem:[%s3 + $0x2c8] sm:$0xff] %vm4817, %v4782
    %4908 = vst.msk [vmem:[%s3 + $0x2d0] sm:$0xff] %vm4817, %v4787
    %4909 = vst.msk [vmem:[%s3 + $0x2d8] sm:$0xff] %vm4817, %v4790
    %4910 = vst.msk [vmem:[%s3 + $0x2e0] sm:$0xff] %vm4817, %v4795
    %4911 = vst.msk [vmem:[%s3 + $0x2e8] sm:$0xff] %vm4817, %v4798
    %4912 = vst.msk [vmem:[%s3 + $0x2f0] sm:$0xff] %vm4817, %v4803
    %4913 = vst.msk [vmem:[%s3 + $0x2f8] sm:$0xff] %vm4817, %v4806
    %4914 = vst.msk [vmem:[%s3 + $0x300] sm:$0xff] %vm4817, %v4811
    %4915 = vst.msk [vmem:[%s3 + $0x308] sm:$0xff] %vm4817, %v4814
    // Predicated region
    $region18: #{tpu_custom_call.1} parent=1 // pred_check
      _
    $region19: #{tpu_custom_call.1} parent=1 // pred_check_branch
      %4917 = sbr.rel (0) target = $region21
    $region20: #{tpu_custom_call.1} parent=1 // pred_region
      _
    $region21: #{tpu_custom_call.1} parent=1 // pred_fallthru
      _
    // Predicated region
    $region22: #{tpu_custom_call.1} parent=1 // pred_check
      _
    $region23: #{tpu_custom_call.1} parent=1 // pred_check_branch
      %4919 = sbr.rel (0) target = $region25
    $region24: #{tpu_custom_call.1} parent=1 // pred_region
      _
    $region25: #{tpu_custom_call.1} parent=1 // pred_fallthru
      _
    %4920 = vsyncpa [#allocation3], 1

</llo_original>
